<compile_context>
chip_gen: v7x
topology: tpu7x:2x2x1
jax: 0.10.0
libtpu: 0.0.40
codegen_flags: <defaults>
</compile_context>

<pallas_src>
import functools

import jax
import jax.numpy as jnp
from jax.experimental import pallas as pl
from jax.experimental.pallas import tpu as pltpu


def _round_up(v, m):
    return (v + m - 1) // m * m


def conv_module_kernel(xl_ref, xc_ref, xr_ref, w1t_ref, b1_ref, wd_ref,
                       bnb_ref, w2t_ref, b2_ref, o_ref, *,
                       halo_pad, halo, seq_len, tile_t):
    """One (batch, time-tile) grid step.

    xl_ref  : (1, H, C)  f32   left-halo rows  [t*tT - H, t*tT)        (clamped)
    xc_ref  : (1, tT, C) f32   current tile    [t*tT, t*tT + tT)
    xr_ref  : (1, H, C)  f32   right-halo rows [t*tT + tT, t*tT+tT+H)  (clamped)
    w1t_ref : (C, 2C) bf16     first pointwise conv weight, transposed
    b1_ref  : (1, 2C) f32
    wd_ref  : (K, C)  f32      depthwise weights with BN scale folded in
    bnb_ref : (1, C)  f32      BN shift
    w2t_ref : (C, C)  bf16     second pointwise conv weight, transposed
    b2_ref  : (1, C)  f32
    o_ref   : (1, tT, C) f32
    """
    t = pl.program_id(1)

    # Assemble the halo'd window (tT + 2H rows); cast to bf16 once for the MXU.
    xb = jnp.concatenate(
        [xl_ref[0].astype(jnp.bfloat16),
         xc_ref[0].astype(jnp.bfloat16),
         xr_ref[0].astype(jnp.bfloat16)], axis=0)            # (tTH, C)
    tTH, C = xb.shape

    # ---- pointwise conv #1 (C -> 2C) + bias: MXU, bf16 x bf16 -> f32 acc ----
    h = jnp.dot(xb, w1t_ref[...], preferred_element_type=jnp.float32)
    h = h + b1_ref[...]                                      # (tTH, 2C) f32

    # ---- GLU over channels ----
    g = h[:, :C] * jax.nn.sigmoid(h[:, C:])                  # (tTH, C) f32

    # Zero every window row outside the real sequence.  This implements the
    # reference's SAME zero-padding of the post-GLU activations *and*
    # neutralizes the clamped halo rows (t=0 / last tile) and the ragged tail.
    row = t * tile_t - halo_pad + jax.lax.broadcasted_iota(jnp.int32, (tTH, 1), 0)
    g = jnp.where((row >= 0) & (row < seq_len), g, 0.0)

    # ---- depthwise conv along time (SAME, no bias; BN scale pre-folded) ----
    # K static shifted slices of the halo'd activations, two interleaved
    # accumulators to shorten the f32 add chains (no f32 FMA on v5e/v6e VPU).
    wd = wd_ref[...]                                         # (K, C) f32
    K = wd.shape[0]
    base = halo_pad - halo
    acc0 = jnp.zeros((tile_t, C), jnp.float32)
    acc1 = jnp.zeros((tile_t, C), jnp.float32)
    for k in range(K):                                       # static unroll
        contrib = g[base + k:base + k + tile_t, :] * wd[k, :]
        if k % 2 == 0:
            acc0 = acc0 + contrib
        else:
            acc1 = acc1 + contrib
    acc = acc0 + acc1

    # ---- BatchNorm shift (scale already folded into wd) + Swish ----
    y = acc + bnb_ref[...]
    y = y * jax.nn.sigmoid(y)

    # ---- pointwise conv #2 (C -> C) + bias ----
    out = jnp.dot(y.astype(jnp.bfloat16), w2t_ref[...],
                  preferred_element_type=jnp.float32) + b2_ref[...]

    # Dropout is identity in eval mode.
    o_ref[0] = out.astype(o_ref.dtype)


def squeezeformer_conv_module(x, params, *, tile_t=None, vmem_limit_mb=None):
    """x: (B, T, C) float32.  params: dict from make_params.  Returns (B, T, C)."""
    B, T, C = x.shape
    w1t, b1, wd, bnb, w2t, b2 = (params["w1t"], params["b1"], params["wd"],
                                 params["bn_shift"], params["w2t"], params["b2"])
    K = wd.shape[0]
    halo = (K - 1) // 2
    H = _round_up(max(halo, 1), 8)          # halo block, sublane(8)-aligned
    assert T >= H, "sequence shorter than the (rounded) conv halo is unsupported"

    # Memory-bound kernel -> big time tiles (pipeline efficiency, halo
    # amortization).  Keep the tile a multiple of H so halo blocks line up, and
    # never larger than T (partial last blocks are masked by Pallas).
    if tile_t is None:
        tile_t = 1024 if C <= 256 else 512
    tT = max((min(tile_t, T) // H) * H, H)
    if B == 1:                              # keep >= 2 grid steps for v7x's 2 TCs
        tT = min(tT, max((pl.cdiv(T, 2) // H) * H, H))
    nT = pl.cdiv(T, tT)
    tpb = tT // H                           # H-sized halo blocks per time tile
    nH = pl.cdiv(T, H)
    tTH = tT + 2 * H

    kernel = functools.partial(conv_module_kernel, halo_pad=H, halo=halo,
                               seq_len=T, tile_t=tT)

    flops = B * T * (2 * C * (2 * C) + 2 * C * C + 2 * K * C)
    bytes_accessed = int(B * T * C * 4 * (1 + 2 * H / tT) + B * T * C * 4 +
                         (w1t.size + w2t.size) * 2 +
                         (b1.size + wd.size + bnb.size + b2.size) * 4)
    cost = pl.CostEstimate(flops=int(flops), transcendentals=int(2 * B * T * C),
                           bytes_accessed=bytes_accessed)

    if vmem_limit_mb is None:
        # Double-buffered blocks + weights + f32 intermediates, 2x margin,
        # capped at 48 MiB (safe under v7x's 64 MiB physical VMEM).
        step_bytes = (2 * tTH * C * 4 + 2 * tT * C * 4 +        # x / out blocks
                      2 * (2 * C * C + C * C) * 2 +             # bf16 weights (x2 buf)
                      (2 * C + K * C + 2 * C) * 4 +             # f32 params
                      tTH * C * 2 + tTH * 2 * C * 4 +           # xb, h
                      2 * tTH * C * 4 + 4 * tT * C * 4)         # g, accs/y/out
        vmem_limit = min(max(2 * step_bytes, 16 << 20), 48 << 20)
    else:
        vmem_limit = vmem_limit_mb << 20

    # Constant-index weight/bias specs: block index never changes, so they are
    # fetched once.  (pl.Buffered(1) would drop the second buffer for very
    # large C; left at the default here since it is negligible at these sizes.)
    const = lambda shape: pl.BlockSpec(shape, lambda b, t: (0,) * len(shape))

    out = pl.pallas_call(
        kernel,
        out_shape=jax.ShapeDtypeStruct((B, T, C), x.dtype),
        grid_spec=pltpu.PrefetchScalarGridSpec(
            num_scalar_prefetch=0,
            grid=(B, nT),
            in_specs=[
                # Left halo: H rows just before the tile (clamped at t=0; the
                # in-kernel row mask zeroes whatever lands there).
                pl.BlockSpec((1, H, C),
                             lambda b, t: (b, jnp.maximum(t * tpb - 1, 0), 0)),
                # Current tile.
                pl.BlockSpec((1, tT, C), lambda b, t: (b, t, 0)),
                # Right halo: H rows just after the tile (clamped at the end).
                pl.BlockSpec((1, H, C),
                             lambda b, t: (b, jnp.minimum((t + 1) * tpb, nH - 1), 0)),
                const((C, 2 * C)),    # W1^T (bf16)
                const((1, 2 * C)),    # b1
                const((K, C)),        # depthwise weights (BN scale folded)
                const((1, C)),        # BN shift
                const((C, C)),        # W2^T (bf16)
                const((1, C)),        # b2
            ],
            out_specs=pl.BlockSpec((1, tT, C), lambda b, t: (b, t, 0)),
        ),
        compiler_params=pltpu.CompilerParams(
            dimension_semantics=("parallel", "parallel"),
            vmem_limit_bytes=int(vmem_limit)),
        cost_estimate=cost,
    )(x, x, x, w1t, b1, wd, bnb, w2t, b2)
    return out


def reference_forward(x, params):
    """Pure-JAX reference matching PyTorch eval-mode semantics (same bf16 casts)."""
    B, T, C = x.shape
    w1t, b1, wd = params["w1t"], params["b1"], params["wd"]
    bn_shift, w2t, b2 = params["bn_shift"], params["w2t"], params["b2"]
    K = wd.shape[0]
    pad = (K - 1) // 2

    xb = x.astype(jnp.bfloat16)
    h = jnp.einsum("btc,cd->btd", xb, w1t,
                   preferred_element_type=jnp.float32) + b1
    g = h[..., :C] * jax.nn.sigmoid(h[..., C:])            # GLU (f32)
    gp = jnp.pad(g, ((0, 0), (pad, pad), (0, 0)))
    out = jnp.zeros_like(g)
    for k in range(K):                                     # depthwise (BN scale folded)
        out = out + gp[:, k:k + T, :] * wd[k][None, None, :]
    y = out + bn_shift
    y = y * jax.nn.sigmoid(y)                              # Swish
    yb = y.astype(jnp.bfloat16)
    return jnp.einsum("btc,cd->btd", yb, w2t,
                      preferred_element_type=jnp.float32) + b2


def make_params(key, C, K):
    """Deterministic synthetic parameters (shapes per module __init__), pre-folded."""
    k1, k2, k3, k4, k5, k6, k7, k8, k9 = jax.random.split(key, 9)
    W1 = jax.random.normal(k1, (2 * C, C), jnp.float32) * 0.1   # pointwise conv1 (out, in)
    b1 = jax.random.normal(k2, (2 * C,), jnp.float32) * 0.1
    Wd = jax.random.normal(k3, (C, 1, K), jnp.float32) * 0.1    # depthwise (C, 1, K), bias=False
    gamma = 1.0 + 0.1 * jax.random.normal(k4, (C,), jnp.float32)
    beta = 0.1 * jax.random.normal(k5, (C,), jnp.float32)
    run_mean = 0.1 * jax.random.normal(k6, (C,), jnp.float32)   # BatchNorm1d eval stats
    run_var = 1.0 + 0.1 * jax.random.uniform(k7, (C,), jnp.float32)
    W2 = jax.random.normal(k8, (C, C), jnp.float32) * 0.1
    b2 = jax.random.normal(k9, (C,), jnp.float32) * 0.1
    eps = 1e-5

    bn_scale = gamma / jnp.sqrt(run_var + eps)
    bn_shift = beta - run_mean * bn_scale
    wd_folded = Wd[:, 0, :].T * bn_scale[None, :]               # (K, C), scale folded in

    # TODO(synk): dropout (p=0.1) and train-mode BatchNorm batch statistics are
    # not modeled; this implements eval-mode (inference) forward semantics.
    return {
        "w1t": W1.T.astype(jnp.bfloat16),       # (C, 2C) bf16 (MXU operand)
        "b1": b1[None, :],                      # (1, 2C) f32
        "wd": wd_folded,                        # (K, C)  f32
        "bn_shift": bn_shift[None, :],          # (1, C)  f32
        "w2t": W2.T.astype(jnp.bfloat16),       # (C, C)  bf16 (MXU operand)
        "b2": b2[None, :],                      # (1, C)  f32
    }


if __name__ == "__main__":
    B, T, C, K = 2, 200, 128, 31                # module-default kernel_size=31
    key = jax.random.PRNGKey(0)
    kx, kp = jax.random.split(key)
    x = jax.random.normal(kx, (B, T, C), jnp.float32)
    params = make_params(kp, C, K)

    ref = reference_forward(x, params)

    # Default (large) tile, plus a small tile that exercises interior tiles,
    # the boundary-clamped halos and the ragged last output block.
    for tile in (None, 64):
        out = jax.block_until_ready(
            squeezeformer_conv_module(x, params, tile_t=tile))
        assert out.shape == (B, T, C)
        assert jnp.allclose(out, ref, atol=2e-2, rtol=2e-2), f"mismatch (tile_t={tile})"
    print("KERNEL_OK")
</pallas_src>

<mosaic_0001>
module attributes {stable_mosaic.version = 11 : i64} {
  func.func @conv_module_kernel(%arg0: i32, %arg1: i32, %arg2: memref<1x16x128xf32, #tpu.memory_space<vmem>>, %arg3: memref<1x192x128xf32, #tpu.memory_space<vmem>>, %arg4: memref<1x16x128xf32, #tpu.memory_space<vmem>>, %arg5: memref<128x256xbf16, #tpu.memory_space<vmem>>, %arg6: memref<1x256xf32, #tpu.memory_space<vmem>>, %arg7: memref<31x128xf32, #tpu.memory_space<vmem>>, %arg8: memref<1x128xf32, #tpu.memory_space<vmem>>, %arg9: memref<128x128xbf16, #tpu.memory_space<vmem>>, %arg10: memref<1x128xf32, #tpu.memory_space<vmem>>, %arg11: memref<1x192x128xf32, #tpu.memory_space<vmem>>) attributes {dimension_semantics = [#tpu.dimension_semantics<parallel>, #tpu.dimension_semantics<parallel>], iteration_bounds = array<i64: 2, 2>, scalar_prefetch = 0 : i64, scratch_operands = 0 : i64, tpu.core_type = #tpu.core_type<tc>, window_params = [{transform_indices = @transform_0, window_bounds = array<i64: 1, 16, 128>}, {transform_indices = @transform_1, window_bounds = array<i64: 1, 192, 128>}, {transform_indices = @transform_2, window_bounds = array<i64: 1, 16, 128>}, {pipeline_mode = #tpu.pipeline_mode<synchronous>, transform_indices = @transform_3, window_bounds = array<i64: 128, 256>}, {pipeline_mode = #tpu.pipeline_mode<synchronous>, transform_indices = @transform_4, window_bounds = array<i64: 1, 256>}, {pipeline_mode = #tpu.pipeline_mode<synchronous>, transform_indices = @transform_5, window_bounds = array<i64: 31, 128>}, {pipeline_mode = #tpu.pipeline_mode<synchronous>, transform_indices = @transform_6, window_bounds = array<i64: 1, 128>}, {pipeline_mode = #tpu.pipeline_mode<synchronous>, transform_indices = @transform_7, window_bounds = array<i64: 128, 128>}, {pipeline_mode = #tpu.pipeline_mode<synchronous>, transform_indices = @transform_8, window_bounds = array<i64: 1, 128>}, {transform_indices = @transform_9, window_bounds = array<i64: 1, 192, 128>}]} {
    %c0 = arith.constant 0 : index
    %c0_0 = arith.constant 0 : index
    %c0_1 = arith.constant 0 : index
    %0 = vector.load %arg2[%c0, %c0_0, %c0_1] : memref<1x16x128xf32, #tpu.memory_space<vmem>>, vector<1x16x128xf32>
    %1 = vector.shape_cast %0 : vector<1x16x128xf32> to vector<16x128xf32>
    %2 = arith.truncf %1 : vector<16x128xf32> to vector<16x128xbf16>
    %c0_2 = arith.constant 0 : index
    %c0_3 = arith.constant 0 : index
    %c0_4 = arith.constant 0 : index
    %3 = vector.load %arg3[%c0_2, %c0_3, %c0_4] : memref<1x192x128xf32, #tpu.memory_space<vmem>>, vector<1x192x128xf32>
    %4 = vector.shape_cast %3 : vector<1x192x128xf32> to vector<192x128xf32>
    %5 = arith.truncf %4 : vector<192x128xf32> to vector<192x128xbf16>
    %c0_5 = arith.constant 0 : index
    %c0_6 = arith.constant 0 : index
    %c0_7 = arith.constant 0 : index
    %6 = vector.load %arg4[%c0_5, %c0_6, %c0_7] : memref<1x16x128xf32, #tpu.memory_space<vmem>>, vector<1x16x128xf32>
    %7 = vector.shape_cast %6 : vector<1x16x128xf32> to vector<16x128xf32>
    %8 = arith.truncf %7 : vector<16x128xf32> to vector<16x128xbf16>
    %9 = tpu.concatenate %2, %5, %8 in 0 : vector<16x128xbf16>, vector<192x128xbf16>, vector<16x128xbf16> -> vector<224x128xbf16>
    %c0_8 = arith.constant 0 : index
    %c0_9 = arith.constant 0 : index
    %10 = vector.load %arg5[%c0_8, %c0_9] : memref<128x256xbf16, #tpu.memory_space<vmem>>, vector<128x256xbf16>
    %cst = arith.constant dense<0.000000e+00> : vector<224x256xf32>
    %11 = tpu.matmul %9, %10, %cst {dimension_numbers = #tpu.dot_dimension_numbers<[1], [0], [0], [1], [0, 0, 1, 1], [], []>} : vector<224x128xbf16>, vector<128x256xbf16>, vector<224x256xf32> -> vector<224x256xf32>
    %c0_10 = arith.constant 0 : index
    %c0_11 = arith.constant 0 : index
    %12 = vector.load %arg6[%c0_10, %c0_11] : memref<1x256xf32, #tpu.memory_space<vmem>>, vector<1x256xf32>
    %13 = vector.broadcast %12 : vector<1x256xf32> to vector<224x256xf32>
    %14 = arith.addf %11, %13 : vector<224x256xf32>
    %15 = vector.extract_strided_slice %14 {offsets = [0, 0], sizes = [224, 128], strides = [1, 1]} : vector<224x256xf32> to vector<224x128xf32>
    %16 = vector.extract_strided_slice %14 {offsets = [0, 128], sizes = [224, 128], strides = [1, 1]} : vector<224x256xf32> to vector<224x128xf32>
    %17 = arith.negf %16 : vector<224x128xf32>
    %18 = math.exp %17 : vector<224x128xf32>
    %cst_12 = arith.constant 1.000000e+00 : f32
    %19 = vector.broadcast %cst_12 : f32 to vector<224x128xf32>
    %20 = arith.addf %19, %18 : vector<224x128xf32>
    %21 = arith.divf %19, %20 : vector<224x128xf32>
    %22 = arith.mulf %15, %21 : vector<224x128xf32>
    %c192_i32 = arith.constant 192 : i32
    %23 = arith.muli %arg1, %c192_i32 : i32
    %c16_i32 = arith.constant 16 : i32
    %24 = arith.subi %23, %c16_i32 : i32
    %25 = tpu.iota {dimensions = array<i32: 0>} : vector<224x1xi32>
    %26 = vector.broadcast %24 : i32 to vector<224x1xi32>
    %27 = arith.addi %26, %25 : vector<224x1xi32>
    %c0_i32 = arith.constant 0 : i32
    %28 = vector.broadcast %c0_i32 : i32 to vector<224x1xi32>
    %29 = arith.cmpi sge, %27, %28 : vector<224x1xi32>
    %c200_i32 = arith.constant 200 : i32
    %30 = vector.broadcast %c200_i32 : i32 to vector<224x1xi32>
    %31 = arith.cmpi slt, %27, %30 : vector<224x1xi32>
    %32 = arith.andi %29, %31 : vector<224x1xi1>
    %cst_13 = arith.constant 0.000000e+00 : f32
    %33 = vector.shape_cast %32 : vector<224x1xi1> to vector<224x1xi1>
    %34 = vector.broadcast %33 : vector<224x1xi1> to vector<224x128xi1>
    %35 = vector.broadcast %cst_13 : f32 to vector<224x128xf32>
    %36 = arith.select %34, %22, %35 : vector<224x128xi1>, vector<224x128xf32>
    %c0_14 = arith.constant 0 : index
    %c0_15 = arith.constant 0 : index
    %37 = vector.load %arg7[%c0_14, %c0_15] : memref<31x128xf32, #tpu.memory_space<vmem>>, vector<31x128xf32>
    %cst_16 = arith.constant 0.000000e+00 : f32
    %38 = vector.broadcast %cst_16 : f32 to vector<192x128xf32>
    %cst_17 = arith.constant 0.000000e+00 : f32
    %39 = vector.broadcast %cst_17 : f32 to vector<192x128xf32>
    %40 = vector.extract_strided_slice %36 {offsets = [1, 0], sizes = [192, 128], strides = [1, 1]} : vector<224x128xf32> to vector<192x128xf32>
    %41 = vector.extract_strided_slice %37 {offsets = [0, 0], sizes = [1, 128], strides = [1, 1]} : vector<31x128xf32> to vector<1x128xf32>
    %42 = vector.shape_cast %41 : vector<1x128xf32> to vector<128xf32>
    %43 = vector.shape_cast %42 : vector<128xf32> to vector<1x128xf32>
    %44 = vector.broadcast %43 : vector<1x128xf32> to vector<192x128xf32>
    %45 = arith.mulf %40, %44 : vector<192x128xf32>
    %46 = arith.addf %38, %45 : vector<192x128xf32>
    %47 = vector.extract_strided_slice %36 {offsets = [2, 0], sizes = [192, 128], strides = [1, 1]} : vector<224x128xf32> to vector<192x128xf32>
    %48 = vector.extract_strided_slice %37 {offsets = [1, 0], sizes = [1, 128], strides = [1, 1]} : vector<31x128xf32> to vector<1x128xf32>
    %49 = vector.shape_cast %48 : vector<1x128xf32> to vector<128xf32>
    %50 = vector.shape_cast %49 : vector<128xf32> to vector<1x128xf32>
    %51 = vector.broadcast %50 : vector<1x128xf32> to vector<192x128xf32>
    %52 = arith.mulf %47, %51 : vector<192x128xf32>
    %53 = arith.addf %39, %52 : vector<192x128xf32>
    %54 = vector.extract_strided_slice %36 {offsets = [3, 0], sizes = [192, 128], strides = [1, 1]} : vector<224x128xf32> to vector<192x128xf32>
    %55 = vector.extract_strided_slice %37 {offsets = [2, 0], sizes = [1, 128], strides = [1, 1]} : vector<31x128xf32> to vector<1x128xf32>
    %56 = vector.shape_cast %55 : vector<1x128xf32> to vector<128xf32>
    %57 = vector.shape_cast %56 : vector<128xf32> to vector<1x128xf32>
    %58 = vector.broadcast %57 : vector<1x128xf32> to vector<192x128xf32>
    %59 = arith.mulf %54, %58 : vector<192x128xf32>
    %60 = arith.addf %46, %59 : vector<192x128xf32>
    %61 = vector.extract_strided_slice %36 {offsets = [4, 0], sizes = [192, 128], strides = [1, 1]} : vector<224x128xf32> to vector<192x128xf32>
    %62 = vector.extract_strided_slice %37 {offsets = [3, 0], sizes = [1, 128], strides = [1, 1]} : vector<31x128xf32> to vector<1x128xf32>
    %63 = vector.shape_cast %62 : vector<1x128xf32> to vector<128xf32>
    %64 = vector.shape_cast %63 : vector<128xf32> to vector<1x128xf32>
    %65 = vector.broadcast %64 : vector<1x128xf32> to vector<192x128xf32>
    %66 = arith.mulf %61, %65 : vector<192x128xf32>
    %67 = arith.addf %53, %66 : vector<192x128xf32>
    %68 = vector.extract_strided_slice %36 {offsets = [5, 0], sizes = [192, 128], strides = [1, 1]} : vector<224x128xf32> to vector<192x128xf32>
    %69 = vector.extract_strided_slice %37 {offsets = [4, 0], sizes = [1, 128], strides = [1, 1]} : vector<31x128xf32> to vector<1x128xf32>
    %70 = vector.shape_cast %69 : vector<1x128xf32> to vector<128xf32>
    %71 = vector.shape_cast %70 : vector<128xf32> to vector<1x128xf32>
    %72 = vector.broadcast %71 : vector<1x128xf32> to vector<192x128xf32>
    %73 = arith.mulf %68, %72 : vector<192x128xf32>
    %74 = arith.addf %60, %73 : vector<192x128xf32>
    %75 = vector.extract_strided_slice %36 {offsets = [6, 0], sizes = [192, 128], strides = [1, 1]} : vector<224x128xf32> to vector<192x128xf32>
    %76 = vector.extract_strided_slice %37 {offsets = [5, 0], sizes = [1, 128], strides = [1, 1]} : vector<31x128xf32> to vector<1x128xf32>
    %77 = vector.shape_cast %76 : vector<1x128xf32> to vector<128xf32>
    %78 = vector.shape_cast %77 : vector<128xf32> to vector<1x128xf32>
    %79 = vector.broadcast %78 : vector<1x128xf32> to vector<192x128xf32>
    %80 = arith.mulf %75, %79 : vector<192x128xf32>
    %81 = arith.addf %67, %80 : vector<192x128xf32>
    %82 = vector.extract_strided_slice %36 {offsets = [7, 0], sizes = [192, 128], strides = [1, 1]} : vector<224x128xf32> to vector<192x128xf32>
    %83 = vector.extract_strided_slice %37 {offsets = [6, 0], sizes = [1, 128], strides = [1, 1]} : vector<31x128xf32> to vector<1x128xf32>
    %84 = vector.shape_cast %83 : vector<1x128xf32> to vector<128xf32>
    %85 = vector.shape_cast %84 : vector<128xf32> to vector<1x128xf32>
    %86 = vector.broadcast %85 : vector<1x128xf32> to vector<192x128xf32>
    %87 = arith.mulf %82, %86 : vector<192x128xf32>
    %88 = arith.addf %74, %87 : vector<192x128xf32>
    %89 = vector.extract_strided_slice %36 {offsets = [8, 0], sizes = [192, 128], strides = [1, 1]} : vector<224x128xf32> to vector<192x128xf32>
    %90 = vector.extract_strided_slice %37 {offsets = [7, 0], sizes = [1, 128], strides = [1, 1]} : vector<31x128xf32> to vector<1x128xf32>
    %91 = vector.shape_cast %90 : vector<1x128xf32> to vector<128xf32>
    %92 = vector.shape_cast %91 : vector<128xf32> to vector<1x128xf32>
    %93 = vector.broadcast %92 : vector<1x128xf32> to vector<192x128xf32>
    %94 = arith.mulf %89, %93 : vector<192x128xf32>
    %95 = arith.addf %81, %94 : vector<192x128xf32>
    %96 = vector.extract_strided_slice %36 {offsets = [9, 0], sizes = [192, 128], strides = [1, 1]} : vector<224x128xf32> to vector<192x128xf32>
    %97 = vector.extract_strided_slice %37 {offsets = [8, 0], sizes = [1, 128], strides = [1, 1]} : vector<31x128xf32> to vector<1x128xf32>
    %98 = vector.shape_cast %97 : vector<1x128xf32> to vector<128xf32>
    %99 = vector.shape_cast %98 : vector<128xf32> to vector<1x128xf32>
    %100 = vector.broadcast %99 : vector<1x128xf32> to vector<192x128xf32>
    %101 = arith.mulf %96, %100 : vector<192x128xf32>
    %102 = arith.addf %88, %101 : vector<192x128xf32>
    %103 = vector.extract_strided_slice %36 {offsets = [10, 0], sizes = [192, 128], strides = [1, 1]} : vector<224x128xf32> to vector<192x128xf32>
    %104 = vector.extract_strided_slice %37 {offsets = [9, 0], sizes = [1, 128], strides = [1, 1]} : vector<31x128xf32> to vector<1x128xf32>
    %105 = vector.shape_cast %104 : vector<1x128xf32> to vector<128xf32>
    %106 = vector.shape_cast %105 : vector<128xf32> to vector<1x128xf32>
    %107 = vector.broadcast %106 : vector<1x128xf32> to vector<192x128xf32>
    %108 = arith.mulf %103, %107 : vector<192x128xf32>
    %109 = arith.addf %95, %108 : vector<192x128xf32>
    %110 = vector.extract_strided_slice %36 {offsets = [11, 0], sizes = [192, 128], strides = [1, 1]} : vector<224x128xf32> to vector<192x128xf32>
    %111 = vector.extract_strided_slice %37 {offsets = [10, 0], sizes = [1, 128], strides = [1, 1]} : vector<31x128xf32> to vector<1x128xf32>
    %112 = vector.shape_cast %111 : vector<1x128xf32> to vector<128xf32>
    %113 = vector.shape_cast %112 : vector<128xf32> to vector<1x128xf32>
    %114 = vector.broadcast %113 : vector<1x128xf32> to vector<192x128xf32>
    %115 = arith.mulf %110, %114 : vector<192x128xf32>
    %116 = arith.addf %102, %115 : vector<192x128xf32>
    %117 = vector.extract_strided_slice %36 {offsets = [12, 0], sizes = [192, 128], strides = [1, 1]} : vector<224x128xf32> to vector<192x128xf32>
    %118 = vector.extract_strided_slice %37 {offsets = [11, 0], sizes = [1, 128], strides = [1, 1]} : vector<31x128xf32> to vector<1x128xf32>
    %119 = vector.shape_cast %118 : vector<1x128xf32> to vector<128xf32>
    %120 = vector.shape_cast %119 : vector<128xf32> to vector<1x128xf32>
    %121 = vector.broadcast %120 : vector<1x128xf32> to vector<192x128xf32>
    %122 = arith.mulf %117, %121 : vector<192x128xf32>
    %123 = arith.addf %109, %122 : vector<192x128xf32>
    %124 = vector.extract_strided_slice %36 {offsets = [13, 0], sizes = [192, 128], strides = [1, 1]} : vector<224x128xf32> to vector<192x128xf32>
    %125 = vector.extract_strided_slice %37 {offsets = [12, 0], sizes = [1, 128], strides = [1, 1]} : vector<31x128xf32> to vector<1x128xf32>
    %126 = vector.shape_cast %125 : vector<1x128xf32> to vector<128xf32>
    %127 = vector.shape_cast %126 : vector<128xf32> to vector<1x128xf32>
    %128 = vector.broadcast %127 : vector<1x128xf32> to vector<192x128xf32>
    %129 = arith.mulf %124, %128 : vector<192x128xf32>
    %130 = arith.addf %116, %129 : vector<192x128xf32>
    %131 = vector.extract_strided_slice %36 {offsets = [14, 0], sizes = [192, 128], strides = [1, 1]} : vector<224x128xf32> to vector<192x128xf32>
    %132 = vector.extract_strided_slice %37 {offsets = [13, 0], sizes = [1, 128], strides = [1, 1]} : vector<31x128xf32> to vector<1x128xf32>
    %133 = vector.shape_cast %132 : vector<1x128xf32> to vector<128xf32>
    %134 = vector.shape_cast %133 : vector<128xf32> to vector<1x128xf32>
    %135 = vector.broadcast %134 : vector<1x128xf32> to vector<192x128xf32>
    %136 = arith.mulf %131, %135 : vector<192x128xf32>
    %137 = arith.addf %123, %136 : vector<192x128xf32>
    %138 = vector.extract_strided_slice %36 {offsets = [15, 0], sizes = [192, 128], strides = [1, 1]} : vector<224x128xf32> to vector<192x128xf32>
    %139 = vector.extract_strided_slice %37 {offsets = [14, 0], sizes = [1, 128], strides = [1, 1]} : vector<31x128xf32> to vector<1x128xf32>
    %140 = vector.shape_cast %139 : vector<1x128xf32> to vector<128xf32>
    %141 = vector.shape_cast %140 : vector<128xf32> to vector<1x128xf32>
    %142 = vector.broadcast %141 : vector<1x128xf32> to vector<192x128xf32>
    %143 = arith.mulf %138, %142 : vector<192x128xf32>
    %144 = arith.addf %130, %143 : vector<192x128xf32>
    %145 = vector.extract_strided_slice %36 {offsets = [16, 0], sizes = [192, 128], strides = [1, 1]} : vector<224x128xf32> to vector<192x128xf32>
    %146 = vector.extract_strided_slice %37 {offsets = [15, 0], sizes = [1, 128], strides = [1, 1]} : vector<31x128xf32> to vector<1x128xf32>
    %147 = vector.shape_cast %146 : vector<1x128xf32> to vector<128xf32>
    %148 = vector.shape_cast %147 : vector<128xf32> to vector<1x128xf32>
    %149 = vector.broadcast %148 : vector<1x128xf32> to vector<192x128xf32>
    %150 = arith.mulf %145, %149 : vector<192x128xf32>
    %151 = arith.addf %137, %150 : vector<192x128xf32>
    %152 = vector.extract_strided_slice %36 {offsets = [17, 0], sizes = [192, 128], strides = [1, 1]} : vector<224x128xf32> to vector<192x128xf32>
    %153 = vector.extract_strided_slice %37 {offsets = [16, 0], sizes = [1, 128], strides = [1, 1]} : vector<31x128xf32> to vector<1x128xf32>
    %154 = vector.shape_cast %153 : vector<1x128xf32> to vector<128xf32>
    %155 = vector.shape_cast %154 : vector<128xf32> to vector<1x128xf32>
    %156 = vector.broadcast %155 : vector<1x128xf32> to vector<192x128xf32>
    %157 = arith.mulf %152, %156 : vector<192x128xf32>
    %158 = arith.addf %144, %157 : vector<192x128xf32>
    %159 = vector.extract_strided_slice %36 {offsets = [18, 0], sizes = [192, 128], strides = [1, 1]} : vector<224x128xf32> to vector<192x128xf32>
    %160 = vector.extract_strided_slice %37 {offsets = [17, 0], sizes = [1, 128], strides = [1, 1]} : vector<31x128xf32> to vector<1x128xf32>
    %161 = vector.shape_cast %160 : vector<1x128xf32> to vector<128xf32>
    %162 = vector.shape_cast %161 : vector<128xf32> to vector<1x128xf32>
    %163 = vector.broadcast %162 : vector<1x128xf32> to vector<192x128xf32>
    %164 = arith.mulf %159, %163 : vector<192x128xf32>
    %165 = arith.addf %151, %164 : vector<192x128xf32>
    %166 = vector.extract_strided_slice %36 {offsets = [19, 0], sizes = [192, 128], strides = [1, 1]} : vector<224x128xf32> to vector<192x128xf32>
    %167 = vector.extract_strided_slice %37 {offsets = [18, 0], sizes = [1, 128], strides = [1, 1]} : vector<31x128xf32> to vector<1x128xf32>
    %168 = vector.shape_cast %167 : vector<1x128xf32> to vector<128xf32>
    %169 = vector.shape_cast %168 : vector<128xf32> to vector<1x128xf32>
    %170 = vector.broadcast %169 : vector<1x128xf32> to vector<192x128xf32>
    %171 = arith.mulf %166, %170 : vector<192x128xf32>
    %172 = arith.addf %158, %171 : vector<192x128xf32>
    %173 = vector.extract_strided_slice %36 {offsets = [20, 0], sizes = [192, 128], strides = [1, 1]} : vector<224x128xf32> to vector<192x128xf32>
    %174 = vector.extract_strided_slice %37 {offsets = [19, 0], sizes = [1, 128], strides = [1, 1]} : vector<31x128xf32> to vector<1x128xf32>
    %175 = vector.shape_cast %174 : vector<1x128xf32> to vector<128xf32>
    %176 = vector.shape_cast %175 : vector<128xf32> to vector<1x128xf32>
    %177 = vector.broadcast %176 : vector<1x128xf32> to vector<192x128xf32>
    %178 = arith.mulf %173, %177 : vector<192x128xf32>
    %179 = arith.addf %165, %178 : vector<192x128xf32>
    %180 = vector.extract_strided_slice %36 {offsets = [21, 0], sizes = [192, 128], strides = [1, 1]} : vector<224x128xf32> to vector<192x128xf32>
    %181 = vector.extract_strided_slice %37 {offsets = [20, 0], sizes = [1, 128], strides = [1, 1]} : vector<31x128xf32> to vector<1x128xf32>
    %182 = vector.shape_cast %181 : vector<1x128xf32> to vector<128xf32>
    %183 = vector.shape_cast %182 : vector<128xf32> to vector<1x128xf32>
    %184 = vector.broadcast %183 : vector<1x128xf32> to vector<192x128xf32>
    %185 = arith.mulf %180, %184 : vector<192x128xf32>
    %186 = arith.addf %172, %185 : vector<192x128xf32>
    %187 = vector.extract_strided_slice %36 {offsets = [22, 0], sizes = [192, 128], strides = [1, 1]} : vector<224x128xf32> to vector<192x128xf32>
    %188 = vector.extract_strided_slice %37 {offsets = [21, 0], sizes = [1, 128], strides = [1, 1]} : vector<31x128xf32> to vector<1x128xf32>
    %189 = vector.shape_cast %188 : vector<1x128xf32> to vector<128xf32>
    %190 = vector.shape_cast %189 : vector<128xf32> to vector<1x128xf32>
    %191 = vector.broadcast %190 : vector<1x128xf32> to vector<192x128xf32>
    %192 = arith.mulf %187, %191 : vector<192x128xf32>
    %193 = arith.addf %179, %192 : vector<192x128xf32>
    %194 = vector.extract_strided_slice %36 {offsets = [23, 0], sizes = [192, 128], strides = [1, 1]} : vector<224x128xf32> to vector<192x128xf32>
    %195 = vector.extract_strided_slice %37 {offsets = [22, 0], sizes = [1, 128], strides = [1, 1]} : vector<31x128xf32> to vector<1x128xf32>
    %196 = vector.shape_cast %195 : vector<1x128xf32> to vector<128xf32>
    %197 = vector.shape_cast %196 : vector<128xf32> to vector<1x128xf32>
    %198 = vector.broadcast %197 : vector<1x128xf32> to vector<192x128xf32>
    %199 = arith.mulf %194, %198 : vector<192x128xf32>
    %200 = arith.addf %186, %199 : vector<192x128xf32>
    %201 = vector.extract_strided_slice %36 {offsets = [24, 0], sizes = [192, 128], strides = [1, 1]} : vector<224x128xf32> to vector<192x128xf32>
    %202 = vector.extract_strided_slice %37 {offsets = [23, 0], sizes = [1, 128], strides = [1, 1]} : vector<31x128xf32> to vector<1x128xf32>
    %203 = vector.shape_cast %202 : vector<1x128xf32> to vector<128xf32>
    %204 = vector.shape_cast %203 : vector<128xf32> to vector<1x128xf32>
    %205 = vector.broadcast %204 : vector<1x128xf32> to vector<192x128xf32>
    %206 = arith.mulf %201, %205 : vector<192x128xf32>
    %207 = arith.addf %193, %206 : vector<192x128xf32>
    %208 = vector.extract_strided_slice %36 {offsets = [25, 0], sizes = [192, 128], strides = [1, 1]} : vector<224x128xf32> to vector<192x128xf32>
    %209 = vector.extract_strided_slice %37 {offsets = [24, 0], sizes = [1, 128], strides = [1, 1]} : vector<31x128xf32> to vector<1x128xf32>
    %210 = vector.shape_cast %209 : vector<1x128xf32> to vector<128xf32>
    %211 = vector.shape_cast %210 : vector<128xf32> to vector<1x128xf32>
    %212 = vector.broadcast %211 : vector<1x128xf32> to vector<192x128xf32>
    %213 = arith.mulf %208, %212 : vector<192x128xf32>
    %214 = arith.addf %200, %213 : vector<192x128xf32>
    %215 = vector.extract_strided_slice %36 {offsets = [26, 0], sizes = [192, 128], strides = [1, 1]} : vector<224x128xf32> to vector<192x128xf32>
    %216 = vector.extract_strided_slice %37 {offsets = [25, 0], sizes = [1, 128], strides = [1, 1]} : vector<31x128xf32> to vector<1x128xf32>
    %217 = vector.shape_cast %216 : vector<1x128xf32> to vector<128xf32>
    %218 = vector.shape_cast %217 : vector<128xf32> to vector<1x128xf32>
    %219 = vector.broadcast %218 : vector<1x128xf32> to vector<192x128xf32>
    %220 = arith.mulf %215, %219 : vector<192x128xf32>
    %221 = arith.addf %207, %220 : vector<192x128xf32>
    %222 = vector.extract_strided_slice %36 {offsets = [27, 0], sizes = [192, 128], strides = [1, 1]} : vector<224x128xf32> to vector<192x128xf32>
    %223 = vector.extract_strided_slice %37 {offsets = [26, 0], sizes = [1, 128], strides = [1, 1]} : vector<31x128xf32> to vector<1x128xf32>
    %224 = vector.shape_cast %223 : vector<1x128xf32> to vector<128xf32>
    %225 = vector.shape_cast %224 : vector<128xf32> to vector<1x128xf32>
    %226 = vector.broadcast %225 : vector<1x128xf32> to vector<192x128xf32>
    %227 = arith.mulf %222, %226 : vector<192x128xf32>
    %228 = arith.addf %214, %227 : vector<192x128xf32>
    %229 = vector.extract_strided_slice %36 {offsets = [28, 0], sizes = [192, 128], strides = [1, 1]} : vector<224x128xf32> to vector<192x128xf32>
    %230 = vector.extract_strided_slice %37 {offsets = [27, 0], sizes = [1, 128], strides = [1, 1]} : vector<31x128xf32> to vector<1x128xf32>
    %231 = vector.shape_cast %230 : vector<1x128xf32> to vector<128xf32>
    %232 = vector.shape_cast %231 : vector<128xf32> to vector<1x128xf32>
    %233 = vector.broadcast %232 : vector<1x128xf32> to vector<192x128xf32>
    %234 = arith.mulf %229, %233 : vector<192x128xf32>
    %235 = arith.addf %221, %234 : vector<192x128xf32>
    %236 = vector.extract_strided_slice %36 {offsets = [29, 0], sizes = [192, 128], strides = [1, 1]} : vector<224x128xf32> to vector<192x128xf32>
    %237 = vector.extract_strided_slice %37 {offsets = [28, 0], sizes = [1, 128], strides = [1, 1]} : vector<31x128xf32> to vector<1x128xf32>
    %238 = vector.shape_cast %237 : vector<1x128xf32> to vector<128xf32>
    %239 = vector.shape_cast %238 : vector<128xf32> to vector<1x128xf32>
    %240 = vector.broadcast %239 : vector<1x128xf32> to vector<192x128xf32>
    %241 = arith.mulf %236, %240 : vector<192x128xf32>
    %242 = arith.addf %228, %241 : vector<192x128xf32>
    %243 = vector.extract_strided_slice %36 {offsets = [30, 0], sizes = [192, 128], strides = [1, 1]} : vector<224x128xf32> to vector<192x128xf32>
    %244 = vector.extract_strided_slice %37 {offsets = [29, 0], sizes = [1, 128], strides = [1, 1]} : vector<31x128xf32> to vector<1x128xf32>
    %245 = vector.shape_cast %244 : vector<1x128xf32> to vector<128xf32>
    %246 = vector.shape_cast %245 : vector<128xf32> to vector<1x128xf32>
    %247 = vector.broadcast %246 : vector<1x128xf32> to vector<192x128xf32>
    %248 = arith.mulf %243, %247 : vector<192x128xf32>
    %249 = arith.addf %235, %248 : vector<192x128xf32>
    %250 = vector.extract_strided_slice %36 {offsets = [31, 0], sizes = [192, 128], strides = [1, 1]} : vector<224x128xf32> to vector<192x128xf32>
    %251 = vector.extract_strided_slice %37 {offsets = [30, 0], sizes = [1, 128], strides = [1, 1]} : vector<31x128xf32> to vector<1x128xf32>
    %252 = vector.shape_cast %251 : vector<1x128xf32> to vector<128xf32>
    %253 = vector.shape_cast %252 : vector<128xf32> to vector<1x128xf32>
    %254 = vector.broadcast %253 : vector<1x128xf32> to vector<192x128xf32>
    %255 = arith.mulf %250, %254 : vector<192x128xf32>
    %256 = arith.addf %242, %255 : vector<192x128xf32>
    %257 = arith.addf %256, %249 : vector<192x128xf32>
    %c0_18 = arith.constant 0 : index
    %c0_19 = arith.constant 0 : index
    %258 = vector.load %arg8[%c0_18, %c0_19] : memref<1x128xf32, #tpu.memory_space<vmem>>, vector<1x128xf32>
    %259 = vector.broadcast %258 : vector<1x128xf32> to vector<192x128xf32>
    %260 = arith.addf %257, %259 : vector<192x128xf32>
    %261 = arith.negf %260 : vector<192x128xf32>
    %262 = math.exp %261 : vector<192x128xf32>
    %cst_20 = arith.constant 1.000000e+00 : f32
    %263 = vector.broadcast %cst_20 : f32 to vector<192x128xf32>
    %264 = arith.addf %263, %262 : vector<192x128xf32>
    %265 = arith.divf %263, %264 : vector<192x128xf32>
    %266 = arith.mulf %260, %265 : vector<192x128xf32>
    %267 = arith.truncf %266 : vector<192x128xf32> to vector<192x128xbf16>
    %c0_21 = arith.constant 0 : index
    %c0_22 = arith.constant 0 : index
    %268 = vector.load %arg9[%c0_21, %c0_22] : memref<128x128xbf16, #tpu.memory_space<vmem>>, vector<128x128xbf16>
    %cst_23 = arith.constant dense<0.000000e+00> : vector<192x128xf32>
    %269 = tpu.matmul %267, %268, %cst_23 {dimension_numbers = #tpu.dot_dimension_numbers<[1], [0], [0], [1], [0, 0, 1, 1], [], []>} : vector<192x128xbf16>, vector<128x128xbf16>, vector<192x128xf32> -> vector<192x128xf32>
    %c0_24 = arith.constant 0 : index
    %c0_25 = arith.constant 0 : index
    %270 = vector.load %arg10[%c0_24, %c0_25] : memref<1x128xf32, #tpu.memory_space<vmem>>, vector<1x128xf32>
    %271 = vector.broadcast %270 : vector<1x128xf32> to vector<192x128xf32>
    %272 = arith.addf %269, %271 : vector<192x128xf32>
    %c0_26 = arith.constant 0 : index
    %c0_27 = arith.constant 0 : index
    %c0_28 = arith.constant 0 : index
    %273 = vector.load %arg11[%c0_26, %c0_27, %c0_28] : memref<1x192x128xf32, #tpu.memory_space<vmem>>, vector<1x192x128xf32>
    %274 = vector.shape_cast %273 : vector<1x192x128xf32> to vector<192x128xf32>
    %275 = vector.shape_cast %272 : vector<192x128xf32> to vector<1x192x128xf32>
    tpu.vector_store %arg11[%c0_26, %c0_27, %c0_28], %275 {strides = array<i32>} : memref<1x192x128xf32, #tpu.memory_space<vmem>>, vector<1x192x128xf32>,
    return
  }
  func.func @transform_0(%arg0: i32, %arg1: i32) -> (i32, i32, i32) {
    %c12_i32 = arith.constant 12 : i32
    %0 = arith.muli %arg1, %c12_i32 : i32
    %c1_i32 = arith.constant 1 : i32
    %1 = arith.subi %0, %c1_i32 : i32
    %c0_i32 = arith.constant 0 : i32
    %2 = arith.maxsi %1, %c0_i32 : i32
    %c0_i32_0 = arith.constant 0 : i32
    %c0_i32_1 = arith.constant 0 : i32
    return %arg0, %2, %c0_i32_0 : i32, i32, i32
  }
  func.func @transform_1(%arg0: i32, %arg1: i32) -> (i32, i32, i32) {
    %c0_i32 = arith.constant 0 : i32
    %c0_i32_0 = arith.constant 0 : i32
    return %arg0, %arg1, %c0_i32 : i32, i32, i32
  }
  func.func @transform_2(%arg0: i32, %arg1: i32) -> (i32, i32, i32) {
    %c1_i32 = arith.constant 1 : i32
    %0 = arith.addi %arg1, %c1_i32 : i32
    %c12_i32 = arith.constant 12 : i32
    %1 = arith.muli %0, %c12_i32 : i32
    %c12_i32_0 = arith.constant 12 : i32
    %2 = arith.minsi %1, %c12_i32_0 : i32
    %c0_i32 = arith.constant 0 : i32
    %c0_i32_1 = arith.constant 0 : i32
    return %arg0, %2, %c0_i32 : i32, i32, i32
  }
  func.func @transform_3(%arg0: i32, %arg1: i32) -> (i32, i32) {
    %c0_i32 = arith.constant 0 : i32
    %c0_i32_0 = arith.constant 0 : i32
    %c0_i32_1 = arith.constant 0 : i32
    return %c0_i32, %c0_i32_0 : i32, i32
  }
  func.func @transform_4(%arg0: i32, %arg1: i32) -> (i32, i32) {
    %c0_i32 = arith.constant 0 : i32
    %c0_i32_0 = arith.constant 0 : i32
    %c0_i32_1 = arith.constant 0 : i32
    return %c0_i32, %c0_i32_0 : i32, i32
  }
  func.func @transform_5(%arg0: i32, %arg1: i32) -> (i32, i32) {
    %c0_i32 = arith.constant 0 : i32
    %c0_i32_0 = arith.constant 0 : i32
    %c0_i32_1 = arith.constant 0 : i32
    return %c0_i32, %c0_i32_0 : i32, i32
  }
  func.func @transform_6(%arg0: i32, %arg1: i32) -> (i32, i32) {
    %c0_i32 = arith.constant 0 : i32
    %c0_i32_0 = arith.constant 0 : i32
    %c0_i32_1 = arith.constant 0 : i32
    return %c0_i32, %c0_i32_0 : i32, i32
  }
  func.func @transform_7(%arg0: i32, %arg1: i32) -> (i32, i32) {
    %c0_i32 = arith.constant 0 : i32
    %c0_i32_0 = arith.constant 0 : i32
    %c0_i32_1 = arith.constant 0 : i32
    return %c0_i32, %c0_i32_0 : i32, i32
  }
  func.func @transform_8(%arg0: i32, %arg1: i32) -> (i32, i32) {
    %c0_i32 = arith.constant 0 : i32
    %c0_i32_0 = arith.constant 0 : i32
    %c0_i32_1 = arith.constant 0 : i32
    return %c0_i32, %c0_i32_0 : i32, i32
  }
  func.func @transform_9(%arg0: i32, %arg1: i32) -> (i32, i32, i32) {
    %c0_i32 = arith.constant 0 : i32
    %c0_i32_0 = arith.constant 0 : i32
    return %arg0, %arg1, %c0_i32 : i32, i32, i32
  }
}

</mosaic_0001>

<llo_original>
// kernel: tpu_custom_call.1
$region0: #{tpu_custom_call.1}
  #allocation0 [shape = 'u32[]', space=smem, size = 0x4, offset = 0x4, fixed_abs, tag = 'smem constant byte address 0x4 - core index']
  #allocation1 [shape = 'u32[144,128]{1,0:T(1,128)}', space=vmem, size = 0x12000, scoped, tag = 'internal scratch']
  %s0 = inlined_call_operand.hbm [shape: f32[2,200,128], index: 0, kind: input, shape index: {}]
  %s1 = inlined_call_operand.hbm [shape: f32[2,200,128], index: 1, kind: input, shape index: {}]
  %s2 = inlined_call_operand.hbm [shape: f32[2,200,128], index: 2, kind: input, shape index: {}]
  %s3 = inlined_call_operand.hbm [shape: bf16[128,256], index: 3, kind: input, shape index: {}]
  %s4 = inlined_call_operand.vmem [shape: f32[1,256], index: 4, kind: input, shape index: {}]
  %s5 = inlined_call_operand.hbm [shape: f32[31,128], index: 5, kind: input, shape index: {}]
  %s6 = inlined_call_operand.vmem [shape: f32[1,128], index: 6, kind: input, shape index: {}]
  %s7 = inlined_call_operand.hbm [shape: bf16[128,128], index: 7, kind: input, shape index: {}]
  %s8 = inlined_call_operand.vmem [shape: f32[1,128], index: 8, kind: input, shape index: {}]
  %s9 = inlined_call_operand.hbm [shape: f32[2,200,128], index: 9, kind: output, shape index: {}]
  %s10 = sld [smem:[#allocation0]]
  $region93: #{tpu_custom_call.1} parent=0
    _
  %s12 = ssub.s32 1, %s10
  %s13 = scalar_select 0, %s12, %s10
  $region1: #{tpu_custom_call.1} parent=0
    #allocation2 [shape = 'u8[16384]{0}', space=vmem, size = 0x4000, scoped, tag = 'input window, operand 0']
    #allocation3 [shape = 's32[2]{0}', space=sflag, size = 0x8, scoped, tag = 'scoped memory for tpu_custom_call.1']
    #allocation4 [shape = 's32[2]{0}', space=sflag, size = 0x8, scoped, tag = 'scoped memory for tpu_custom_call.1']
    #allocation5 [shape = 'u8[196608]{0}', space=vmem, size = 0x30000, scoped, tag = 'input window, operand 1']
    #allocation6 [shape = 's32[2]{0}', space=sflag, size = 0x8, scoped, tag = 'scoped memory for tpu_custom_call.1']
    #allocation7 [shape = 'u8[16384]{0}', space=vmem, size = 0x4000, scoped, tag = 'input window, operand 2']
    #allocation8 [shape = 'u8[65536]{0}', space=vmem, size = 0x10000, scoped, tag = 'input window, operand 3, single buffered']
    #allocation9 [shape = 's32[1]{0}', space=sflag, size = 0x4, scoped, tag = 'scoped memory for tpu_custom_call.1']
    #allocation10 [shape = 'u8[16384]{0}', space=vmem, size = 0x4000, scoped, tag = 'input window, operand 5, single buffered']
    #allocation11 [shape = 'u8[32768]{0}', space=vmem, size = 0x8000, scoped, tag = 'input window, operand 7, single buffered']
    #allocation12 [shape = 's32[1]{0}', space=sflag, size = 0x4, scoped, tag = 'scoped memory for tpu_custom_call.1']
    #allocation13 [shape = 'u8[196608]{0}', space=vmem, size = 0x30000, scoped, tag = 'output window, operand 0']
    %14 = vsyncpa [#allocation3], 0
    %s15 = scalar_lea.sflag [#allocation3], 1
    %16 = vsyncpa %s15, 0
    %17 = vsyncpa [#allocation6], 0
    %s18 = scalar_lea.sflag [#allocation6], 1
    %19 = vsyncpa %s18, 0
    %20 = vsyncpa [#allocation9], 0
    %21 = vsyncpa [#allocation12], 0
    %22 = vsyncpa [#allocation4], 0
    %s23 = scalar_lea.sflag [#allocation4], 1
    %24 = vsyncpa %s23, 0
    loop: start=0, step=1, limit=6
    $region2: #{tpu_custom_call.1} parent=1 // loop_pre_header
      _
    $region3: #{tpu_custom_call.1} parent=1 // loop_header
      %s26 = sphi 0, %s30
      %p27 = scmp.ge.s32.totalorder %s26, 6
      %s33 = sphi 0, %s45
      %s34 = sphi 0, %s41
      %s35 = sphi 0, %s33
      %s36 = sphi 0, %s34
      %s37 = sphi 0, %s35
      %s38 = sphi 0, %s36
      %s58 = sphi 0, %s60
      %s61 = sphi 0, %s58
      %s62 = sphi 0, %s61
      %s78 = sphi 0, %s62
      %s86 = sphi 0, %s88
      %s89 = sphi 0, %s86
      %s90 = sphi 0, %s89
      %s106 = sphi 0, %s90
      %s122 = sphi 0, %s124
      %s125 = sphi 0, %s122
      %s126 = sphi 0, %s125
      %s142 = sphi 0, %s126
      %s146 = sphi 0, %s146
      %s148 = sphi 0, %s146
      %s149 = sphi 0, %s148
      %s163 = sphi 0, %s149
      %s167 = sphi 0, %s167
      %s169 = sphi 0, %s167
      %s170 = sphi 0, %s169
      %s184 = sphi 0, %s170
      %s188 = sphi 0, %s188
      %s190 = sphi 0, %s188
      %s191 = sphi 0, %s190
      %s205 = sphi 0, %s191
      %s209 = sphi 0, %s209
      %s211 = sphi 0, %s209
      %s212 = sphi 0, %s211
      %s226 = sphi 0, %s212
      %s230 = sphi 0, %s230
      %s232 = sphi 0, %s230
      %s233 = sphi 0, %s232
      %s247 = sphi 0, %s233
      %s251 = sphi 0, %s251
      %s253 = sphi 0, %s251
      %s254 = sphi 0, %s253
      %s268 = sphi 0, %s254
      %s276 = sphi 0, %s278
      %s279 = sphi 0, %s276
      %s280 = sphi 0, %s279
      %s296 = sphi 0, %s280
    $region4: #{tpu_custom_call.1} parent=1 // loop_header_branch
      %29 = sbr.rel (%p27) target = $region8
    $region5: #{tpu_custom_call.1} parent=1 // loop_body
      %s31 = ssub.s32 %s26, 1
      %s32 = ssub.s32 %s26, 2
      %s39 = sadd.s32 1, %s34
      %p40 = scmp.ge.s32.totalorder %s39, 2
      %s41 = scalar_select %p40, 0, %s39
      %s42 = sadd.s32 1, %s33
      %s43 = scalar_select %p40, %s42, %s33
      %p44 = scmp.ge.s32.totalorder %s43, 2
      %s45 = scalar_select %p44, 0, %s43
      %s46 = smul.u32 %s34, 12
      %s47 = ssub.s32 %s46, 1
      %p48 = scmp.gt.s32.totalorder %s47, 0
      %s49 = scalar_select %p48, %s47, 0
      %s50 = smul.u32 %s41, 12
      %s51 = ssub.s32 %s50, 1
      %p52 = scmp.gt.s32.totalorder %s51, 0
      %s53 = scalar_select %p52, %s51, 0
      %s54 = ssub.s32 %s33, %s45
      %s55 = ssub.s32 %s49, %s53
      %s56 = sor.u32 %s54, %s55
      %p57 = scmp.eq.s32.totalorder %s56, 0
      %s59 = sadd.s32 %s58, 1
      %s60 = scalar_select %p57, %s58, %s59
      %p63 = pneg %p57
      %p64 = scmp.eq.s32.totalorder %s26, 3
      %p65 = por %p63, %p64
      %p66 = scmp.ne.s32.totalorder %s58, %s61
      %p67 = scmp.eq.s32.totalorder %s26, 0
      %p68 = por %p66, %p67
      %p69 = scmp.ne.s32.totalorder %s58, %s61
      %p70 = scmp.eq.s32.totalorder %s31, 3
      %p71 = por %p69, %p70
      %p72 = scmp.ne.s32.totalorder %s61, %s62
      %p73 = scmp.eq.s32.totalorder %s31, 0
      %p74 = por %p72, %p73
      %p75 = scmp.ne.s32.totalorder %s61, %s62
      %p76 = scmp.eq.s32.totalorder %s32, 3
      %p77 = por %p75, %p76
      %p79 = scmp.ne.s32.totalorder %s62, %s78
      %p80 = scmp.eq.s32.totalorder %s32, 0
      %p81 = por %p79, %p80
      %s82 = ssub.s32 %s33, %s45
      %s83 = ssub.s32 %s34, %s41
      %s84 = sor.u32 %s82, %s83
      %p85 = scmp.eq.s32.totalorder %s84, 0
      %s87 = sadd.s32 %s86, 1
      %s88 = scalar_select %p85, %s86, %s87
      %p91 = pneg %p85
      %p92 = scmp.eq.s32.totalorder %s26, 3
      %p93 = por %p91, %p92
      %p94 = scmp.ne.s32.totalorder %s86, %s89
      %p95 = scmp.eq.s32.totalorder %s26, 0
      %p96 = por %p94, %p95
      %p97 = scmp.ne.s32.totalorder %s86, %s89
      %p98 = scmp.eq.s32.totalorder %s31, 3
      %p99 = por %p97, %p98
      %p100 = scmp.ne.s32.totalorder %s89, %s90
      %p101 = scmp.eq.s32.totalorder %s31, 0
      %p102 = por %p100, %p101
      %p103 = scmp.ne.s32.totalorder %s89, %s90
      %p104 = scmp.eq.s32.totalorder %s32, 3
      %p105 = por %p103, %p104
      %p107 = scmp.ne.s32.totalorder %s90, %s106
      %p108 = scmp.eq.s32.totalorder %s32, 0
      %p109 = por %p107, %p108
      %s110 = sadd.s32 %s34, 1
      %s111 = smul.u32 %s110, 12
      %p112 = scmp.lt.s32.totalorder %s111, 12
      %s113 = scalar_select %p112, %s111, 12
      %s114 = sadd.s32 %s41, 1
      %s115 = smul.u32 %s114, 12
      %p116 = scmp.lt.s32.totalorder %s115, 12
      %s117 = scalar_select %p116, %s115, 12
      %s118 = ssub.s32 %s33, %s45
      %s119 = ssub.s32 %s113, %s117
      %s120 = sor.u32 %s118, %s119
      %p121 = scmp.eq.s32.totalorder %s120, 0
      %s123 = sadd.s32 %s122, 1
      %s124 = scalar_select %p121, %s122, %s123
      %p127 = pneg %p121
      %p128 = scmp.eq.s32.totalorder %s26, 3
      %p129 = por %p127, %p128
      %p130 = scmp.ne.s32.totalorder %s122, %s125
      %p131 = scmp.eq.s32.totalorder %s26, 0
      %p132 = por %p130, %p131
      %p133 = scmp.ne.s32.totalorder %s122, %s125
      %p134 = scmp.eq.s32.totalorder %s31, 3
      %p135 = por %p133, %p134
      %p136 = scmp.ne.s32.totalorder %s125, %s126
      %p137 = scmp.eq.s32.totalorder %s31, 0
      %p138 = por %p136, %p137
      %p139 = scmp.ne.s32.totalorder %s125, %s126
      %p140 = scmp.eq.s32.totalorder %s32, 3
      %p141 = por %p139, %p140
      %p143 = scmp.ne.s32.totalorder %s126, %s142
      %p144 = scmp.eq.s32.totalorder %s32, 0
      %p145 = por %p143, %p144
      %s147 = sadd.s32 %s146, 1
      %p150 = scmp.eq.s32.totalorder %s26, 3
      %p151 = scmp.ne.s32.totalorder %s146, %s148
      %p152 = scmp.eq.s32.totalorder %s26, 0
      %p153 = por %p151, %p152
      %p154 = scmp.ne.s32.totalorder %s146, %s148
      %p155 = scmp.eq.s32.totalorder %s31, 3
      %p156 = por %p154, %p155
      %p157 = scmp.ne.s32.totalorder %s148, %s149
      %p158 = scmp.eq.s32.totalorder %s31, 0
      %p159 = por %p157, %p158
      %p160 = scmp.ne.s32.totalorder %s148, %s149
      %p161 = scmp.eq.s32.totalorder %s32, 3
      %p162 = por %p160, %p161
      %p164 = scmp.ne.s32.totalorder %s149, %s163
      %p165 = scmp.eq.s32.totalorder %s32, 0
      %p166 = por %p164, %p165
      %s168 = sadd.s32 %s167, 1
      %p171 = scmp.eq.s32.totalorder %s26, 3
      %p172 = scmp.ne.s32.totalorder %s167, %s169
      %p173 = scmp.eq.s32.totalorder %s26, 0
      %p174 = por %p172, %p173
      %p175 = scmp.ne.s32.totalorder %s167, %s169
      %p176 = scmp.eq.s32.totalorder %s31, 3
      %p177 = por %p175, %p176
      %p178 = scmp.ne.s32.totalorder %s169, %s170
      %p179 = scmp.eq.s32.totalorder %s31, 0
      %p180 = por %p178, %p179
      %p181 = scmp.ne.s32.totalorder %s169, %s170
      %p182 = scmp.eq.s32.totalorder %s32, 3
      %p183 = por %p181, %p182
      %p185 = scmp.ne.s32.totalorder %s170, %s184
      %p186 = scmp.eq.s32.totalorder %s32, 0
      %p187 = por %p185, %p186
      %s189 = sadd.s32 %s188, 1
      %p192 = scmp.eq.s32.totalorder %s26, 3
      %p193 = scmp.ne.s32.totalorder %s188, %s190
      %p194 = scmp.eq.s32.totalorder %s26, 0
      %p195 = por %p193, %p194
      %p196 = scmp.ne.s32.totalorder %s188, %s190
      %p197 = scmp.eq.s32.totalorder %s31, 3
      %p198 = por %p196, %p197
      %p199 = scmp.ne.s32.totalorder %s190, %s191
      %p200 = scmp.eq.s32.totalorder %s31, 0
      %p201 = por %p199, %p200
      %p202 = scmp.ne.s32.totalorder %s190, %s191
      %p203 = scmp.eq.s32.totalorder %s32, 3
      %p204 = por %p202, %p203
      %p206 = scmp.ne.s32.totalorder %s191, %s205
      %p207 = scmp.eq.s32.totalorder %s32, 0
      %p208 = por %p206, %p207
      %s210 = sadd.s32 %s209, 1
      %p213 = scmp.eq.s32.totalorder %s26, 3
      %p214 = scmp.ne.s32.totalorder %s209, %s211
      %p215 = scmp.eq.s32.totalorder %s26, 0
      %p216 = por %p214, %p215
      %p217 = scmp.ne.s32.totalorder %s209, %s211
      %p218 = scmp.eq.s32.totalorder %s31, 3
      %p219 = por %p217, %p218
      %p220 = scmp.ne.s32.totalorder %s211, %s212
      %p221 = scmp.eq.s32.totalorder %s31, 0
      %p222 = por %p220, %p221
      %p223 = scmp.ne.s32.totalorder %s211, %s212
      %p224 = scmp.eq.s32.totalorder %s32, 3
      %p225 = por %p223, %p224
      %p227 = scmp.ne.s32.totalorder %s212, %s226
      %p228 = scmp.eq.s32.totalorder %s32, 0
      %p229 = por %p227, %p228
      %s231 = sadd.s32 %s230, 1
      %p234 = scmp.eq.s32.totalorder %s26, 3
      %p235 = scmp.ne.s32.totalorder %s230, %s232
      %p236 = scmp.eq.s32.totalorder %s26, 0
      %p237 = por %p235, %p236
      %p238 = scmp.ne.s32.totalorder %s230, %s232
      %p239 = scmp.eq.s32.totalorder %s31, 3
      %p240 = por %p238, %p239
      %p241 = scmp.ne.s32.totalorder %s232, %s233
      %p242 = scmp.eq.s32.totalorder %s31, 0
      %p243 = por %p241, %p242
      %p244 = scmp.ne.s32.totalorder %s232, %s233
      %p245 = scmp.eq.s32.totalorder %s32, 3
      %p246 = por %p244, %p245
      %p248 = scmp.ne.s32.totalorder %s233, %s247
      %p249 = scmp.eq.s32.totalorder %s32, 0
      %p250 = por %p248, %p249
      %s252 = sadd.s32 %s251, 1
      %p255 = scmp.eq.s32.totalorder %s26, 3
      %p256 = scmp.ne.s32.totalorder %s251, %s253
      %p257 = scmp.eq.s32.totalorder %s26, 0
      %p258 = por %p256, %p257
      %p259 = scmp.ne.s32.totalorder %s251, %s253
      %p260 = scmp.eq.s32.totalorder %s31, 3
      %p261 = por %p259, %p260
      %p262 = scmp.ne.s32.totalorder %s253, %s254
      %p263 = scmp.eq.s32.totalorder %s31, 0
      %p264 = por %p262, %p263
      %p265 = scmp.ne.s32.totalorder %s253, %s254
      %p266 = scmp.eq.s32.totalorder %s32, 3
      %p267 = por %p265, %p266
      %p269 = scmp.ne.s32.totalorder %s254, %s268
      %p270 = scmp.eq.s32.totalorder %s32, 0
      %p271 = por %p269, %p270
      %s272 = ssub.s32 %s33, %s45
      %s273 = ssub.s32 %s34, %s41
      %s274 = sor.u32 %s272, %s273
      %p275 = scmp.eq.s32.totalorder %s274, 0
      %s277 = sadd.s32 %s276, 1
      %s278 = scalar_select %p275, %s276, %s277
      %p281 = pneg %p275
      %p282 = scmp.eq.s32.totalorder %s26, 3
      %p283 = por %p281, %p282
      %p284 = scmp.ne.s32.totalorder %s276, %s279
      %p285 = scmp.eq.s32.totalorder %s26, 0
      %p286 = por %p284, %p285
      %p287 = scmp.ne.s32.totalorder %s276, %s279
      %p288 = scmp.eq.s32.totalorder %s31, 3
      %p289 = por %p287, %p288
      %p290 = scmp.ne.s32.totalorder %s279, %s280
      %p291 = scmp.eq.s32.totalorder %s31, 0
      %p292 = por %p290, %p291
      %p293 = scmp.ne.s32.totalorder %s279, %s280
      %p294 = scmp.eq.s32.totalorder %s32, 3
      %p295 = por %p293, %p294
      %p297 = scmp.ne.s32.totalorder %s280, %s296
      %p298 = scmp.eq.s32.totalorder %s32, 0
      %p299 = por %p297, %p298
      %p300 = scmp.le.s32.totalorder 1, %s26
      %p301 = scmp.lt.s32.totalorder %s26, 5
      %p302 = pnand %p300, %p301
      %p303 = pneg %p302
      // Predicated region
      $region9: #{tpu_custom_call.1} parent=5 // pred_check
        _
      $region10: #{tpu_custom_call.1} parent=5 // pred_check_branch
        %305 = sbr.rel (%p302) target = $region12
      $region11: #{tpu_custom_call.1} parent=5 // pred_region
        %s306 = ssub.s32 %s26, 1
        // Predicated region
        $region13: #{tpu_custom_call.1} parent=11 // pred_check
          %p307 = pneg %p159
        $region14: #{tpu_custom_call.1} parent=11 // pred_check_branch
          %309 = sbr.rel (%p307) target = $region16
        $region15: #{tpu_custom_call.1} parent=11 // pred_region
          %s311 = ssub.s32 2048, 2048
          %312 = vsyncadd [#allocation9], %s311
          %s313 = sshll.u32 [#allocation8], 4
          %s314 = int_to_ptr.vmem [resolvable:$true] %s313
          %319 = dma.hbm_to_vmem [thread:$0]  %s3, 2048, %s314, [#allocation9], 128, 128, 8
        $region16: #{tpu_custom_call.1} parent=11 // pred_fallthru
          _
        // Predicated region
        $region17: #{tpu_custom_call.1} parent=11 // pred_check
          %p320 = pneg %p180
        $region18: #{tpu_custom_call.1} parent=11 // pred_check_branch
          %322 = sbr.rel (%p320) target = $region20
        $region19: #{tpu_custom_call.1} parent=11 // pred_region
          _
        $region20: #{tpu_custom_call.1} parent=11 // pred_fallthru
          _
        // Predicated region
        $region21: #{tpu_custom_call.1} parent=11 // pred_check
          %p323 = pneg %p201
        $region22: #{tpu_custom_call.1} parent=11 // pred_check_branch
          %325 = sbr.rel (%p323) target = $region24
        $region23: #{tpu_custom_call.1} parent=11 // pred_region
          %s327 = ssub.s32 512, 512
          %328 = vsyncadd [#allocation9], %s327
          %s329 = sshll.u32 [#allocation10], 4
          %s330 = int_to_ptr.vmem [resolvable:$true] %s329
          %335 = dma.hbm_to_vmem [thread:$0]  %s5, 512, %s330, [#allocation9], 128, 128, 8
        $region24: #{tpu_custom_call.1} parent=11 // pred_fallthru
          _
        // Predicated region
        $region25: #{tpu_custom_call.1} parent=11 // pred_check
          %p336 = pneg %p222
        $region26: #{tpu_custom_call.1} parent=11 // pred_check_branch
          %338 = sbr.rel (%p336) target = $region28
        $region27: #{tpu_custom_call.1} parent=11 // pred_region
          _
        $region28: #{tpu_custom_call.1} parent=11 // pred_fallthru
          _
        // Predicated region
        $region29: #{tpu_custom_call.1} parent=11 // pred_check
          %p339 = pneg %p243
        $region30: #{tpu_custom_call.1} parent=11 // pred_check_branch
          %341 = sbr.rel (%p339) target = $region32
        $region31: #{tpu_custom_call.1} parent=11 // pred_region
          %s343 = ssub.s32 1024, 1024
          %344 = vsyncadd [#allocation12], %s343
          %s345 = sshll.u32 [#allocation11], 4
          %s346 = int_to_ptr.vmem [resolvable:$true] %s345
          %351 = dma.hbm_to_vmem [thread:$0]  %s7, 1024, %s346, [#allocation12], 64, 64, 4
        $region32: #{tpu_custom_call.1} parent=11 // pred_fallthru
          _
        // Predicated region
        $region33: #{tpu_custom_call.1} parent=11 // pred_check
          %p352 = pneg %p264
        $region34: #{tpu_custom_call.1} parent=11 // pred_check_branch
          %354 = sbr.rel (%p352) target = $region36
        $region35: #{tpu_custom_call.1} parent=11 // pred_region
          _
        $region36: #{tpu_custom_call.1} parent=11 // pred_fallthru
          _
      $region12: #{tpu_custom_call.1} parent=5 // pred_fallthru
        _
      %p355 = scmp.lt.s32.totalorder %s26, 4
      // Predicated region
      $region37: #{tpu_custom_call.1} parent=5 // pred_check
        %p356 = pneg %p355
      $region38: #{tpu_custom_call.1} parent=5 // pred_check_branch
        %358 = sbr.rel (%p356) target = $region40
      $region39: #{tpu_custom_call.1} parent=5 // pred_region
        // Predicated region
        $region41: #{tpu_custom_call.1} parent=39 // pred_check
          %p359 = pneg %p68
        $region42: #{tpu_custom_call.1} parent=39 // pred_check_branch
          %361 = sbr.rel (%p359) target = $region44
        $region43: #{tpu_custom_call.1} parent=39 // pred_region
          %s362 = sand.u32 %s58, 1
          %s363 = scalar_lea.sflag [#allocation3], %s362
          %s364 = sand.u32 %s58, 1
          %s365 = smul.addr %s364, 16
          %s366 = scalar_lea.vmem [#allocation2], %s365
          %s367 = smul.u32 %s34, 12
          %s368 = ssub.s32 %s367, 1
          %p369 = scmp.gt.s32.totalorder %s368, 0
          %s370 = scalar_select %p369, %s368, 0
          %s371 = smul.u32 2, %s370
          %s372 = ssub.s32 25, %s371
          %p373 = scmp.lt.s32.totalorder %s372, 2
          %s374 = scalar_select %p373, %s372, 2
          %s375 = smul.u32 128, %s374
          %s377 = ssub.s32 256, %s375
          %378 = vsyncadd %s363, %s377
          %p379 = scmp.ne.s32.totalorder 0, %s375
          %s380 = smul.addr %s33, 25
          %s381 = sadd.s32 %s371, %s380
          %s382 = smul.addr %s381, 128
          %s383 = scalar_lea.hbm %s0, %s382
          %s384 = smul.u32 8, %s374
          %s385 = sshll.u32 %s366, 4
          %s386 = int_to_ptr.vmem [resolvable:$true] %s385
          %s387 = sshll.u32 %s384, 4
          %391 = dma.hbm_to_vmem [thread:$0]  (%p379), %s383, %s387, %s386, %s363, 128, 128, 8
        $region44: #{tpu_custom_call.1} parent=39 // pred_fallthru
          _
        // Predicated region
        $region45: #{tpu_custom_call.1} parent=39 // pred_check
          %p392 = pneg %p96
        $region46: #{tpu_custom_call.1} parent=39 // pred_check_branch
          %394 = sbr.rel (%p392) target = $region48
        $region47: #{tpu_custom_call.1} parent=39 // pred_region
          %s395 = sand.u32 %s26, 1
          %s396 = scalar_lea.sflag [#allocation6], %s395
          %s397 = sand.u32 %s86, 1
          %s398 = smul.addr %s397, 192
          %s399 = scalar_lea.vmem [#allocation5], %s398
          %s400 = smul.u32 24, %s34
          %s401 = ssub.s32 25, %s400
          %p402 = scmp.lt.s32.totalorder %s401, 24
          %s403 = scalar_select %p402, %s401, 24
          %s404 = smul.u32 128, %s403
          %s406 = ssub.s32 3072, %s404
          %407 = vsyncadd %s396, %s406
          %p408 = scmp.ne.s32.totalorder 0, %s404
          %s409 = smul.addr %s33, 25
          %s410 = sadd.s32 %s400, %s409
          %s411 = smul.addr %s410, 128
          %s412 = scalar_lea.hbm %s1, %s411
          %s413 = smul.u32 8, %s403
          %s414 = sshll.u32 %s399, 4
          %s415 = int_to_ptr.vmem [resolvable:$true] %s414
          %s416 = sshll.u32 %s413, 4
          %420 = dma.hbm_to_vmem [thread:$0]  (%p408), %s412, %s416, %s415, %s396, 128, 128, 8
        $region48: #{tpu_custom_call.1} parent=39 // pred_fallthru
          _
        // Predicated region
        $region49: #{tpu_custom_call.1} parent=39 // pred_check
          %p421 = pneg %p132
        $region50: #{tpu_custom_call.1} parent=39 // pred_check_branch
          %423 = sbr.rel (%p421) target = $region52
        $region51: #{tpu_custom_call.1} parent=39 // pred_region
          %s424 = sand.u32 %s26, 1
          %s425 = scalar_lea.sflag [#allocation6], %s424
          %s426 = sand.u32 %s122, 1
          %s427 = smul.addr %s426, 16
          %s428 = scalar_lea.vmem [#allocation7], %s427
          %s429 = sadd.s32 %s34, 1
          %s430 = smul.u32 %s429, 12
          %p431 = scmp.lt.s32.totalorder %s430, 12
          %s432 = scalar_select %p431, %s430, 12
          %s433 = smul.u32 2, %s432
          %s434 = ssub.s32 25, %s433
          %p435 = scmp.lt.s32.totalorder %s434, 2
          %s436 = scalar_select %p435, %s434, 2
          %s437 = smul.u32 128, %s436
          %s439 = ssub.s32 256, %s437
          %440 = vsyncadd %s425, %s439
          %p441 = scmp.ne.s32.totalorder 0, %s437
          %s442 = smul.addr %s33, 25
          %s443 = sadd.s32 %s433, %s442
          %s444 = smul.addr %s443, 128
          %s445 = scalar_lea.hbm %s2, %s444
          %s446 = smul.u32 8, %s436
          %s447 = sshll.u32 %s428, 4
          %s448 = int_to_ptr.vmem [resolvable:$true] %s447
          %s449 = sshll.u32 %s446, 4
          %453 = dma.hbm_to_vmem [thread:$0]  (%p441), %s445, %s449, %s448, %s425, 128, 128, 8
        $region52: #{tpu_custom_call.1} parent=39 // pred_fallthru
          _
      $region40: #{tpu_custom_call.1} parent=5 // pred_fallthru
        _
      %p454 = scmp.le.s32.totalorder 1, %s26
      %p455 = scmp.lt.s32.totalorder %s26, 5
      %p456 = pnand %p454, %p455
      %p457 = pneg %p456
      // Predicated region
      $region53: #{tpu_custom_call.1} parent=5 // pred_check
        _
      $region54: #{tpu_custom_call.1} parent=5 // pred_check_branch
        %459 = sbr.rel (%p456) target = $region56
      $region55: #{tpu_custom_call.1} parent=5 // pred_region
        %s460 = ssub.s32 %s26, 1
        %s461 = sand.u32 %s61, 1
        %s462 = scalar_lea.sflag [#allocation3], %s461
        %s463 = sand.u32 %s61, 1
        %s464 = smul.addr %s463, 16
        %s465 = scalar_lea.vmem [#allocation2], %s464
        // Predicated region
        $region57: #{tpu_custom_call.1} parent=55 // pred_check
          %p466 = pneg %p74
        $region58: #{tpu_custom_call.1} parent=55 // pred_check_branch
          %468 = sbr.rel (%p466) target = $region60
        $region59: #{tpu_custom_call.1} parent=55 // pred_region
          %469 = dma.done %s462, 256
        $region60: #{tpu_custom_call.1} parent=55 // pred_fallthru
          _
        %s470 = sand.u32 %s31, 1
        %s471 = scalar_lea.sflag [#allocation6], %s470
        %s472 = sand.u32 %s89, 1
        %s473 = smul.addr %s472, 192
        %s474 = scalar_lea.vmem [#allocation5], %s473
        // Predicated region
        $region61: #{tpu_custom_call.1} parent=55 // pred_check
          %p475 = pneg %p102
        $region62: #{tpu_custom_call.1} parent=55 // pred_check_branch
          %477 = sbr.rel (%p475) target = $region64
        $region63: #{tpu_custom_call.1} parent=55 // pred_region
          %478 = dma.done %s471, 3072
        $region64: #{tpu_custom_call.1} parent=55 // pred_fallthru
          _
        %s479 = sand.u32 %s31, 1
        %s480 = scalar_lea.sflag [#allocation6], %s479
        %s481 = sand.u32 %s125, 1
        %s482 = smul.addr %s481, 16
        %s483 = scalar_lea.vmem [#allocation7], %s482
        // Predicated region
        $region65: #{tpu_custom_call.1} parent=55 // pred_check
          %p484 = pneg %p138
        $region66: #{tpu_custom_call.1} parent=55 // pred_check_branch
          %486 = sbr.rel (%p484) target = $region68
        $region67: #{tpu_custom_call.1} parent=55 // pred_region
          %487 = dma.done %s480, 256
        $region68: #{tpu_custom_call.1} parent=55 // pred_fallthru
          _
        // Predicated region
        $region69: #{tpu_custom_call.1} parent=55 // pred_check
          %p488 = pneg %p159
        $region70: #{tpu_custom_call.1} parent=55 // pred_check_branch
          %490 = sbr.rel (%p488) target = $region72
        $region71: #{tpu_custom_call.1} parent=55 // pred_region
          %491 = dma.done [#allocation9], 2048
        $region72: #{tpu_custom_call.1} parent=55 // pred_fallthru
          _
        // Predicated region
        $region73: #{tpu_custom_call.1} parent=55 // pred_check
          %p492 = pneg %p201
        $region74: #{tpu_custom_call.1} parent=55 // pred_check_branch
          %494 = sbr.rel (%p492) target = $region76
        $region75: #{tpu_custom_call.1} parent=55 // pred_region
          %495 = dma.done [#allocation9], 512
        $region76: #{tpu_custom_call.1} parent=55 // pred_fallthru
          _
        // Predicated region
        $region77: #{tpu_custom_call.1} parent=55 // pred_check
          %p496 = pneg %p243
        $region78: #{tpu_custom_call.1} parent=55 // pred_check_branch
          %498 = sbr.rel (%p496) target = $region80
        $region79: #{tpu_custom_call.1} parent=55 // pred_region
          %499 = dma.done [#allocation12], 1024
        $region80: #{tpu_custom_call.1} parent=55 // pred_fallthru
          _
        %s500 = sand.u32 %s61, 1
        %s501 = scalar_lea.sflag [#allocation3], %s500
        %s502 = sand.u32 %s61, 1
        %s503 = smul.addr %s502, 16
        %s504 = scalar_lea.vmem [#allocation2], %s503
        %p505 = pneg %p74
        %p506 = pneg %p71
        %s507 = sand.u32 %s31, 1
        %s508 = scalar_lea.sflag [#allocation6], %s507
        %s509 = sand.u32 %s89, 1
        %s510 = smul.addr %s509, 192
        %s511 = scalar_lea.vmem [#allocation5], %s510
        %p512 = pneg %p102
        %p513 = pneg %p99
        %s514 = sand.u32 %s31, 1
        %s515 = scalar_lea.sflag [#allocation6], %s514
        %s516 = sand.u32 %s125, 1
        %s517 = smul.addr %s516, 16
        %s518 = scalar_lea.vmem [#allocation7], %s517
        %p519 = pneg %p138
        %p520 = pneg %p135
        %p521 = pneg %p159
        %p522 = pneg %p156
        %p523 = pneg %p180
        %p524 = pneg %p177
        %p525 = pneg %p201
        %p526 = pneg %p198
        %p527 = pneg %p222
        %p528 = pneg %p219
        %p529 = pneg %p243
        %p530 = pneg %p240
        %p531 = pneg %p264
        %p532 = pneg %p261
        %p533 = pneg %p292
        %p534 = pneg %p289
        %s535 = sand.u32 %s279, 1
        %s536 = scalar_lea.sflag [#allocation4], %s535
        %s537 = sand.u32 %s279, 1
        %s538 = smul.addr %s537, 192
        %s539 = scalar_lea.vmem [#allocation13], %s538
        %s540 = smul.u32 %s36, 12
        %s541 = ssub.s32 %s540, 1
        %p542 = scmp.gt.s32.totalorder %s541, 0
        %s543 = scalar_select %p542, %s541, 0
        %s544 = smul.u32 2, %s543
        %s545 = ssub.s32 25, %s544
        %p546 = scmp.lt.s32.totalorder %s545, 2
        %s547 = scalar_select %p546, %s545, 2
        %s548 = smul.u32 128, %s547
        %s549 = smul.u32 24, %s36
        %s550 = ssub.s32 25, %s549
        %p551 = scmp.lt.s32.totalorder %s550, 24
        %s552 = scalar_select %p551, %s550, 24
        %s553 = smul.u32 128, %s552
        %s554 = sadd.s32 %s36, 1
        %s555 = smul.u32 %s554, 12
        %p556 = scmp.lt.s32.totalorder %s555, 12
        %s557 = scalar_select %p556, %s555, 12
        %s558 = smul.u32 2, %s557
        %s559 = ssub.s32 25, %s558
        %p560 = scmp.lt.s32.totalorder %s559, 2
        %s561 = scalar_select %p560, %s559, 2
        %s562 = smul.u32 128, %s561
        %s563 = smul.u32 24, %s36
        %s564 = ssub.s32 25, %s563
        %p565 = scmp.lt.s32.totalorder %s564, 24
        %s566 = scalar_select %p565, %s564, 24
        %s567 = smul.u32 128, %s566
        %v569 = vld [vmem:[%s465] sm:$0xff]
        %v570 = vld [vmem:[%s465 + $0x8] sm:$0xff]
        %v571 = vpack.c.bf16 %v570, %v569
        %v572 = vld [vmem:[%s474] sm:$0xff]
        %v573 = vld [vmem:[%s474 + $0x8] sm:$0xff]
        %v574 = vld [vmem:[%s474 + $0x10] sm:$0xff]
        %v575 = vld [vmem:[%s474 + $0x18] sm:$0xff]
        %v576 = vld [vmem:[%s474 + $0x20] sm:$0xff]
        %v577 = vld [vmem:[%s474 + $0x28] sm:$0xff]
        %v578 = vld [vmem:[%s474 + $0x30] sm:$0xff]
        %v579 = vld [vmem:[%s474 + $0x38] sm:$0xff]
        %v580 = vld [vmem:[%s474 + $0x40] sm:$0xff]
        %v581 = vld [vmem:[%s474 + $0x48] sm:$0xff]
        %v582 = vld [vmem:[%s474 + $0x50] sm:$0xff]
        %v583 = vld [vmem:[%s474 + $0x58] sm:$0xff]
        %v584 = vld [vmem:[%s474 + $0x60] sm:$0xff]
        %v585 = vld [vmem:[%s474 + $0x68] sm:$0xff]
        %v586 = vld [vmem:[%s474 + $0x70] sm:$0xff]
        %v587 = vld [vmem:[%s474 + $0x78] sm:$0xff]
        %v588 = vld [vmem:[%s474 + $0x80] sm:$0xff]
        %v589 = vld [vmem:[%s474 + $0x88] sm:$0xff]
        %v590 = vld [vmem:[%s474 + $0x90] sm:$0xff]
        %v591 = vld [vmem:[%s474 + $0x98] sm:$0xff]
        %v592 = vld [vmem:[%s474 + $0xa0] sm:$0xff]
        %v593 = vld [vmem:[%s474 + $0xa8] sm:$0xff]
        %v594 = vld [vmem:[%s474 + $0xb0] sm:$0xff]
        %v595 = vld [vmem:[%s474 + $0xb8] sm:$0xff]
        %v596 = vpack.c.bf16 %v573, %v572
        %v597 = vpack.c.bf16 %v575, %v574
        %v598 = vpack.c.bf16 %v577, %v576
        %v599 = vpack.c.bf16 %v579, %v578
        %v600 = vpack.c.bf16 %v581, %v580
        %v601 = vpack.c.bf16 %v583, %v582
        %v602 = vpack.c.bf16 %v585, %v584
        %v603 = vpack.c.bf16 %v587, %v586
        %v604 = vpack.c.bf16 %v589, %v588
        %v605 = vpack.c.bf16 %v591, %v590
        %v606 = vpack.c.bf16 %v593, %v592
        %v607 = vpack.c.bf16 %v595, %v594
        %v608 = vld [vmem:[%s483] sm:$0xff]
        %v609 = vld [vmem:[%s483 + $0x8] sm:$0xff]
        %v610 = vpack.c.bf16 %v609, %v608
        %v611 = vld [vmem:[#allocation8] sm:$0xff]
        %v612 = vld [vmem:[#allocation8 + $0x8] sm:$0xff]
        %v613 = vld [vmem:[#allocation8 + $0x10] sm:$0xff]
        %v614 = vld [vmem:[#allocation8 + $0x18] sm:$0xff]
        %v615 = vld [vmem:[#allocation8 + $0x20] sm:$0xff]
        %v616 = vld [vmem:[#allocation8 + $0x28] sm:$0xff]
        %v617 = vld [vmem:[#allocation8 + $0x30] sm:$0xff]
        %v618 = vld [vmem:[#allocation8 + $0x38] sm:$0xff]
        %v619 = vld [vmem:[#allocation8 + $0x40] sm:$0xff]
        %v620 = vld [vmem:[#allocation8 + $0x48] sm:$0xff]
        %v621 = vld [vmem:[#allocation8 + $0x50] sm:$0xff]
        %v622 = vld [vmem:[#allocation8 + $0x58] sm:$0xff]
        %v623 = vld [vmem:[#allocation8 + $0x60] sm:$0xff]
        %v624 = vld [vmem:[#allocation8 + $0x68] sm:$0xff]
        %v625 = vld [vmem:[#allocation8 + $0x70] sm:$0xff]
        %v626 = vld [vmem:[#allocation8 + $0x78] sm:$0xff]
        %v627 = vld [vmem:[%s4] sm:$0x3]
        %v629 = vlaneseq
        %v630 = vshrl.u32 %v629, 7
        %v631 = vsub.s32 0, %v630
        %v632 = vrot.slane %v627, %v631
        %v633 = vlaneseq
        %v634 = vshrl.u32 %v633, 7
        %v635 = vsub.s32 1, %v634
        %v636 = vrot.slane %v627, %v635
        %v655 = vunpack.c.l.b16 %v611
        %v656 = vunpack.c.h.b16 %v611
        %v657 = vunpack.c.l.b16 %v612
        %v658 = vunpack.c.h.b16 %v612
        %v659 = vunpack.c.l.b16 %v613
        %v660 = vunpack.c.h.b16 %v613
        %v661 = vunpack.c.l.b16 %v614
        %v662 = vunpack.c.h.b16 %v614
        %v663 = vunpack.c.l.b16 %v615
        %v664 = vunpack.c.h.b16 %v615
        %v665 = vunpack.c.l.b16 %v616
        %v666 = vunpack.c.h.b16 %v616
        %v667 = vunpack.c.l.b16 %v617
        %v668 = vunpack.c.h.b16 %v617
        %v669 = vunpack.c.l.b16 %v618
        %v670 = vunpack.c.h.b16 %v618
        %v671 = vunpack.c.l.b16 %v619
        %v672 = vunpack.c.h.b16 %v619
        %v673 = vunpack.c.l.b16 %v620
        %v674 = vunpack.c.h.b16 %v620
        %v675 = vunpack.c.l.b16 %v621
        %v676 = vunpack.c.h.b16 %v621
        %v677 = vunpack.c.l.b16 %v622
        %v678 = vunpack.c.h.b16 %v622
        %v679 = vunpack.c.l.b16 %v623
        %v680 = vunpack.c.h.b16 %v623
        %v681 = vunpack.c.l.b16 %v624
        %v682 = vunpack.c.h.b16 %v624
        %v683 = vunpack.c.l.b16 %v625
        %v684 = vunpack.c.h.b16 %v625
        %v685 = vunpack.c.l.b16 %v626
        %v686 = vunpack.c.h.b16 %v626
        %v687 = vpack.c.b16 %v657, %v655
        %v688 = vpack.c.b16 %v658, %v656
        %v689 = vpack.c.b16 %v661, %v659
        %v690 = vpack.c.b16 %v662, %v660
        %v691 = vpack.c.b16 %v665, %v663
        %v692 = vpack.c.b16 %v666, %v664
        %v693 = vpack.c.b16 %v669, %v667
        %v694 = vpack.c.b16 %v670, %v668
        %v695 = vpack.c.b16 %v673, %v671
        %v696 = vpack.c.b16 %v674, %v672
        %v697 = vpack.c.b16 %v677, %v675
        %v698 = vpack.c.b16 %v678, %v676
        %v699 = vpack.c.b16 %v681, %v679
        %v700 = vpack.c.b16 %v682, %v680
        %v701 = vpack.c.b16 %v685, %v683
        %v702 = vpack.c.b16 %v686, %v684
        %719 = vmatprep.subr.bf16.mxu0 %v688
        %720 = vmatpush1.bf16.msra.mxu0 %v687
        %721 = vmatprep.subr.bf16.mxu0 %v690
        %722 = vmatpush1.bf16.msra.mxu0 %v689
        %723 = vmatprep.subr.bf16.mxu0 %v692
        %724 = vmatpush1.bf16.msra.mxu0 %v691
        %725 = vmatprep.subr.bf16.mxu0 %v694
        %726 = vmatpush1.bf16.msra.mxu0 %v693
        %727 = vmatprep.subr.bf16.mxu0 %v696
        %728 = vmatpush1.bf16.msra.mxu0 %v695
        %729 = vmatprep.subr.bf16.mxu0 %v698
        %730 = vmatpush1.bf16.msra.mxu0 %v697
        %731 = vmatprep.subr.bf16.mxu0 %v700
        %732 = vmatpush1.bf16.msra.mxu0 %v699
        %733 = vmatprep.subr.bf16.mxu0 %v702
        %734 = vmatpush1.bf16.msra.mxu0 %v701
        %735 = vmatprep.subr.bf16.mxu0 0
        %736 = vmatpush1.bf16.msra.mxu0 0
        %737 = vmatprep.subr.bf16.mxu0 0
        %738 = vmatpush1.bf16.msra.mxu0 0
        %739 = vmatprep.subr.bf16.mxu0 0
        %740 = vmatpush1.bf16.msra.mxu0 0
        %741 = vmatprep.subr.bf16.mxu0 0
        %742 = vmatpush1.bf16.msra.mxu0 0
        %743 = vmatprep.subr.bf16.mxu0 0
        %744 = vmatpush1.bf16.msra.mxu0 0
        %745 = vmatprep.subr.bf16.mxu0 0
        %746 = vmatpush1.bf16.msra.mxu0 0
        %747 = vmatprep.subr.bf16.mxu0 0
        %748 = vmatpush1.bf16.msra.mxu0 0
        %749 = vmatprep.subr.bf16.mxu0 0
        %750 = vmatpush1.bf16.msra.mxu0 0
        %751 = vmatprep.mubr.bf16.mxu0 0
        %752 = vmatmul.mubr.bf16.gmra.mrb[0].mxu0 %v571
        %v753 = vpop.f32.mrb[0].mxu0
        %v754 = vadd.f32 %v632, %v753
        %v755 = vpop.f32.mrb[0].mxu0
        %v756 = vadd.f32 %v636, %v755
        %v757 = vpop.f32.mrb[0].mxu0
        %v758 = vadd.f32 %v632, %v757
        %v759 = vpop.f32.mrb[0].mxu0
        %v760 = vadd.f32 %v636, %v759
        %761 = vmatprep.mubr.bf16.mxu0 0
        %762 = vmatmul.mubr.bf16.gmra.mrb[0].mxu0 %v596
        %v763 = vpop.f32.mrb[0].mxu0
        %v764 = vadd.f32 %v632, %v763
        %v765 = vpop.f32.mrb[0].mxu0
        %v766 = vadd.f32 %v636, %v765
        %v767 = vpop.f32.mrb[0].mxu0
        %v768 = vadd.f32 %v632, %v767
        %v769 = vpop.f32.mrb[0].mxu0
        %v770 = vadd.f32 %v636, %v769
        %771 = vmatprep.mubr.bf16.mxu0 0
        %772 = vmatmul.mubr.bf16.gmra.mrb[0].mxu0 %v597
        %v773 = vpop.f32.mrb[0].mxu0
        %v774 = vadd.f32 %v632, %v773
        %v775 = vpop.f32.mrb[0].mxu0
        %v776 = vadd.f32 %v636, %v775
        %v777 = vpop.f32.mrb[0].mxu0
        %v778 = vadd.f32 %v632, %v777
        %v779 = vpop.f32.mrb[0].mxu0
        %v780 = vadd.f32 %v636, %v779
        %781 = vmatprep.mubr.bf16.mxu0 0
        %782 = vmatmul.mubr.bf16.gmra.mrb[0].mxu0 %v598
        %v783 = vpop.f32.mrb[0].mxu0
        %v784 = vadd.f32 %v632, %v783
        %v785 = vpop.f32.mrb[0].mxu0
        %v786 = vadd.f32 %v636, %v785
        %v787 = vpop.f32.mrb[0].mxu0
        %v788 = vadd.f32 %v632, %v787
        %v789 = vpop.f32.mrb[0].mxu0
        %v790 = vadd.f32 %v636, %v789
        %791 = vmatprep.mubr.bf16.mxu0 0
        %792 = vmatmul.mubr.bf16.gmra.mrb[0].mxu0 %v599
        %v793 = vpop.f32.mrb[0].mxu0
        %v794 = vadd.f32 %v632, %v793
        %v795 = vpop.f32.mrb[0].mxu0
        %v796 = vadd.f32 %v636, %v795
        %v797 = vpop.f32.mrb[0].mxu0
        %v798 = vadd.f32 %v632, %v797
        %v799 = vpop.f32.mrb[0].mxu0
        %v800 = vadd.f32 %v636, %v799
        %801 = vmatprep.mubr.bf16.mxu0 0
        %802 = vmatmul.mubr.bf16.gmra.mrb[0].mxu0 %v600
        %v803 = vpop.f32.mrb[0].mxu0
        %v804 = vadd.f32 %v632, %v803
        %v805 = vpop.f32.mrb[0].mxu0
        %v806 = vadd.f32 %v636, %v805
        %v807 = vpop.f32.mrb[0].mxu0
        %v808 = vadd.f32 %v632, %v807
        %v809 = vpop.f32.mrb[0].mxu0
        %v810 = vadd.f32 %v636, %v809
        %811 = vmatprep.mubr.bf16.mxu0 0
        %812 = vmatmul.mubr.bf16.gmra.mrb[0].mxu0 %v601
        %v813 = vpop.f32.mrb[0].mxu0
        %v814 = vadd.f32 %v632, %v813
        %v815 = vpop.f32.mrb[0].mxu0
        %v816 = vadd.f32 %v636, %v815
        %v817 = vpop.f32.mrb[0].mxu0
        %v818 = vadd.f32 %v632, %v817
        %v819 = vpop.f32.mrb[0].mxu0
        %v820 = vadd.f32 %v636, %v819
        %821 = vmatprep.mubr.bf16.mxu0 0
        %822 = vmatmul.mubr.bf16.gmra.mrb[0].mxu0 %v602
        %v823 = vpop.f32.mrb[0].mxu0
        %v824 = vadd.f32 %v632, %v823
        %v825 = vpop.f32.mrb[0].mxu0
        %v826 = vadd.f32 %v636, %v825
        %v827 = vpop.f32.mrb[0].mxu0
        %v828 = vadd.f32 %v632, %v827
        %v829 = vpop.f32.mrb[0].mxu0
        %v830 = vadd.f32 %v636, %v829
        %831 = vmatprep.mubr.bf16.mxu0 0
        %832 = vmatmul.mubr.bf16.gmra.mrb[0].mxu0 %v603
        %v833 = vpop.f32.mrb[0].mxu0
        %v834 = vadd.f32 %v632, %v833
        %v835 = vpop.f32.mrb[0].mxu0
        %v836 = vadd.f32 %v636, %v835
        %v837 = vpop.f32.mrb[0].mxu0
        %v838 = vadd.f32 %v632, %v837
        %v839 = vpop.f32.mrb[0].mxu0
        %v840 = vadd.f32 %v636, %v839
        %841 = vmatprep.mubr.bf16.mxu0 0
        %842 = vmatmul.mubr.bf16.gmra.mrb[0].mxu0 %v604
        %v843 = vpop.f32.mrb[0].mxu0
        %v844 = vadd.f32 %v632, %v843
        %v845 = vpop.f32.mrb[0].mxu0
        %v846 = vadd.f32 %v636, %v845
        %v847 = vpop.f32.mrb[0].mxu0
        %v848 = vadd.f32 %v632, %v847
        %v849 = vpop.f32.mrb[0].mxu0
        %v850 = vadd.f32 %v636, %v849
        %851 = vmatprep.mubr.bf16.mxu0 0
        %852 = vmatmul.mubr.bf16.gmra.mrb[0].mxu0 %v605
        %v853 = vpop.f32.mrb[0].mxu0
        %v854 = vadd.f32 %v632, %v853
        %v855 = vpop.f32.mrb[0].mxu0
        %v856 = vadd.f32 %v636, %v855
        %v857 = vpop.f32.mrb[0].mxu0
        %v858 = vadd.f32 %v632, %v857
        %v859 = vpop.f32.mrb[0].mxu0
        %v860 = vadd.f32 %v636, %v859
        %861 = vmatprep.mubr.bf16.mxu0 0
        %862 = vmatmul.mubr.bf16.gmra.mrb[0].mxu0 %v606
        %v863 = vpop.f32.mrb[0].mxu0
        %v864 = vadd.f32 %v632, %v863
        %v865 = vpop.f32.mrb[0].mxu0
        %v866 = vadd.f32 %v636, %v865
        %v867 = vpop.f32.mrb[0].mxu0
        %v868 = vadd.f32 %v632, %v867
        %v869 = vpop.f32.mrb[0].mxu0
        %v870 = vadd.f32 %v636, %v869
        %871 = vmatprep.mubr.bf16.mxu0 0
        %872 = vmatmul.mubr.bf16.gmra.mrb[0].mxu0 %v607
        %v873 = vpop.f32.mrb[0].mxu0
        %v874 = vadd.f32 %v632, %v873
        %v875 = vpop.f32.mrb[0].mxu0
        %v876 = vadd.f32 %v636, %v875
        %v877 = vpop.f32.mrb[0].mxu0
        %v878 = vadd.f32 %v632, %v877
        %v879 = vpop.f32.mrb[0].mxu0
        %v880 = vadd.f32 %v636, %v879
        %881 = vmatprep.mubr.bf16.mxu0 0
        %882 = vmatmul.mubr.bf16.gmra.mrb[0].mxu0 %v610
        %v883 = vpop.f32.mrb[0].mxu0
        %v884 = vadd.f32 %v632, %v883
        %v885 = vpop.f32.mrb[0].mxu0
        %v886 = vadd.f32 %v636, %v885
        %v887 = vpop.f32.mrb[0].mxu0
        %v888 = vadd.f32 %v632, %v887
        %v889 = vpop.f32.mrb[0].mxu0
        %v890 = vadd.f32 %v636, %v889
        %891 = vdwg.mxu0
        %v892 = vxor.u32 %v756, 2147483648
        %v893 = vxor.u32 %v760, 2147483648
        %v894 = vxor.u32 %v766, 2147483648
        %v895 = vxor.u32 %v770, 2147483648
        %v896 = vxor.u32 %v776, 2147483648
        %v897 = vxor.u32 %v780, 2147483648
        %v898 = vxor.u32 %v786, 2147483648
        %v899 = vxor.u32 %v790, 2147483648
        %v900 = vxor.u32 %v796, 2147483648
        %v901 = vxor.u32 %v800, 2147483648
        %v902 = vxor.u32 %v806, 2147483648
        %v903 = vxor.u32 %v810, 2147483648
        %v904 = vxor.u32 %v816, 2147483648
        %v905 = vxor.u32 %v820, 2147483648
        %v906 = vxor.u32 %v826, 2147483648
        %v907 = vxor.u32 %v830, 2147483648
        %v908 = vxor.u32 %v836, 2147483648
        %v909 = vxor.u32 %v840, 2147483648
        %v910 = vxor.u32 %v846, 2147483648
        %v911 = vxor.u32 %v850, 2147483648
        %v912 = vxor.u32 %v856, 2147483648
        %v913 = vxor.u32 %v860, 2147483648
        %v914 = vxor.u32 %v866, 2147483648
        %v915 = vxor.u32 %v870, 2147483648
        %v916 = vxor.u32 %v876, 2147483648
        %v917 = vxor.u32 %v880, 2147483648
        %v918 = vxor.u32 %v886, 2147483648
        %v919 = vxor.u32 %v890, 2147483648
        %v920 = vmul.f32 %v892, 1.442695
        %v921 = vpow.pop %v920
        %v922 = vmul.f32 %v893, 1.442695
        %v923 = vpow.pop %v922
        %v924 = vmul.f32 %v894, 1.442695
        %v925 = vpow.pop %v924
        %v926 = vmul.f32 %v895, 1.442695
        %v927 = vpow.pop %v926
        %v928 = vmul.f32 %v896, 1.442695
        %v929 = vpow.pop %v928
        %v930 = vmul.f32 %v897, 1.442695
        %v931 = vpow.pop %v930
        %v932 = vmul.f32 %v898, 1.442695
        %v933 = vpow.pop %v932
        %v934 = vmul.f32 %v899, 1.442695
        %v935 = vpow.pop %v934
        %v936 = vmul.f32 %v900, 1.442695
        %v937 = vpow.pop %v936
        %v938 = vmul.f32 %v901, 1.442695
        %v939 = vpow.pop %v938
        %v940 = vmul.f32 %v902, 1.442695
        %v941 = vpow.pop %v940
        %v942 = vmul.f32 %v903, 1.442695
        %v943 = vpow.pop %v942
        %v944 = vmul.f32 %v904, 1.442695
        %v945 = vpow.pop %v944
        %v946 = vmul.f32 %v905, 1.442695
        %v947 = vpow.pop %v946
        %v948 = vmul.f32 %v906, 1.442695
        %v949 = vpow.pop %v948
        %v950 = vmul.f32 %v907, 1.442695
        %v951 = vpow.pop %v950
        %v952 = vmul.f32 %v908, 1.442695
        %v953 = vpow.pop %v952
        %v954 = vmul.f32 %v909, 1.442695
        %v955 = vpow.pop %v954
        %v956 = vmul.f32 %v910, 1.442695
        %v957 = vpow.pop %v956
        %v958 = vmul.f32 %v911, 1.442695
        %v959 = vpow.pop %v958
        %v960 = vmul.f32 %v912, 1.442695
        %v961 = vpow.pop %v960
        %v962 = vmul.f32 %v913, 1.442695
        %v963 = vpow.pop %v962
        %v964 = vmul.f32 %v914, 1.442695
        %v965 = vpow.pop %v964
        %v966 = vmul.f32 %v915, 1.442695
        %v967 = vpow.pop %v966
        %v968 = vmul.f32 %v916, 1.442695
        %v969 = vpow.pop %v968
        %v970 = vmul.f32 %v917, 1.442695
        %v971 = vpow.pop %v970
        %v972 = vmul.f32 %v918, 1.442695
        %v973 = vpow.pop %v972
        %v974 = vmul.f32 %v919, 1.442695
        %v975 = vpow.pop %v974
        %v976 = vadd.f32 %v921, 1.0
        %v977 = vadd.f32 %v923, 1.0
        %v978 = vadd.f32 %v925, 1.0
        %v979 = vadd.f32 %v927, 1.0
        %v980 = vadd.f32 %v929, 1.0
        %v981 = vadd.f32 %v931, 1.0
        %v982 = vadd.f32 %v933, 1.0
        %v983 = vadd.f32 %v935, 1.0
        %v984 = vadd.f32 %v937, 1.0
        %v985 = vadd.f32 %v939, 1.0
        %v986 = vadd.f32 %v941, 1.0
        %v987 = vadd.f32 %v943, 1.0
        %v988 = vadd.f32 %v945, 1.0
        %v989 = vadd.f32 %v947, 1.0
        %v990 = vadd.f32 %v949, 1.0
        %v991 = vadd.f32 %v951, 1.0
        %v992 = vadd.f32 %v953, 1.0
        %v993 = vadd.f32 %v955, 1.0
        %v994 = vadd.f32 %v957, 1.0
        %v995 = vadd.f32 %v959, 1.0
        %v996 = vadd.f32 %v961, 1.0
        %v997 = vadd.f32 %v963, 1.0
        %v998 = vadd.f32 %v965, 1.0
        %v999 = vadd.f32 %v967, 1.0
        %v1000 = vadd.f32 %v969, 1.0
        %v1001 = vadd.f32 %v971, 1.0
        %v1002 = vadd.f32 %v973, 1.0
        %v1003 = vadd.f32 %v975, 1.0
        %v1004 = vrcp.pop %v976
        %v1005 = vmul.f32 1.0, %v1004
        %v1006 = vrcp.pop %v977
        %v1007 = vmul.f32 1.0, %v1006
        %v1008 = vrcp.pop %v978
        %v1009 = vmul.f32 1.0, %v1008
        %v1010 = vrcp.pop %v979
        %v1011 = vmul.f32 1.0, %v1010
        %v1012 = vrcp.pop %v980
        %v1013 = vmul.f32 1.0, %v1012
        %v1014 = vrcp.pop %v981
        %v1015 = vmul.f32 1.0, %v1014
        %v1016 = vrcp.pop %v982
        %v1017 = vmul.f32 1.0, %v1016
        %v1018 = vrcp.pop %v983
        %v1019 = vmul.f32 1.0, %v1018
        %v1020 = vrcp.pop %v984
        %v1021 = vmul.f32 1.0, %v1020
        %v1022 = vrcp.pop %v985
        %v1023 = vmul.f32 1.0, %v1022
        %v1024 = vrcp.pop %v986
        %v1025 = vmul.f32 1.0, %v1024
        %v1026 = vrcp.pop %v987
        %v1027 = vmul.f32 1.0, %v1026
        %v1028 = vrcp.pop %v988
        %v1029 = vmul.f32 1.0, %v1028
        %v1030 = vrcp.pop %v989
        %v1031 = vmul.f32 1.0, %v1030
        %v1032 = vrcp.pop %v990
        %v1033 = vmul.f32 1.0, %v1032
        %v1034 = vrcp.pop %v991
        %v1035 = vmul.f32 1.0, %v1034
        %v1036 = vrcp.pop %v992
        %v1037 = vmul.f32 1.0, %v1036
        %v1038 = vrcp.pop %v993
        %v1039 = vmul.f32 1.0, %v1038
        %v1040 = vrcp.pop %v994
        %v1041 = vmul.f32 1.0, %v1040
        %v1042 = vrcp.pop %v995
        %v1043 = vmul.f32 1.0, %v1042
        %v1044 = vrcp.pop %v996
        %v1045 = vmul.f32 1.0, %v1044
        %v1046 = vrcp.pop %v997
        %v1047 = vmul.f32 1.0, %v1046
        %v1048 = vrcp.pop %v998
        %v1049 = vmul.f32 1.0, %v1048
        %v1050 = vrcp.pop %v999
        %v1051 = vmul.f32 1.0, %v1050
        %v1052 = vrcp.pop %v1000
        %v1053 = vmul.f32 1.0, %v1052
        %v1054 = vrcp.pop %v1001
        %v1055 = vmul.f32 1.0, %v1054
        %v1056 = vrcp.pop %v1002
        %v1057 = vmul.f32 1.0, %v1056
        %v1058 = vrcp.pop %v1003
        %v1059 = vmul.f32 1.0, %v1058
        %v1060 = vmul.f32 %v754, %v1005
        %v1061 = vmul.f32 %v758, %v1007
        %v1062 = vmul.f32 %v764, %v1009
        %v1063 = vmul.f32 %v768, %v1011
        %v1064 = vmul.f32 %v774, %v1013
        %v1065 = vmul.f32 %v778, %v1015
        %v1066 = vmul.f32 %v784, %v1017
        %v1067 = vmul.f32 %v788, %v1019
        %v1068 = vmul.f32 %v794, %v1021
        %v1069 = vmul.f32 %v798, %v1023
        %v1070 = vmul.f32 %v804, %v1025
        %v1071 = vmul.f32 %v808, %v1027
        %v1072 = vmul.f32 %v814, %v1029
        %v1073 = vmul.f32 %v818, %v1031
        %v1074 = vmul.f32 %v824, %v1033
        %v1075 = vmul.f32 %v828, %v1035
        %v1076 = vmul.f32 %v834, %v1037
        %v1077 = vmul.f32 %v838, %v1039
        %v1078 = vmul.f32 %v844, %v1041
        %v1079 = vmul.f32 %v848, %v1043
        %v1080 = vmul.f32 %v854, %v1045
        %v1081 = vmul.f32 %v858, %v1047
        %v1082 = vmul.f32 %v864, %v1049
        %v1083 = vmul.f32 %v868, %v1051
        %v1084 = vmul.f32 %v874, %v1053
        %v1085 = vmul.f32 %v878, %v1055
        %v1086 = vmul.f32 %v884, %v1057
        %v1087 = vmul.f32 %v888, %v1059
        %s1088 = smul.u32 %s36, 192
        %s1089 = ssub.s32 %s1088, 16
        %v1090 = vlaneseq
        %v1091 = vshrl.u32 %v1090, 7
        %v1092 = vadd.s32 %v1091, 8
        %v1093 = vadd.s32 %v1091, 16
        %v1094 = vadd.s32 %v1091, 24
        %v1095 = vadd.s32 %v1091, 32
        %v1096 = vadd.s32 %v1091, 40
        %v1097 = vadd.s32 %v1091, 48
        %v1098 = vadd.s32 %v1091, 56
        %v1099 = vadd.s32 %v1091, 64
        %v1100 = vadd.s32 %v1091, 72
        %v1101 = vadd.s32 %v1091, 80
        %v1102 = vadd.s32 %v1091, 88
        %v1103 = vadd.s32 %v1091, 96
        %v1104 = vadd.s32 %v1091, 104
        %v1105 = vadd.s32 %v1091, 112
        %v1106 = vadd.s32 %v1091, 120
        %v1107 = vadd.s32 %v1091, 128
        %v1108 = vadd.s32 %v1091, 136
        %v1109 = vadd.s32 %v1091, 144
        %v1110 = vadd.s32 %v1091, 152
        %v1111 = vadd.s32 %v1091, 160
        %v1112 = vadd.s32 %v1091, 168
        %v1113 = vadd.s32 %v1091, 176
        %v1114 = vadd.s32 %v1091, 184
        %v1115 = vadd.s32 %v1091, 192
        %v1116 = vadd.s32 %v1091, 200
        %v1117 = vadd.s32 %v1091, 208
        %v1118 = vadd.s32 %v1091, 216
        %v1119 = vstv %s1089
        %v1120 = vadd.s32 %v1119, %v1091
        %v1121 = vadd.s32 %v1119, %v1092
        %v1122 = vadd.s32 %v1119, %v1093
        %v1123 = vadd.s32 %v1119, %v1094
        %v1124 = vadd.s32 %v1119, %v1095
        %v1125 = vadd.s32 %v1119, %v1096
        %v1126 = vadd.s32 %v1119, %v1097
        %v1127 = vadd.s32 %v1119, %v1098
        %v1128 = vadd.s32 %v1119, %v1099
        %v1129 = vadd.s32 %v1119, %v1100
        %v1130 = vadd.s32 %v1119, %v1101
        %v1131 = vadd.s32 %v1119, %v1102
        %v1132 = vadd.s32 %v1119, %v1103
        %v1133 = vadd.s32 %v1119, %v1104
        %v1134 = vadd.s32 %v1119, %v1105
        %v1135 = vadd.s32 %v1119, %v1106
        %v1136 = vadd.s32 %v1119, %v1107
        %v1137 = vadd.s32 %v1119, %v1108
        %v1138 = vadd.s32 %v1119, %v1109
        %v1139 = vadd.s32 %v1119, %v1110
        %v1140 = vadd.s32 %v1119, %v1111
        %v1141 = vadd.s32 %v1119, %v1112
        %v1142 = vadd.s32 %v1119, %v1113
        %v1143 = vadd.s32 %v1119, %v1114
        %v1144 = vadd.s32 %v1119, %v1115
        %v1145 = vadd.s32 %v1119, %v1116
        %v1146 = vadd.s32 %v1119, %v1117
        %v1147 = vadd.s32 %v1119, %v1118
        %vm1148 = vcmp.ge.s32.totalorder %v1120, 0
        %vm1149 = vcmp.ge.s32.totalorder %v1121, 0
        %vm1150 = vcmp.ge.s32.totalorder %v1122, 0
        %vm1151 = vcmp.ge.s32.totalorder %v1123, 0
        %vm1152 = vcmp.ge.s32.totalorder %v1124, 0
        %vm1153 = vcmp.ge.s32.totalorder %v1125, 0
        %vm1154 = vcmp.ge.s32.totalorder %v1126, 0
        %vm1155 = vcmp.ge.s32.totalorder %v1127, 0
        %vm1156 = vcmp.ge.s32.totalorder %v1128, 0
        %vm1157 = vcmp.ge.s32.totalorder %v1129, 0
        %vm1158 = vcmp.ge.s32.totalorder %v1130, 0
        %vm1159 = vcmp.ge.s32.totalorder %v1131, 0
        %vm1160 = vcmp.ge.s32.totalorder %v1132, 0
        %vm1161 = vcmp.ge.s32.totalorder %v1133, 0
        %vm1162 = vcmp.ge.s32.totalorder %v1134, 0
        %vm1163 = vcmp.ge.s32.totalorder %v1135, 0
        %vm1164 = vcmp.ge.s32.totalorder %v1136, 0
        %vm1165 = vcmp.ge.s32.totalorder %v1137, 0
        %vm1166 = vcmp.ge.s32.totalorder %v1138, 0
        %vm1167 = vcmp.ge.s32.totalorder %v1139, 0
        %vm1168 = vcmp.ge.s32.totalorder %v1140, 0
        %vm1169 = vcmp.ge.s32.totalorder %v1141, 0
        %vm1170 = vcmp.ge.s32.totalorder %v1142, 0
        %vm1171 = vcmp.ge.s32.totalorder %v1143, 0
        %vm1172 = vcmp.ge.s32.totalorder %v1144, 0
        %vm1173 = vcmp.ge.s32.totalorder %v1145, 0
        %vm1174 = vcmp.ge.s32.totalorder %v1146, 0
        %vm1175 = vcmp.ge.s32.totalorder %v1147, 0
        %vm1176 = vcmp.lt.s32.totalorder %v1120, 200
        %vm1177 = vcmp.lt.s32.totalorder %v1121, 200
        %vm1178 = vcmp.lt.s32.totalorder %v1122, 200
        %vm1179 = vcmp.lt.s32.totalorder %v1123, 200
        %vm1180 = vcmp.lt.s32.totalorder %v1124, 200
        %vm1181 = vcmp.lt.s32.totalorder %v1125, 200
        %vm1182 = vcmp.lt.s32.totalorder %v1126, 200
        %vm1183 = vcmp.lt.s32.totalorder %v1127, 200
        %vm1184 = vcmp.lt.s32.totalorder %v1128, 200
        %vm1185 = vcmp.lt.s32.totalorder %v1129, 200
        %vm1186 = vcmp.lt.s32.totalorder %v1130, 200
        %vm1187 = vcmp.lt.s32.totalorder %v1131, 200
        %vm1188 = vcmp.lt.s32.totalorder %v1132, 200
        %vm1189 = vcmp.lt.s32.totalorder %v1133, 200
        %vm1190 = vcmp.lt.s32.totalorder %v1134, 200
        %vm1191 = vcmp.lt.s32.totalorder %v1135, 200
        %vm1192 = vcmp.lt.s32.totalorder %v1136, 200
        %vm1193 = vcmp.lt.s32.totalorder %v1137, 200
        %vm1194 = vcmp.lt.s32.totalorder %v1138, 200
        %vm1195 = vcmp.lt.s32.totalorder %v1139, 200
        %vm1196 = vcmp.lt.s32.totalorder %v1140, 200
        %vm1197 = vcmp.lt.s32.totalorder %v1141, 200
        %vm1198 = vcmp.lt.s32.totalorder %v1142, 200
        %vm1199 = vcmp.lt.s32.totalorder %v1143, 200
        %vm1200 = vcmp.lt.s32.totalorder %v1144, 200
        %vm1201 = vcmp.lt.s32.totalorder %v1145, 200
        %vm1202 = vcmp.lt.s32.totalorder %v1146, 200
        %vm1203 = vcmp.lt.s32.totalorder %v1147, 200
        %vm1204 = vmand %vm1148, %vm1176
        %vm1205 = vmand %vm1149, %vm1177
        %vm1206 = vmand %vm1150, %vm1178
        %vm1207 = vmand %vm1151, %vm1179
        %vm1208 = vmand %vm1152, %vm1180
        %vm1209 = vmand %vm1153, %vm1181
        %vm1210 = vmand %vm1154, %vm1182
        %vm1211 = vmand %vm1155, %vm1183
        %vm1212 = vmand %vm1156, %vm1184
        %vm1213 = vmand %vm1157, %vm1185
        %vm1214 = vmand %vm1158, %vm1186
        %vm1215 = vmand %vm1159, %vm1187
        %vm1216 = vmand %vm1160, %vm1188
        %vm1217 = vmand %vm1161, %vm1189
        %vm1218 = vmand %vm1162, %vm1190
        %vm1219 = vmand %vm1163, %vm1191
        %vm1220 = vmand %vm1164, %vm1192
        %vm1221 = vmand %vm1165, %vm1193
        %vm1222 = vmand %vm1166, %vm1194
        %vm1223 = vmand %vm1167, %vm1195
        %vm1224 = vmand %vm1168, %vm1196
        %vm1225 = vmand %vm1169, %vm1197
        %vm1226 = vmand %vm1170, %vm1198
        %vm1227 = vmand %vm1171, %vm1199
        %vm1228 = vmand %vm1172, %vm1200
        %vm1229 = vmand %vm1173, %vm1201
        %vm1230 = vmand %vm1174, %vm1202
        %vm1231 = vmand %vm1175, %vm1203
        %v1232 = vsel %vm1204, 1, 0
        %v1233 = vsel %vm1205, 1, 0
        %v1234 = vsel %vm1206, 1, 0
        %v1235 = vsel %vm1207, 1, 0
        %v1236 = vsel %vm1208, 1, 0
        %v1237 = vsel %vm1209, 1, 0
        %v1238 = vsel %vm1210, 1, 0
        %v1239 = vsel %vm1211, 1, 0
        %v1240 = vsel %vm1212, 1, 0
        %v1241 = vsel %vm1213, 1, 0
        %v1242 = vsel %vm1214, 1, 0
        %v1243 = vsel %vm1215, 1, 0
        %v1244 = vsel %vm1216, 1, 0
        %v1245 = vsel %vm1217, 1, 0
        %v1246 = vsel %vm1218, 1, 0
        %v1247 = vsel %vm1219, 1, 0
        %v1248 = vsel %vm1220, 1, 0
        %v1249 = vsel %vm1221, 1, 0
        %v1250 = vsel %vm1222, 1, 0
        %v1251 = vsel %vm1223, 1, 0
        %v1252 = vsel %vm1224, 1, 0
        %v1253 = vsel %vm1225, 1, 0
        %v1254 = vsel %vm1226, 1, 0
        %v1255 = vsel %vm1227, 1, 0
        %v1256 = vsel %vm1228, 1, 0
        %v1257 = vsel %vm1229, 1, 0
        %v1258 = vsel %vm1230, 1, 0
        %v1259 = vsel %vm1231, 1, 0
        %vm1260 = vcmp.eq.s32.totalorder %v1232, 1
        %vm1261 = vcmp.eq.s32.totalorder %v1233, 1
        %vm1262 = vcmp.eq.s32.totalorder %v1234, 1
        %vm1263 = vcmp.eq.s32.totalorder %v1235, 1
        %vm1264 = vcmp.eq.s32.totalorder %v1236, 1
        %vm1265 = vcmp.eq.s32.totalorder %v1237, 1
        %vm1266 = vcmp.eq.s32.totalorder %v1238, 1
        %vm1267 = vcmp.eq.s32.totalorder %v1239, 1
        %vm1268 = vcmp.eq.s32.totalorder %v1240, 1
        %vm1269 = vcmp.eq.s32.totalorder %v1241, 1
        %vm1270 = vcmp.eq.s32.totalorder %v1242, 1
        %vm1271 = vcmp.eq.s32.totalorder %v1243, 1
        %vm1272 = vcmp.eq.s32.totalorder %v1244, 1
        %vm1273 = vcmp.eq.s32.totalorder %v1245, 1
        %vm1274 = vcmp.eq.s32.totalorder %v1246, 1
        %vm1275 = vcmp.eq.s32.totalorder %v1247, 1
        %vm1276 = vcmp.eq.s32.totalorder %v1248, 1
        %vm1277 = vcmp.eq.s32.totalorder %v1249, 1
        %vm1278 = vcmp.eq.s32.totalorder %v1250, 1
        %vm1279 = vcmp.eq.s32.totalorder %v1251, 1
        %vm1280 = vcmp.eq.s32.totalorder %v1252, 1
        %vm1281 = vcmp.eq.s32.totalorder %v1253, 1
        %vm1282 = vcmp.eq.s32.totalorder %v1254, 1
        %vm1283 = vcmp.eq.s32.totalorder %v1255, 1
        %vm1284 = vcmp.eq.s32.totalorder %v1256, 1
        %vm1285 = vcmp.eq.s32.totalorder %v1257, 1
        %vm1286 = vcmp.eq.s32.totalorder %v1258, 1
        %vm1287 = vcmp.eq.s32.totalorder %v1259, 1
        %v1288 = vsel %vm1260, %v1060, 0.0
        %v1289 = vsel %vm1261, %v1061, 0.0
        %v1290 = vsel %vm1262, %v1062, 0.0
        %v1291 = vsel %vm1263, %v1063, 0.0
        %v1292 = vsel %vm1264, %v1064, 0.0
        %v1293 = vsel %vm1265, %v1065, 0.0
        %v1294 = vsel %vm1266, %v1066, 0.0
        %v1295 = vsel %vm1267, %v1067, 0.0
        %v1296 = vsel %vm1268, %v1068, 0.0
        %v1297 = vsel %vm1269, %v1069, 0.0
        %v1298 = vsel %vm1270, %v1070, 0.0
        %v1299 = vsel %vm1271, %v1071, 0.0
        %v1300 = vsel %vm1272, %v1072, 0.0
        %v1301 = vsel %vm1273, %v1073, 0.0
        %v1302 = vsel %vm1274, %v1074, 0.0
        %v1303 = vsel %vm1275, %v1075, 0.0
        %v1304 = vsel %vm1276, %v1076, 0.0
        %v1305 = vsel %vm1277, %v1077, 0.0
        %v1306 = vsel %vm1278, %v1078, 0.0
        %v1307 = vsel %vm1279, %v1079, 0.0
        %v1308 = vsel %vm1280, %v1080, 0.0
        %v1309 = vsel %vm1281, %v1081, 0.0
        %v1310 = vsel %vm1282, %v1082, 0.0
        %v1311 = vsel %vm1283, %v1083, 0.0
        %v1312 = vsel %vm1284, %v1084, 0.0
        %v1313 = vsel %vm1285, %v1085, 0.0
        %v1314 = vsel %vm1286, %v1086, 0.0
        %v1315 = vsel %vm1287, %v1087, 0.0
        %v1316 = vld [vmem:[#allocation10] sm:$0xff]
        %v1317 = vld [vmem:[#allocation10 + $0x8] sm:$0xff]
        %v1318 = vld [vmem:[#allocation10 + $0x10] sm:$0xff]
        %v1319 = vld [vmem:[#allocation10 + $0x18] sm:$0x7f]
        %v1320 = vlaneseq
        %v1321 = vshrl.u32 %v1320, 7
        %v1322 = vsub.s32 0, %v1321
        %v1323 = vrot.slane %v1316, %v1322
        %v1324 = vmul.f32 %v1288, %v1323
        %v1325 = vmul.f32 %v1289, %v1323
        %v1326 = vmul.f32 %v1290, %v1323
        %v1327 = vmul.f32 %v1291, %v1323
        %v1328 = vmul.f32 %v1292, %v1323
        %v1329 = vmul.f32 %v1293, %v1323
        %v1330 = vmul.f32 %v1294, %v1323
        %v1331 = vmul.f32 %v1295, %v1323
        %v1332 = vmul.f32 %v1296, %v1323
        %v1333 = vmul.f32 %v1297, %v1323
        %v1334 = vmul.f32 %v1298, %v1323
        %v1335 = vmul.f32 %v1299, %v1323
        %v1336 = vmul.f32 %v1300, %v1323
        %v1337 = vmul.f32 %v1301, %v1323
        %v1338 = vmul.f32 %v1302, %v1323
        %v1339 = vmul.f32 %v1303, %v1323
        %v1340 = vmul.f32 %v1304, %v1323
        %v1341 = vmul.f32 %v1305, %v1323
        %v1342 = vmul.f32 %v1306, %v1323
        %v1343 = vmul.f32 %v1307, %v1323
        %v1344 = vmul.f32 %v1308, %v1323
        %v1345 = vmul.f32 %v1309, %v1323
        %v1346 = vmul.f32 %v1310, %v1323
        %v1347 = vmul.f32 %v1311, %v1323
        %v1348 = vmul.f32 %v1312, %v1323
        %v1349 = vadd.f32 %v1324, 0.0
        %v1350 = vadd.f32 %v1325, 0.0
        %v1351 = vadd.f32 %v1326, 0.0
        %v1352 = vadd.f32 %v1327, 0.0
        %v1353 = vadd.f32 %v1328, 0.0
        %v1354 = vadd.f32 %v1329, 0.0
        %v1355 = vadd.f32 %v1330, 0.0
        %v1356 = vadd.f32 %v1331, 0.0
        %v1357 = vadd.f32 %v1332, 0.0
        %v1358 = vadd.f32 %v1333, 0.0
        %v1359 = vadd.f32 %v1334, 0.0
        %v1360 = vadd.f32 %v1335, 0.0
        %v1361 = vadd.f32 %v1336, 0.0
        %v1362 = vadd.f32 %v1337, 0.0
        %v1363 = vadd.f32 %v1338, 0.0
        %v1364 = vadd.f32 %v1339, 0.0
        %v1365 = vadd.f32 %v1340, 0.0
        %v1366 = vadd.f32 %v1341, 0.0
        %v1367 = vadd.f32 %v1342, 0.0
        %v1368 = vadd.f32 %v1343, 0.0
        %v1369 = vadd.f32 %v1344, 0.0
        %v1370 = vadd.f32 %v1345, 0.0
        %v1371 = vadd.f32 %v1346, 0.0
        %v1372 = vadd.f32 %v1347, 0.0
        %v1373 = vadd.f32 %v1348, 0.0
        %v1374 = vlaneseq
        %v1375 = vshrl.u32 %v1374, 7
        %v1376 = vsub.s32 1, %v1375
        %v1377 = vrot.slane %v1316, %v1376
        %v1378 = vmul.f32 %v1288, %v1377
        %v1379 = vmul.f32 %v1289, %v1377
        %v1380 = vmul.f32 %v1290, %v1377
        %v1381 = vmul.f32 %v1291, %v1377
        %v1382 = vmul.f32 %v1292, %v1377
        %v1383 = vmul.f32 %v1293, %v1377
        %v1384 = vmul.f32 %v1294, %v1377
        %v1385 = vmul.f32 %v1295, %v1377
        %v1386 = vmul.f32 %v1296, %v1377
        %v1387 = vmul.f32 %v1297, %v1377
        %v1388 = vmul.f32 %v1298, %v1377
        %v1389 = vmul.f32 %v1299, %v1377
        %v1390 = vmul.f32 %v1300, %v1377
        %v1391 = vmul.f32 %v1301, %v1377
        %v1392 = vmul.f32 %v1302, %v1377
        %v1393 = vmul.f32 %v1303, %v1377
        %v1394 = vmul.f32 %v1304, %v1377
        %v1395 = vmul.f32 %v1305, %v1377
        %v1396 = vmul.f32 %v1306, %v1377
        %v1397 = vmul.f32 %v1307, %v1377
        %v1398 = vmul.f32 %v1308, %v1377
        %v1399 = vmul.f32 %v1309, %v1377
        %v1400 = vmul.f32 %v1310, %v1377
        %v1401 = vmul.f32 %v1311, %v1377
        %v1402 = vmul.f32 %v1312, %v1377
        %v1403 = vadd.f32 %v1378, 0.0
        %v1404 = vadd.f32 %v1379, 0.0
        %v1405 = vadd.f32 %v1380, 0.0
        %v1406 = vadd.f32 %v1381, 0.0
        %v1407 = vadd.f32 %v1382, 0.0
        %v1408 = vadd.f32 %v1383, 0.0
        %v1409 = vadd.f32 %v1384, 0.0
        %v1410 = vadd.f32 %v1385, 0.0
        %v1411 = vadd.f32 %v1386, 0.0
        %v1412 = vadd.f32 %v1387, 0.0
        %v1413 = vadd.f32 %v1388, 0.0
        %v1414 = vadd.f32 %v1389, 0.0
        %v1415 = vadd.f32 %v1390, 0.0
        %v1416 = vadd.f32 %v1391, 0.0
        %v1417 = vadd.f32 %v1392, 0.0
        %v1418 = vadd.f32 %v1393, 0.0
        %v1419 = vadd.f32 %v1394, 0.0
        %v1420 = vadd.f32 %v1395, 0.0
        %v1421 = vadd.f32 %v1396, 0.0
        %v1422 = vadd.f32 %v1397, 0.0
        %v1423 = vadd.f32 %v1398, 0.0
        %v1424 = vadd.f32 %v1399, 0.0
        %v1425 = vadd.f32 %v1400, 0.0
        %v1426 = vadd.f32 %v1401, 0.0
        %v1427 = vadd.f32 %v1402, 0.0
        %v1428 = vlaneseq
        %v1429 = vshrl.u32 %v1428, 7
        %v1430 = vsub.s32 2, %v1429
        %v1431 = vrot.slane %v1316, %v1430
        %v1432 = vmul.f32 %v1288, %v1431
        %v1433 = vmul.f32 %v1289, %v1431
        %v1434 = vmul.f32 %v1290, %v1431
        %v1435 = vmul.f32 %v1291, %v1431
        %v1436 = vmul.f32 %v1292, %v1431
        %v1437 = vmul.f32 %v1293, %v1431
        %v1438 = vmul.f32 %v1294, %v1431
        %v1439 = vmul.f32 %v1295, %v1431
        %v1440 = vmul.f32 %v1296, %v1431
        %v1441 = vmul.f32 %v1297, %v1431
        %v1442 = vmul.f32 %v1298, %v1431
        %v1443 = vmul.f32 %v1299, %v1431
        %v1444 = vmul.f32 %v1300, %v1431
        %v1445 = vmul.f32 %v1301, %v1431
        %v1446 = vmul.f32 %v1302, %v1431
        %v1447 = vmul.f32 %v1303, %v1431
        %v1448 = vmul.f32 %v1304, %v1431
        %v1449 = vmul.f32 %v1305, %v1431
        %v1450 = vmul.f32 %v1306, %v1431
        %v1451 = vmul.f32 %v1307, %v1431
        %v1452 = vmul.f32 %v1308, %v1431
        %v1453 = vmul.f32 %v1309, %v1431
        %v1454 = vmul.f32 %v1310, %v1431
        %v1455 = vmul.f32 %v1311, %v1431
        %v1456 = vmul.f32 %v1312, %v1431
        %vm1482 = vcmask 1045504
        %v1483 = vrot.slane %v1432, 2
        %v1484 = vrot.slane %v1433, 2
        %v1485 = vsel %vm1482, %v1483, %v1484
        %v1486 = vrot.slane %v1434, 2
        %v1487 = vsel %vm1482, %v1484, %v1486
        %v1488 = vrot.slane %v1435, 2
        %v1489 = vsel %vm1482, %v1486, %v1488
        %v1490 = vrot.slane %v1436, 2
        %v1491 = vsel %vm1482, %v1488, %v1490
        %v1492 = vrot.slane %v1437, 2
        %v1493 = vsel %vm1482, %v1490, %v1492
        %v1494 = vrot.slane %v1438, 2
        %v1495 = vsel %vm1482, %v1492, %v1494
        %v1496 = vrot.slane %v1439, 2
        %v1497 = vsel %vm1482, %v1494, %v1496
        %v1498 = vrot.slane %v1440, 2
        %v1499 = vsel %vm1482, %v1496, %v1498
        %v1500 = vrot.slane %v1441, 2
        %v1501 = vsel %vm1482, %v1498, %v1500
        %v1502 = vrot.slane %v1442, 2
        %v1503 = vsel %vm1482, %v1500, %v1502
        %v1504 = vrot.slane %v1443, 2
        %v1505 = vsel %vm1482, %v1502, %v1504
        %v1506 = vrot.slane %v1444, 2
        %v1507 = vsel %vm1482, %v1504, %v1506
        %v1508 = vrot.slane %v1445, 2
        %v1509 = vsel %vm1482, %v1506, %v1508
        %v1510 = vrot.slane %v1446, 2
        %v1511 = vsel %vm1482, %v1508, %v1510
        %v1512 = vrot.slane %v1447, 2
        %v1513 = vsel %vm1482, %v1510, %v1512
        %v1514 = vrot.slane %v1448, 2
        %v1515 = vsel %vm1482, %v1512, %v1514
        %v1516 = vrot.slane %v1449, 2
        %v1517 = vsel %vm1482, %v1514, %v1516
        %v1518 = vrot.slane %v1450, 2
        %v1519 = vsel %vm1482, %v1516, %v1518
        %v1520 = vrot.slane %v1451, 2
        %v1521 = vsel %vm1482, %v1518, %v1520
        %v1522 = vrot.slane %v1452, 2
        %v1523 = vsel %vm1482, %v1520, %v1522
        %v1524 = vrot.slane %v1453, 2
        %v1525 = vsel %vm1482, %v1522, %v1524
        %v1526 = vrot.slane %v1454, 2
        %v1527 = vsel %vm1482, %v1524, %v1526
        %v1528 = vrot.slane %v1455, 2
        %v1529 = vsel %vm1482, %v1526, %v1528
        %v1530 = vrot.slane %v1456, 2
        %v1531 = vsel %vm1482, %v1528, %v1530
        %v1557 = vadd.f32 %v1349, %v1485
        %v1558 = vadd.f32 %v1350, %v1487
        %v1559 = vadd.f32 %v1351, %v1489
        %v1560 = vadd.f32 %v1352, %v1491
        %v1561 = vadd.f32 %v1353, %v1493
        %v1562 = vadd.f32 %v1354, %v1495
        %v1563 = vadd.f32 %v1355, %v1497
        %v1564 = vadd.f32 %v1356, %v1499
        %v1565 = vadd.f32 %v1357, %v1501
        %v1566 = vadd.f32 %v1358, %v1503
        %v1567 = vadd.f32 %v1359, %v1505
        %v1568 = vadd.f32 %v1360, %v1507
        %v1569 = vadd.f32 %v1361, %v1509
        %v1570 = vadd.f32 %v1362, %v1511
        %v1571 = vadd.f32 %v1363, %v1513
        %v1572 = vadd.f32 %v1364, %v1515
        %v1573 = vadd.f32 %v1365, %v1517
        %v1574 = vadd.f32 %v1366, %v1519
        %v1575 = vadd.f32 %v1367, %v1521
        %v1576 = vadd.f32 %v1368, %v1523
        %v1577 = vadd.f32 %v1369, %v1525
        %v1578 = vadd.f32 %v1370, %v1527
        %v1579 = vadd.f32 %v1371, %v1529
        %v1580 = vadd.f32 %v1372, %v1531
        %v1581 = vadd.f32 %v1373, %v1530
        %v1582 = vlaneseq
        %v1583 = vshrl.u32 %v1582, 7
        %v1584 = vsub.s32 3, %v1583
        %v1585 = vrot.slane %v1316, %v1584
        %v1586 = vmul.f32 %v1288, %v1585
        %v1587 = vmul.f32 %v1289, %v1585
        %v1588 = vmul.f32 %v1290, %v1585
        %v1589 = vmul.f32 %v1291, %v1585
        %v1590 = vmul.f32 %v1292, %v1585
        %v1591 = vmul.f32 %v1293, %v1585
        %v1592 = vmul.f32 %v1294, %v1585
        %v1593 = vmul.f32 %v1295, %v1585
        %v1594 = vmul.f32 %v1296, %v1585
        %v1595 = vmul.f32 %v1297, %v1585
        %v1596 = vmul.f32 %v1298, %v1585
        %v1597 = vmul.f32 %v1299, %v1585
        %v1598 = vmul.f32 %v1300, %v1585
        %v1599 = vmul.f32 %v1301, %v1585
        %v1600 = vmul.f32 %v1302, %v1585
        %v1601 = vmul.f32 %v1303, %v1585
        %v1602 = vmul.f32 %v1304, %v1585
        %v1603 = vmul.f32 %v1305, %v1585
        %v1604 = vmul.f32 %v1306, %v1585
        %v1605 = vmul.f32 %v1307, %v1585
        %v1606 = vmul.f32 %v1308, %v1585
        %v1607 = vmul.f32 %v1309, %v1585
        %v1608 = vmul.f32 %v1310, %v1585
        %v1609 = vmul.f32 %v1311, %v1585
        %v1610 = vmul.f32 %v1312, %v1585
        %v1636 = vrot.slane %v1586, 2
        %v1637 = vrot.slane %v1587, 2
        %v1638 = vsel %vm1482, %v1636, %v1637
        %v1639 = vrot.slane %v1588, 2
        %v1640 = vsel %vm1482, %v1637, %v1639
        %v1641 = vrot.slane %v1589, 2
        %v1642 = vsel %vm1482, %v1639, %v1641
        %v1643 = vrot.slane %v1590, 2
        %v1644 = vsel %vm1482, %v1641, %v1643
        %v1645 = vrot.slane %v1591, 2
        %v1646 = vsel %vm1482, %v1643, %v1645
        %v1647 = vrot.slane %v1592, 2
        %v1648 = vsel %vm1482, %v1645, %v1647
        %v1649 = vrot.slane %v1593, 2
        %v1650 = vsel %vm1482, %v1647, %v1649
        %v1651 = vrot.slane %v1594, 2
        %v1652 = vsel %vm1482, %v1649, %v1651
        %v1653 = vrot.slane %v1595, 2
        %v1654 = vsel %vm1482, %v1651, %v1653
        %v1655 = vrot.slane %v1596, 2
        %v1656 = vsel %vm1482, %v1653, %v1655
        %v1657 = vrot.slane %v1597, 2
        %v1658 = vsel %vm1482, %v1655, %v1657
        %v1659 = vrot.slane %v1598, 2
        %v1660 = vsel %vm1482, %v1657, %v1659
        %v1661 = vrot.slane %v1599, 2
        %v1662 = vsel %vm1482, %v1659, %v1661
        %v1663 = vrot.slane %v1600, 2
        %v1664 = vsel %vm1482, %v1661, %v1663
        %v1665 = vrot.slane %v1601, 2
        %v1666 = vsel %vm1482, %v1663, %v1665
        %v1667 = vrot.slane %v1602, 2
        %v1668 = vsel %vm1482, %v1665, %v1667
        %v1669 = vrot.slane %v1603, 2
        %v1670 = vsel %vm1482, %v1667, %v1669
        %v1671 = vrot.slane %v1604, 2
        %v1672 = vsel %vm1482, %v1669, %v1671
        %v1673 = vrot.slane %v1605, 2
        %v1674 = vsel %vm1482, %v1671, %v1673
        %v1675 = vrot.slane %v1606, 2
        %v1676 = vsel %vm1482, %v1673, %v1675
        %v1677 = vrot.slane %v1607, 2
        %v1678 = vsel %vm1482, %v1675, %v1677
        %v1679 = vrot.slane %v1608, 2
        %v1680 = vsel %vm1482, %v1677, %v1679
        %v1681 = vrot.slane %v1609, 2
        %v1682 = vsel %vm1482, %v1679, %v1681
        %v1683 = vrot.slane %v1610, 2
        %v1684 = vsel %vm1482, %v1681, %v1683
        %v1710 = vadd.f32 %v1403, %v1638
        %v1711 = vadd.f32 %v1404, %v1640
        %v1712 = vadd.f32 %v1405, %v1642
        %v1713 = vadd.f32 %v1406, %v1644
        %v1714 = vadd.f32 %v1407, %v1646
        %v1715 = vadd.f32 %v1408, %v1648
        %v1716 = vadd.f32 %v1409, %v1650
        %v1717 = vadd.f32 %v1410, %v1652
        %v1718 = vadd.f32 %v1411, %v1654
        %v1719 = vadd.f32 %v1412, %v1656
        %v1720 = vadd.f32 %v1413, %v1658
        %v1721 = vadd.f32 %v1414, %v1660
        %v1722 = vadd.f32 %v1415, %v1662
        %v1723 = vadd.f32 %v1416, %v1664
        %v1724 = vadd.f32 %v1417, %v1666
        %v1725 = vadd.f32 %v1418, %v1668
        %v1726 = vadd.f32 %v1419, %v1670
        %v1727 = vadd.f32 %v1420, %v1672
        %v1728 = vadd.f32 %v1421, %v1674
        %v1729 = vadd.f32 %v1422, %v1676
        %v1730 = vadd.f32 %v1423, %v1678
        %v1731 = vadd.f32 %v1424, %v1680
        %v1732 = vadd.f32 %v1425, %v1682
        %v1733 = vadd.f32 %v1426, %v1684
        %v1734 = vadd.f32 %v1427, %v1683
        %v1735 = vlaneseq
        %v1736 = vshrl.u32 %v1735, 7
        %v1737 = vsub.s32 4, %v1736
        %v1738 = vrot.slane %v1316, %v1737
        %v1739 = vmul.f32 %v1288, %v1738
        %v1740 = vmul.f32 %v1289, %v1738
        %v1741 = vmul.f32 %v1290, %v1738
        %v1742 = vmul.f32 %v1291, %v1738
        %v1743 = vmul.f32 %v1292, %v1738
        %v1744 = vmul.f32 %v1293, %v1738
        %v1745 = vmul.f32 %v1294, %v1738
        %v1746 = vmul.f32 %v1295, %v1738
        %v1747 = vmul.f32 %v1296, %v1738
        %v1748 = vmul.f32 %v1297, %v1738
        %v1749 = vmul.f32 %v1298, %v1738
        %v1750 = vmul.f32 %v1299, %v1738
        %v1751 = vmul.f32 %v1300, %v1738
        %v1752 = vmul.f32 %v1301, %v1738
        %v1753 = vmul.f32 %v1302, %v1738
        %v1754 = vmul.f32 %v1303, %v1738
        %v1755 = vmul.f32 %v1304, %v1738
        %v1756 = vmul.f32 %v1305, %v1738
        %v1757 = vmul.f32 %v1306, %v1738
        %v1758 = vmul.f32 %v1307, %v1738
        %v1759 = vmul.f32 %v1308, %v1738
        %v1760 = vmul.f32 %v1309, %v1738
        %v1761 = vmul.f32 %v1310, %v1738
        %v1762 = vmul.f32 %v1311, %v1738
        %v1763 = vmul.f32 %v1312, %v1738
        %vm1789 = vcmask 1043456
        %v1790 = vrot.slane %v1739, 4
        %v1791 = vrot.slane %v1740, 4
        %v1792 = vsel %vm1789, %v1790, %v1791
        %v1793 = vrot.slane %v1741, 4
        %v1794 = vsel %vm1789, %v1791, %v1793
        %v1795 = vrot.slane %v1742, 4
        %v1796 = vsel %vm1789, %v1793, %v1795
        %v1797 = vrot.slane %v1743, 4
        %v1798 = vsel %vm1789, %v1795, %v1797
        %v1799 = vrot.slane %v1744, 4
        %v1800 = vsel %vm1789, %v1797, %v1799
        %v1801 = vrot.slane %v1745, 4
        %v1802 = vsel %vm1789, %v1799, %v1801
        %v1803 = vrot.slane %v1746, 4
        %v1804 = vsel %vm1789, %v1801, %v1803
        %v1805 = vrot.slane %v1747, 4
        %v1806 = vsel %vm1789, %v1803, %v1805
        %v1807 = vrot.slane %v1748, 4
        %v1808 = vsel %vm1789, %v1805, %v1807
        %v1809 = vrot.slane %v1749, 4
        %v1810 = vsel %vm1789, %v1807, %v1809
        %v1811 = vrot.slane %v1750, 4
        %v1812 = vsel %vm1789, %v1809, %v1811
        %v1813 = vrot.slane %v1751, 4
        %v1814 = vsel %vm1789, %v1811, %v1813
        %v1815 = vrot.slane %v1752, 4
        %v1816 = vsel %vm1789, %v1813, %v1815
        %v1817 = vrot.slane %v1753, 4
        %v1818 = vsel %vm1789, %v1815, %v1817
        %v1819 = vrot.slane %v1754, 4
        %v1820 = vsel %vm1789, %v1817, %v1819
        %v1821 = vrot.slane %v1755, 4
        %v1822 = vsel %vm1789, %v1819, %v1821
        %v1823 = vrot.slane %v1756, 4
        %v1824 = vsel %vm1789, %v1821, %v1823
        %v1825 = vrot.slane %v1757, 4
        %v1826 = vsel %vm1789, %v1823, %v1825
        %v1827 = vrot.slane %v1758, 4
        %v1828 = vsel %vm1789, %v1825, %v1827
        %v1829 = vrot.slane %v1759, 4
        %v1830 = vsel %vm1789, %v1827, %v1829
        %v1831 = vrot.slane %v1760, 4
        %v1832 = vsel %vm1789, %v1829, %v1831
        %v1833 = vrot.slane %v1761, 4
        %v1834 = vsel %vm1789, %v1831, %v1833
        %v1835 = vrot.slane %v1762, 4
        %v1836 = vsel %vm1789, %v1833, %v1835
        %v1837 = vrot.slane %v1763, 4
        %v1838 = vsel %vm1789, %v1835, %v1837
        %v1864 = vadd.f32 %v1557, %v1792
        %v1865 = vadd.f32 %v1558, %v1794
        %v1866 = vadd.f32 %v1559, %v1796
        %v1867 = vadd.f32 %v1560, %v1798
        %v1868 = vadd.f32 %v1561, %v1800
        %v1869 = vadd.f32 %v1562, %v1802
        %v1870 = vadd.f32 %v1563, %v1804
        %v1871 = vadd.f32 %v1564, %v1806
        %v1872 = vadd.f32 %v1565, %v1808
        %v1873 = vadd.f32 %v1566, %v1810
        %v1874 = vadd.f32 %v1567, %v1812
        %v1875 = vadd.f32 %v1568, %v1814
        %v1876 = vadd.f32 %v1569, %v1816
        %v1877 = vadd.f32 %v1570, %v1818
        %v1878 = vadd.f32 %v1571, %v1820
        %v1879 = vadd.f32 %v1572, %v1822
        %v1880 = vadd.f32 %v1573, %v1824
        %v1881 = vadd.f32 %v1574, %v1826
        %v1882 = vadd.f32 %v1575, %v1828
        %v1883 = vadd.f32 %v1576, %v1830
        %v1884 = vadd.f32 %v1577, %v1832
        %v1885 = vadd.f32 %v1578, %v1834
        %v1886 = vadd.f32 %v1579, %v1836
        %v1887 = vadd.f32 %v1580, %v1838
        %v1888 = vadd.f32 %v1581, %v1837
        %v1889 = vlaneseq
        %v1890 = vshrl.u32 %v1889, 7
        %v1891 = vsub.s32 5, %v1890
        %v1892 = vrot.slane %v1316, %v1891
        %v1893 = vmul.f32 %v1288, %v1892
        %v1894 = vmul.f32 %v1289, %v1892
        %v1895 = vmul.f32 %v1290, %v1892
        %v1896 = vmul.f32 %v1291, %v1892
        %v1897 = vmul.f32 %v1292, %v1892
        %v1898 = vmul.f32 %v1293, %v1892
        %v1899 = vmul.f32 %v1294, %v1892
        %v1900 = vmul.f32 %v1295, %v1892
        %v1901 = vmul.f32 %v1296, %v1892
        %v1902 = vmul.f32 %v1297, %v1892
        %v1903 = vmul.f32 %v1298, %v1892
        %v1904 = vmul.f32 %v1299, %v1892
        %v1905 = vmul.f32 %v1300, %v1892
        %v1906 = vmul.f32 %v1301, %v1892
        %v1907 = vmul.f32 %v1302, %v1892
        %v1908 = vmul.f32 %v1303, %v1892
        %v1909 = vmul.f32 %v1304, %v1892
        %v1910 = vmul.f32 %v1305, %v1892
        %v1911 = vmul.f32 %v1306, %v1892
        %v1912 = vmul.f32 %v1307, %v1892
        %v1913 = vmul.f32 %v1308, %v1892
        %v1914 = vmul.f32 %v1309, %v1892
        %v1915 = vmul.f32 %v1310, %v1892
        %v1916 = vmul.f32 %v1311, %v1892
        %v1917 = vmul.f32 %v1312, %v1892
        %v1943 = vrot.slane %v1893, 4
        %v1944 = vrot.slane %v1894, 4
        %v1945 = vsel %vm1789, %v1943, %v1944
        %v1946 = vrot.slane %v1895, 4
        %v1947 = vsel %vm1789, %v1944, %v1946
        %v1948 = vrot.slane %v1896, 4
        %v1949 = vsel %vm1789, %v1946, %v1948
        %v1950 = vrot.slane %v1897, 4
        %v1951 = vsel %vm1789, %v1948, %v1950
        %v1952 = vrot.slane %v1898, 4
        %v1953 = vsel %vm1789, %v1950, %v1952
        %v1954 = vrot.slane %v1899, 4
        %v1955 = vsel %vm1789, %v1952, %v1954
        %v1956 = vrot.slane %v1900, 4
        %v1957 = vsel %vm1789, %v1954, %v1956
        %v1958 = vrot.slane %v1901, 4
        %v1959 = vsel %vm1789, %v1956, %v1958
        %v1960 = vrot.slane %v1902, 4
        %v1961 = vsel %vm1789, %v1958, %v1960
        %v1962 = vrot.slane %v1903, 4
        %v1963 = vsel %vm1789, %v1960, %v1962
        %v1964 = vrot.slane %v1904, 4
        %v1965 = vsel %vm1789, %v1962, %v1964
        %v1966 = vrot.slane %v1905, 4
        %v1967 = vsel %vm1789, %v1964, %v1966
        %v1968 = vrot.slane %v1906, 4
        %v1969 = vsel %vm1789, %v1966, %v1968
        %v1970 = vrot.slane %v1907, 4
        %v1971 = vsel %vm1789, %v1968, %v1970
        %v1972 = vrot.slane %v1908, 4
        %v1973 = vsel %vm1789, %v1970, %v1972
        %v1974 = vrot.slane %v1909, 4
        %v1975 = vsel %vm1789, %v1972, %v1974
        %v1976 = vrot.slane %v1910, 4
        %v1977 = vsel %vm1789, %v1974, %v1976
        %v1978 = vrot.slane %v1911, 4
        %v1979 = vsel %vm1789, %v1976, %v1978
        %v1980 = vrot.slane %v1912, 4
        %v1981 = vsel %vm1789, %v1978, %v1980
        %v1982 = vrot.slane %v1913, 4
        %v1983 = vsel %vm1789, %v1980, %v1982
        %v1984 = vrot.slane %v1914, 4
        %v1985 = vsel %vm1789, %v1982, %v1984
        %v1986 = vrot.slane %v1915, 4
        %v1987 = vsel %vm1789, %v1984, %v1986
        %v1988 = vrot.slane %v1916, 4
        %v1989 = vsel %vm1789, %v1986, %v1988
        %v1990 = vrot.slane %v1917, 4
        %v1991 = vsel %vm1789, %v1988, %v1990
        %v2017 = vadd.f32 %v1710, %v1945
        %v2018 = vadd.f32 %v1711, %v1947
        %v2019 = vadd.f32 %v1712, %v1949
        %v2020 = vadd.f32 %v1713, %v1951
        %v2021 = vadd.f32 %v1714, %v1953
        %v2022 = vadd.f32 %v1715, %v1955
        %v2023 = vadd.f32 %v1716, %v1957
        %v2024 = vadd.f32 %v1717, %v1959
        %v2025 = vadd.f32 %v1718, %v1961
        %v2026 = vadd.f32 %v1719, %v1963
        %v2027 = vadd.f32 %v1720, %v1965
        %v2028 = vadd.f32 %v1721, %v1967
        %v2029 = vadd.f32 %v1722, %v1969
        %v2030 = vadd.f32 %v1723, %v1971
        %v2031 = vadd.f32 %v1724, %v1973
        %v2032 = vadd.f32 %v1725, %v1975
        %v2033 = vadd.f32 %v1726, %v1977
        %v2034 = vadd.f32 %v1727, %v1979
        %v2035 = vadd.f32 %v1728, %v1981
        %v2036 = vadd.f32 %v1729, %v1983
        %v2037 = vadd.f32 %v1730, %v1985
        %v2038 = vadd.f32 %v1731, %v1987
        %v2039 = vadd.f32 %v1732, %v1989
        %v2040 = vadd.f32 %v1733, %v1991
        %v2041 = vadd.f32 %v1734, %v1990
        %v2042 = vlaneseq
        %v2043 = vshrl.u32 %v2042, 7
        %v2044 = vsub.s32 6, %v2043
        %v2045 = vrot.slane %v1316, %v2044
        %v2046 = vmul.f32 %v1288, %v2045
        %v2047 = vmul.f32 %v1289, %v2045
        %v2048 = vmul.f32 %v1290, %v2045
        %v2049 = vmul.f32 %v1291, %v2045
        %v2050 = vmul.f32 %v1292, %v2045
        %v2051 = vmul.f32 %v1293, %v2045
        %v2052 = vmul.f32 %v1294, %v2045
        %v2053 = vmul.f32 %v1295, %v2045
        %v2054 = vmul.f32 %v1296, %v2045
        %v2055 = vmul.f32 %v1297, %v2045
        %v2056 = vmul.f32 %v1298, %v2045
        %v2057 = vmul.f32 %v1299, %v2045
        %v2058 = vmul.f32 %v1300, %v2045
        %v2059 = vmul.f32 %v1301, %v2045
        %v2060 = vmul.f32 %v1302, %v2045
        %v2061 = vmul.f32 %v1303, %v2045
        %v2062 = vmul.f32 %v1304, %v2045
        %v2063 = vmul.f32 %v1305, %v2045
        %v2064 = vmul.f32 %v1306, %v2045
        %v2065 = vmul.f32 %v1307, %v2045
        %v2066 = vmul.f32 %v1308, %v2045
        %v2067 = vmul.f32 %v1309, %v2045
        %v2068 = vmul.f32 %v1310, %v2045
        %v2069 = vmul.f32 %v1311, %v2045
        %v2070 = vmul.f32 %v1312, %v2045
        %vm2096 = vcmask 1041408
        %v2097 = vrot.slane %v2046, 6
        %v2098 = vrot.slane %v2047, 6
        %v2099 = vsel %vm2096, %v2097, %v2098
        %v2100 = vrot.slane %v2048, 6
        %v2101 = vsel %vm2096, %v2098, %v2100
        %v2102 = vrot.slane %v2049, 6
        %v2103 = vsel %vm2096, %v2100, %v2102
        %v2104 = vrot.slane %v2050, 6
        %v2105 = vsel %vm2096, %v2102, %v2104
        %v2106 = vrot.slane %v2051, 6
        %v2107 = vsel %vm2096, %v2104, %v2106
        %v2108 = vrot.slane %v2052, 6
        %v2109 = vsel %vm2096, %v2106, %v2108
        %v2110 = vrot.slane %v2053, 6
        %v2111 = vsel %vm2096, %v2108, %v2110
        %v2112 = vrot.slane %v2054, 6
        %v2113 = vsel %vm2096, %v2110, %v2112
        %v2114 = vrot.slane %v2055, 6
        %v2115 = vsel %vm2096, %v2112, %v2114
        %v2116 = vrot.slane %v2056, 6
        %v2117 = vsel %vm2096, %v2114, %v2116
        %v2118 = vrot.slane %v2057, 6
        %v2119 = vsel %vm2096, %v2116, %v2118
        %v2120 = vrot.slane %v2058, 6
        %v2121 = vsel %vm2096, %v2118, %v2120
        %v2122 = vrot.slane %v2059, 6
        %v2123 = vsel %vm2096, %v2120, %v2122
        %v2124 = vrot.slane %v2060, 6
        %v2125 = vsel %vm2096, %v2122, %v2124
        %v2126 = vrot.slane %v2061, 6
        %v2127 = vsel %vm2096, %v2124, %v2126
        %v2128 = vrot.slane %v2062, 6
        %v2129 = vsel %vm2096, %v2126, %v2128
        %v2130 = vrot.slane %v2063, 6
        %v2131 = vsel %vm2096, %v2128, %v2130
        %v2132 = vrot.slane %v2064, 6
        %v2133 = vsel %vm2096, %v2130, %v2132
        %v2134 = vrot.slane %v2065, 6
        %v2135 = vsel %vm2096, %v2132, %v2134
        %v2136 = vrot.slane %v2066, 6
        %v2137 = vsel %vm2096, %v2134, %v2136
        %v2138 = vrot.slane %v2067, 6
        %v2139 = vsel %vm2096, %v2136, %v2138
        %v2140 = vrot.slane %v2068, 6
        %v2141 = vsel %vm2096, %v2138, %v2140
        %v2142 = vrot.slane %v2069, 6
        %v2143 = vsel %vm2096, %v2140, %v2142
        %v2144 = vrot.slane %v2070, 6
        %v2145 = vsel %vm2096, %v2142, %v2144
        %v2171 = vadd.f32 %v1864, %v2099
        %v2172 = vadd.f32 %v1865, %v2101
        %v2173 = vadd.f32 %v1866, %v2103
        %v2174 = vadd.f32 %v1867, %v2105
        %v2175 = vadd.f32 %v1868, %v2107
        %v2176 = vadd.f32 %v1869, %v2109
        %v2177 = vadd.f32 %v1870, %v2111
        %v2178 = vadd.f32 %v1871, %v2113
        %v2179 = vadd.f32 %v1872, %v2115
        %v2180 = vadd.f32 %v1873, %v2117
        %v2181 = vadd.f32 %v1874, %v2119
        %v2182 = vadd.f32 %v1875, %v2121
        %v2183 = vadd.f32 %v1876, %v2123
        %v2184 = vadd.f32 %v1877, %v2125
        %v2185 = vadd.f32 %v1878, %v2127
        %v2186 = vadd.f32 %v1879, %v2129
        %v2187 = vadd.f32 %v1880, %v2131
        %v2188 = vadd.f32 %v1881, %v2133
        %v2189 = vadd.f32 %v1882, %v2135
        %v2190 = vadd.f32 %v1883, %v2137
        %v2191 = vadd.f32 %v1884, %v2139
        %v2192 = vadd.f32 %v1885, %v2141
        %v2193 = vadd.f32 %v1886, %v2143
        %v2194 = vadd.f32 %v1887, %v2145
        %v2195 = vadd.f32 %v1888, %v2144
        %v2196 = vlaneseq
        %v2197 = vshrl.u32 %v2196, 7
        %v2198 = vsub.s32 7, %v2197
        %v2199 = vrot.slane %v1316, %v2198
        %v2200 = vmul.f32 %v1289, %v2199
        %v2201 = vmul.f32 %v1290, %v2199
        %v2202 = vmul.f32 %v1291, %v2199
        %v2203 = vmul.f32 %v1292, %v2199
        %v2204 = vmul.f32 %v1293, %v2199
        %v2205 = vmul.f32 %v1294, %v2199
        %v2206 = vmul.f32 %v1295, %v2199
        %v2207 = vmul.f32 %v1296, %v2199
        %v2208 = vmul.f32 %v1297, %v2199
        %v2209 = vmul.f32 %v1298, %v2199
        %v2210 = vmul.f32 %v1299, %v2199
        %v2211 = vmul.f32 %v1300, %v2199
        %v2212 = vmul.f32 %v1301, %v2199
        %v2213 = vmul.f32 %v1302, %v2199
        %v2214 = vmul.f32 %v1303, %v2199
        %v2215 = vmul.f32 %v1304, %v2199
        %v2216 = vmul.f32 %v1305, %v2199
        %v2217 = vmul.f32 %v1306, %v2199
        %v2218 = vmul.f32 %v1307, %v2199
        %v2219 = vmul.f32 %v1308, %v2199
        %v2220 = vmul.f32 %v1309, %v2199
        %v2221 = vmul.f32 %v1310, %v2199
        %v2222 = vmul.f32 %v1311, %v2199
        %v2223 = vmul.f32 %v1312, %v2199
        %v2248 = vrot.slane %v2200, 6
        %v2249 = vrot.slane %v2201, 6
        %v2250 = vsel %vm2096, %v2248, %v2249
        %v2251 = vrot.slane %v2202, 6
        %v2252 = vsel %vm2096, %v2249, %v2251
        %v2253 = vrot.slane %v2203, 6
        %v2254 = vsel %vm2096, %v2251, %v2253
        %v2255 = vrot.slane %v2204, 6
        %v2256 = vsel %vm2096, %v2253, %v2255
        %v2257 = vrot.slane %v2205, 6
        %v2258 = vsel %vm2096, %v2255, %v2257
        %v2259 = vrot.slane %v2206, 6
        %v2260 = vsel %vm2096, %v2257, %v2259
        %v2261 = vrot.slane %v2207, 6
        %v2262 = vsel %vm2096, %v2259, %v2261
        %v2263 = vrot.slane %v2208, 6
        %v2264 = vsel %vm2096, %v2261, %v2263
        %v2265 = vrot.slane %v2209, 6
        %v2266 = vsel %vm2096, %v2263, %v2265
        %v2267 = vrot.slane %v2210, 6
        %v2268 = vsel %vm2096, %v2265, %v2267
        %v2269 = vrot.slane %v2211, 6
        %v2270 = vsel %vm2096, %v2267, %v2269
        %v2271 = vrot.slane %v2212, 6
        %v2272 = vsel %vm2096, %v2269, %v2271
        %v2273 = vrot.slane %v2213, 6
        %v2274 = vsel %vm2096, %v2271, %v2273
        %v2275 = vrot.slane %v2214, 6
        %v2276 = vsel %vm2096, %v2273, %v2275
        %v2277 = vrot.slane %v2215, 6
        %v2278 = vsel %vm2096, %v2275, %v2277
        %v2279 = vrot.slane %v2216, 6
        %v2280 = vsel %vm2096, %v2277, %v2279
        %v2281 = vrot.slane %v2217, 6
        %v2282 = vsel %vm2096, %v2279, %v2281
        %v2283 = vrot.slane %v2218, 6
        %v2284 = vsel %vm2096, %v2281, %v2283
        %v2285 = vrot.slane %v2219, 6
        %v2286 = vsel %vm2096, %v2283, %v2285
        %v2287 = vrot.slane %v2220, 6
        %v2288 = vsel %vm2096, %v2285, %v2287
        %v2289 = vrot.slane %v2221, 6
        %v2290 = vsel %vm2096, %v2287, %v2289
        %v2291 = vrot.slane %v2222, 6
        %v2292 = vsel %vm2096, %v2289, %v2291
        %v2293 = vrot.slane %v2223, 6
        %v2294 = vsel %vm2096, %v2291, %v2293
        %v2320 = vadd.f32 %v2017, %v2248
        %v2321 = vadd.f32 %v2018, %v2250
        %v2322 = vadd.f32 %v2019, %v2252
        %v2323 = vadd.f32 %v2020, %v2254
        %v2324 = vadd.f32 %v2021, %v2256
        %v2325 = vadd.f32 %v2022, %v2258
        %v2326 = vadd.f32 %v2023, %v2260
        %v2327 = vadd.f32 %v2024, %v2262
        %v2328 = vadd.f32 %v2025, %v2264
        %v2329 = vadd.f32 %v2026, %v2266
        %v2330 = vadd.f32 %v2027, %v2268
        %v2331 = vadd.f32 %v2028, %v2270
        %v2332 = vadd.f32 %v2029, %v2272
        %v2333 = vadd.f32 %v2030, %v2274
        %v2334 = vadd.f32 %v2031, %v2276
        %v2335 = vadd.f32 %v2032, %v2278
        %v2336 = vadd.f32 %v2033, %v2280
        %v2337 = vadd.f32 %v2034, %v2282
        %v2338 = vadd.f32 %v2035, %v2284
        %v2339 = vadd.f32 %v2036, %v2286
        %v2340 = vadd.f32 %v2037, %v2288
        %v2341 = vadd.f32 %v2038, %v2290
        %v2342 = vadd.f32 %v2039, %v2292
        %v2343 = vadd.f32 %v2040, %v2294
        %v2344 = vadd.f32 %v2041, %v2293
        %v2345 = vlaneseq
        %v2346 = vshrl.u32 %v2345, 7
        %v2347 = vsub.s32 0, %v2346
        %v2348 = vrot.slane %v1317, %v2347
        %v2349 = vmul.f32 %v1289, %v2348
        %v2350 = vmul.f32 %v1290, %v2348
        %v2351 = vmul.f32 %v1291, %v2348
        %v2352 = vmul.f32 %v1292, %v2348
        %v2353 = vmul.f32 %v1293, %v2348
        %v2354 = vmul.f32 %v1294, %v2348
        %v2355 = vmul.f32 %v1295, %v2348
        %v2356 = vmul.f32 %v1296, %v2348
        %v2357 = vmul.f32 %v1297, %v2348
        %v2358 = vmul.f32 %v1298, %v2348
        %v2359 = vmul.f32 %v1299, %v2348
        %v2360 = vmul.f32 %v1300, %v2348
        %v2361 = vmul.f32 %v1301, %v2348
        %v2362 = vmul.f32 %v1302, %v2348
        %v2363 = vmul.f32 %v1303, %v2348
        %v2364 = vmul.f32 %v1304, %v2348
        %v2365 = vmul.f32 %v1305, %v2348
        %v2366 = vmul.f32 %v1306, %v2348
        %v2367 = vmul.f32 %v1307, %v2348
        %v2368 = vmul.f32 %v1308, %v2348
        %v2369 = vmul.f32 %v1309, %v2348
        %v2370 = vmul.f32 %v1310, %v2348
        %v2371 = vmul.f32 %v1311, %v2348
        %v2372 = vmul.f32 %v1312, %v2348
        %v2373 = vmul.f32 %v1313, %v2348
        %v2374 = vadd.f32 %v2171, %v2349
        %v2375 = vadd.f32 %v2172, %v2350
        %v2376 = vadd.f32 %v2173, %v2351
        %v2377 = vadd.f32 %v2174, %v2352
        %v2378 = vadd.f32 %v2175, %v2353
        %v2379 = vadd.f32 %v2176, %v2354
        %v2380 = vadd.f32 %v2177, %v2355
        %v2381 = vadd.f32 %v2178, %v2356
        %v2382 = vadd.f32 %v2179, %v2357
        %v2383 = vadd.f32 %v2180, %v2358
        %v2384 = vadd.f32 %v2181, %v2359
        %v2385 = vadd.f32 %v2182, %v2360
        %v2386 = vadd.f32 %v2183, %v2361
        %v2387 = vadd.f32 %v2184, %v2362
        %v2388 = vadd.f32 %v2185, %v2363
        %v2389 = vadd.f32 %v2186, %v2364
        %v2390 = vadd.f32 %v2187, %v2365
        %v2391 = vadd.f32 %v2188, %v2366
        %v2392 = vadd.f32 %v2189, %v2367
        %v2393 = vadd.f32 %v2190, %v2368
        %v2394 = vadd.f32 %v2191, %v2369
        %v2395 = vadd.f32 %v2192, %v2370
        %v2396 = vadd.f32 %v2193, %v2371
        %v2397 = vadd.f32 %v2194, %v2372
        %v2398 = vadd.f32 %v2195, %v2373
        %v2399 = vlaneseq
        %v2400 = vshrl.u32 %v2399, 7
        %v2401 = vsub.s32 1, %v2400
        %v2402 = vrot.slane %v1317, %v2401
        %v2403 = vmul.f32 %v1289, %v2402
        %v2404 = vmul.f32 %v1290, %v2402
        %v2405 = vmul.f32 %v1291, %v2402
        %v2406 = vmul.f32 %v1292, %v2402
        %v2407 = vmul.f32 %v1293, %v2402
        %v2408 = vmul.f32 %v1294, %v2402
        %v2409 = vmul.f32 %v1295, %v2402
        %v2410 = vmul.f32 %v1296, %v2402
        %v2411 = vmul.f32 %v1297, %v2402
        %v2412 = vmul.f32 %v1298, %v2402
        %v2413 = vmul.f32 %v1299, %v2402
        %v2414 = vmul.f32 %v1300, %v2402
        %v2415 = vmul.f32 %v1301, %v2402
        %v2416 = vmul.f32 %v1302, %v2402
        %v2417 = vmul.f32 %v1303, %v2402
        %v2418 = vmul.f32 %v1304, %v2402
        %v2419 = vmul.f32 %v1305, %v2402
        %v2420 = vmul.f32 %v1306, %v2402
        %v2421 = vmul.f32 %v1307, %v2402
        %v2422 = vmul.f32 %v1308, %v2402
        %v2423 = vmul.f32 %v1309, %v2402
        %v2424 = vmul.f32 %v1310, %v2402
        %v2425 = vmul.f32 %v1311, %v2402
        %v2426 = vmul.f32 %v1312, %v2402
        %v2427 = vmul.f32 %v1313, %v2402
        %v2428 = vadd.f32 %v2320, %v2403
        %v2429 = vadd.f32 %v2321, %v2404
        %v2430 = vadd.f32 %v2322, %v2405
        %v2431 = vadd.f32 %v2323, %v2406
        %v2432 = vadd.f32 %v2324, %v2407
        %v2433 = vadd.f32 %v2325, %v2408
        %v2434 = vadd.f32 %v2326, %v2409
        %v2435 = vadd.f32 %v2327, %v2410
        %v2436 = vadd.f32 %v2328, %v2411
        %v2437 = vadd.f32 %v2329, %v2412
        %v2438 = vadd.f32 %v2330, %v2413
        %v2439 = vadd.f32 %v2331, %v2414
        %v2440 = vadd.f32 %v2332, %v2415
        %v2441 = vadd.f32 %v2333, %v2416
        %v2442 = vadd.f32 %v2334, %v2417
        %v2443 = vadd.f32 %v2335, %v2418
        %v2444 = vadd.f32 %v2336, %v2419
        %v2445 = vadd.f32 %v2337, %v2420
        %v2446 = vadd.f32 %v2338, %v2421
        %v2447 = vadd.f32 %v2339, %v2422
        %v2448 = vadd.f32 %v2340, %v2423
        %v2449 = vadd.f32 %v2341, %v2424
        %v2450 = vadd.f32 %v2342, %v2425
        %v2451 = vadd.f32 %v2343, %v2426
        %v2452 = vadd.f32 %v2344, %v2427
        %v2453 = vlaneseq
        %v2454 = vshrl.u32 %v2453, 7
        %v2455 = vsub.s32 2, %v2454
        %v2456 = vrot.slane %v1317, %v2455
        %v2457 = vmul.f32 %v1289, %v2456
        %v2458 = vmul.f32 %v1290, %v2456
        %v2459 = vmul.f32 %v1291, %v2456
        %v2460 = vmul.f32 %v1292, %v2456
        %v2461 = vmul.f32 %v1293, %v2456
        %v2462 = vmul.f32 %v1294, %v2456
        %v2463 = vmul.f32 %v1295, %v2456
        %v2464 = vmul.f32 %v1296, %v2456
        %v2465 = vmul.f32 %v1297, %v2456
        %v2466 = vmul.f32 %v1298, %v2456
        %v2467 = vmul.f32 %v1299, %v2456
        %v2468 = vmul.f32 %v1300, %v2456
        %v2469 = vmul.f32 %v1301, %v2456
        %v2470 = vmul.f32 %v1302, %v2456
        %v2471 = vmul.f32 %v1303, %v2456
        %v2472 = vmul.f32 %v1304, %v2456
        %v2473 = vmul.f32 %v1305, %v2456
        %v2474 = vmul.f32 %v1306, %v2456
        %v2475 = vmul.f32 %v1307, %v2456
        %v2476 = vmul.f32 %v1308, %v2456
        %v2477 = vmul.f32 %v1309, %v2456
        %v2478 = vmul.f32 %v1310, %v2456
        %v2479 = vmul.f32 %v1311, %v2456
        %v2480 = vmul.f32 %v1312, %v2456
        %v2481 = vmul.f32 %v1313, %v2456
        %v2507 = vrot.slane %v2457, 2
        %v2508 = vrot.slane %v2458, 2
        %v2509 = vsel %vm1482, %v2507, %v2508
        %v2510 = vrot.slane %v2459, 2
        %v2511 = vsel %vm1482, %v2508, %v2510
        %v2512 = vrot.slane %v2460, 2
        %v2513 = vsel %vm1482, %v2510, %v2512
        %v2514 = vrot.slane %v2461, 2
        %v2515 = vsel %vm1482, %v2512, %v2514
        %v2516 = vrot.slane %v2462, 2
        %v2517 = vsel %vm1482, %v2514, %v2516
        %v2518 = vrot.slane %v2463, 2
        %v2519 = vsel %vm1482, %v2516, %v2518
        %v2520 = vrot.slane %v2464, 2
        %v2521 = vsel %vm1482, %v2518, %v2520
        %v2522 = vrot.slane %v2465, 2
        %v2523 = vsel %vm1482, %v2520, %v2522
        %v2524 = vrot.slane %v2466, 2
        %v2525 = vsel %vm1482, %v2522, %v2524
        %v2526 = vrot.slane %v2467, 2
        %v2527 = vsel %vm1482, %v2524, %v2526
        %v2528 = vrot.slane %v2468, 2
        %v2529 = vsel %vm1482, %v2526, %v2528
        %v2530 = vrot.slane %v2469, 2
        %v2531 = vsel %vm1482, %v2528, %v2530
        %v2532 = vrot.slane %v2470, 2
        %v2533 = vsel %vm1482, %v2530, %v2532
        %v2534 = vrot.slane %v2471, 2
        %v2535 = vsel %vm1482, %v2532, %v2534
        %v2536 = vrot.slane %v2472, 2
        %v2537 = vsel %vm1482, %v2534, %v2536
        %v2538 = vrot.slane %v2473, 2
        %v2539 = vsel %vm1482, %v2536, %v2538
        %v2540 = vrot.slane %v2474, 2
        %v2541 = vsel %vm1482, %v2538, %v2540
        %v2542 = vrot.slane %v2475, 2
        %v2543 = vsel %vm1482, %v2540, %v2542
        %v2544 = vrot.slane %v2476, 2
        %v2545 = vsel %vm1482, %v2542, %v2544
        %v2546 = vrot.slane %v2477, 2
        %v2547 = vsel %vm1482, %v2544, %v2546
        %v2548 = vrot.slane %v2478, 2
        %v2549 = vsel %vm1482, %v2546, %v2548
        %v2550 = vrot.slane %v2479, 2
        %v2551 = vsel %vm1482, %v2548, %v2550
        %v2552 = vrot.slane %v2480, 2
        %v2553 = vsel %vm1482, %v2550, %v2552
        %v2554 = vrot.slane %v2481, 2
        %v2555 = vsel %vm1482, %v2552, %v2554
        %v2581 = vadd.f32 %v2374, %v2509
        %v2582 = vadd.f32 %v2375, %v2511
        %v2583 = vadd.f32 %v2376, %v2513
        %v2584 = vadd.f32 %v2377, %v2515
        %v2585 = vadd.f32 %v2378, %v2517
        %v2586 = vadd.f32 %v2379, %v2519
        %v2587 = vadd.f32 %v2380, %v2521
        %v2588 = vadd.f32 %v2381, %v2523
        %v2589 = vadd.f32 %v2382, %v2525
        %v2590 = vadd.f32 %v2383, %v2527
        %v2591 = vadd.f32 %v2384, %v2529
        %v2592 = vadd.f32 %v2385, %v2531
        %v2593 = vadd.f32 %v2386, %v2533
        %v2594 = vadd.f32 %v2387, %v2535
        %v2595 = vadd.f32 %v2388, %v2537
        %v2596 = vadd.f32 %v2389, %v2539
        %v2597 = vadd.f32 %v2390, %v2541
        %v2598 = vadd.f32 %v2391, %v2543
        %v2599 = vadd.f32 %v2392, %v2545
        %v2600 = vadd.f32 %v2393, %v2547
        %v2601 = vadd.f32 %v2394, %v2549
        %v2602 = vadd.f32 %v2395, %v2551
        %v2603 = vadd.f32 %v2396, %v2553
        %v2604 = vadd.f32 %v2397, %v2555
        %v2605 = vadd.f32 %v2398, %v2554
        %v2606 = vlaneseq
        %v2607 = vshrl.u32 %v2606, 7
        %v2608 = vsub.s32 3, %v2607
        %v2609 = vrot.slane %v1317, %v2608
        %v2610 = vmul.f32 %v1289, %v2609
        %v2611 = vmul.f32 %v1290, %v2609
        %v2612 = vmul.f32 %v1291, %v2609
        %v2613 = vmul.f32 %v1292, %v2609
        %v2614 = vmul.f32 %v1293, %v2609
        %v2615 = vmul.f32 %v1294, %v2609
        %v2616 = vmul.f32 %v1295, %v2609
        %v2617 = vmul.f32 %v1296, %v2609
        %v2618 = vmul.f32 %v1297, %v2609
        %v2619 = vmul.f32 %v1298, %v2609
        %v2620 = vmul.f32 %v1299, %v2609
        %v2621 = vmul.f32 %v1300, %v2609
        %v2622 = vmul.f32 %v1301, %v2609
        %v2623 = vmul.f32 %v1302, %v2609
        %v2624 = vmul.f32 %v1303, %v2609
        %v2625 = vmul.f32 %v1304, %v2609
        %v2626 = vmul.f32 %v1305, %v2609
        %v2627 = vmul.f32 %v1306, %v2609
        %v2628 = vmul.f32 %v1307, %v2609
        %v2629 = vmul.f32 %v1308, %v2609
        %v2630 = vmul.f32 %v1309, %v2609
        %v2631 = vmul.f32 %v1310, %v2609
        %v2632 = vmul.f32 %v1311, %v2609
        %v2633 = vmul.f32 %v1312, %v2609
        %v2634 = vmul.f32 %v1313, %v2609
        %v2660 = vrot.slane %v2610, 2
        %v2661 = vrot.slane %v2611, 2
        %v2662 = vsel %vm1482, %v2660, %v2661
        %v2663 = vrot.slane %v2612, 2
        %v2664 = vsel %vm1482, %v2661, %v2663
        %v2665 = vrot.slane %v2613, 2
        %v2666 = vsel %vm1482, %v2663, %v2665
        %v2667 = vrot.slane %v2614, 2
        %v2668 = vsel %vm1482, %v2665, %v2667
        %v2669 = vrot.slane %v2615, 2
        %v2670 = vsel %vm1482, %v2667, %v2669
        %v2671 = vrot.slane %v2616, 2
        %v2672 = vsel %vm1482, %v2669, %v2671
        %v2673 = vrot.slane %v2617, 2
        %v2674 = vsel %vm1482, %v2671, %v2673
        %v2675 = vrot.slane %v2618, 2
        %v2676 = vsel %vm1482, %v2673, %v2675
        %v2677 = vrot.slane %v2619, 2
        %v2678 = vsel %vm1482, %v2675, %v2677
        %v2679 = vrot.slane %v2620, 2
        %v2680 = vsel %vm1482, %v2677, %v2679
        %v2681 = vrot.slane %v2621, 2
        %v2682 = vsel %vm1482, %v2679, %v2681
        %v2683 = vrot.slane %v2622, 2
        %v2684 = vsel %vm1482, %v2681, %v2683
        %v2685 = vrot.slane %v2623, 2
        %v2686 = vsel %vm1482, %v2683, %v2685
        %v2687 = vrot.slane %v2624, 2
        %v2688 = vsel %vm1482, %v2685, %v2687
        %v2689 = vrot.slane %v2625, 2
        %v2690 = vsel %vm1482, %v2687, %v2689
        %v2691 = vrot.slane %v2626, 2
        %v2692 = vsel %vm1482, %v2689, %v2691
        %v2693 = vrot.slane %v2627, 2
        %v2694 = vsel %vm1482, %v2691, %v2693
        %v2695 = vrot.slane %v2628, 2
        %v2696 = vsel %vm1482, %v2693, %v2695
        %v2697 = vrot.slane %v2629, 2
        %v2698 = vsel %vm1482, %v2695, %v2697
        %v2699 = vrot.slane %v2630, 2
        %v2700 = vsel %vm1482, %v2697, %v2699
        %v2701 = vrot.slane %v2631, 2
        %v2702 = vsel %vm1482, %v2699, %v2701
        %v2703 = vrot.slane %v2632, 2
        %v2704 = vsel %vm1482, %v2701, %v2703
        %v2705 = vrot.slane %v2633, 2
        %v2706 = vsel %vm1482, %v2703, %v2705
        %v2707 = vrot.slane %v2634, 2
        %v2708 = vsel %vm1482, %v2705, %v2707
        %v2734 = vadd.f32 %v2428, %v2662
        %v2735 = vadd.f32 %v2429, %v2664
        %v2736 = vadd.f32 %v2430, %v2666
        %v2737 = vadd.f32 %v2431, %v2668
        %v2738 = vadd.f32 %v2432, %v2670
        %v2739 = vadd.f32 %v2433, %v2672
        %v2740 = vadd.f32 %v2434, %v2674
        %v2741 = vadd.f32 %v2435, %v2676
        %v2742 = vadd.f32 %v2436, %v2678
        %v2743 = vadd.f32 %v2437, %v2680
        %v2744 = vadd.f32 %v2438, %v2682
        %v2745 = vadd.f32 %v2439, %v2684
        %v2746 = vadd.f32 %v2440, %v2686
        %v2747 = vadd.f32 %v2441, %v2688
        %v2748 = vadd.f32 %v2442, %v2690
        %v2749 = vadd.f32 %v2443, %v2692
        %v2750 = vadd.f32 %v2444, %v2694
        %v2751 = vadd.f32 %v2445, %v2696
        %v2752 = vadd.f32 %v2446, %v2698
        %v2753 = vadd.f32 %v2447, %v2700
        %v2754 = vadd.f32 %v2448, %v2702
        %v2755 = vadd.f32 %v2449, %v2704
        %v2756 = vadd.f32 %v2450, %v2706
        %v2757 = vadd.f32 %v2451, %v2708
        %v2758 = vadd.f32 %v2452, %v2707
        %v2759 = vlaneseq
        %v2760 = vshrl.u32 %v2759, 7
        %v2761 = vsub.s32 4, %v2760
        %v2762 = vrot.slane %v1317, %v2761
        %v2763 = vmul.f32 %v1289, %v2762
        %v2764 = vmul.f32 %v1290, %v2762
        %v2765 = vmul.f32 %v1291, %v2762
        %v2766 = vmul.f32 %v1292, %v2762
        %v2767 = vmul.f32 %v1293, %v2762
        %v2768 = vmul.f32 %v1294, %v2762
        %v2769 = vmul.f32 %v1295, %v2762
        %v2770 = vmul.f32 %v1296, %v2762
        %v2771 = vmul.f32 %v1297, %v2762
        %v2772 = vmul.f32 %v1298, %v2762
        %v2773 = vmul.f32 %v1299, %v2762
        %v2774 = vmul.f32 %v1300, %v2762
        %v2775 = vmul.f32 %v1301, %v2762
        %v2776 = vmul.f32 %v1302, %v2762
        %v2777 = vmul.f32 %v1303, %v2762
        %v2778 = vmul.f32 %v1304, %v2762
        %v2779 = vmul.f32 %v1305, %v2762
        %v2780 = vmul.f32 %v1306, %v2762
        %v2781 = vmul.f32 %v1307, %v2762
        %v2782 = vmul.f32 %v1308, %v2762
        %v2783 = vmul.f32 %v1309, %v2762
        %v2784 = vmul.f32 %v1310, %v2762
        %v2785 = vmul.f32 %v1311, %v2762
        %v2786 = vmul.f32 %v1312, %v2762
        %v2787 = vmul.f32 %v1313, %v2762
        %v2813 = vrot.slane %v2763, 4
        %v2814 = vrot.slane %v2764, 4
        %v2815 = vsel %vm1789, %v2813, %v2814
        %v2816 = vrot.slane %v2765, 4
        %v2817 = vsel %vm1789, %v2814, %v2816
        %v2818 = vrot.slane %v2766, 4
        %v2819 = vsel %vm1789, %v2816, %v2818
        %v2820 = vrot.slane %v2767, 4
        %v2821 = vsel %vm1789, %v2818, %v2820
        %v2822 = vrot.slane %v2768, 4
        %v2823 = vsel %vm1789, %v2820, %v2822
        %v2824 = vrot.slane %v2769, 4
        %v2825 = vsel %vm1789, %v2822, %v2824
        %v2826 = vrot.slane %v2770, 4
        %v2827 = vsel %vm1789, %v2824, %v2826
        %v2828 = vrot.slane %v2771, 4
        %v2829 = vsel %vm1789, %v2826, %v2828
        %v2830 = vrot.slane %v2772, 4
        %v2831 = vsel %vm1789, %v2828, %v2830
        %v2832 = vrot.slane %v2773, 4
        %v2833 = vsel %vm1789, %v2830, %v2832
        %v2834 = vrot.slane %v2774, 4
        %v2835 = vsel %vm1789, %v2832, %v2834
        %v2836 = vrot.slane %v2775, 4
        %v2837 = vsel %vm1789, %v2834, %v2836
        %v2838 = vrot.slane %v2776, 4
        %v2839 = vsel %vm1789, %v2836, %v2838
        %v2840 = vrot.slane %v2777, 4
        %v2841 = vsel %vm1789, %v2838, %v2840
        %v2842 = vrot.slane %v2778, 4
        %v2843 = vsel %vm1789, %v2840, %v2842
        %v2844 = vrot.slane %v2779, 4
        %v2845 = vsel %vm1789, %v2842, %v2844
        %v2846 = vrot.slane %v2780, 4
        %v2847 = vsel %vm1789, %v2844, %v2846
        %v2848 = vrot.slane %v2781, 4
        %v2849 = vsel %vm1789, %v2846, %v2848
        %v2850 = vrot.slane %v2782, 4
        %v2851 = vsel %vm1789, %v2848, %v2850
        %v2852 = vrot.slane %v2783, 4
        %v2853 = vsel %vm1789, %v2850, %v2852
        %v2854 = vrot.slane %v2784, 4
        %v2855 = vsel %vm1789, %v2852, %v2854
        %v2856 = vrot.slane %v2785, 4
        %v2857 = vsel %vm1789, %v2854, %v2856
        %v2858 = vrot.slane %v2786, 4
        %v2859 = vsel %vm1789, %v2856, %v2858
        %v2860 = vrot.slane %v2787, 4
        %v2861 = vsel %vm1789, %v2858, %v2860
        %v2887 = vadd.f32 %v2581, %v2815
        %v2888 = vadd.f32 %v2582, %v2817
        %v2889 = vadd.f32 %v2583, %v2819
        %v2890 = vadd.f32 %v2584, %v2821
        %v2891 = vadd.f32 %v2585, %v2823
        %v2892 = vadd.f32 %v2586, %v2825
        %v2893 = vadd.f32 %v2587, %v2827
        %v2894 = vadd.f32 %v2588, %v2829
        %v2895 = vadd.f32 %v2589, %v2831
        %v2896 = vadd.f32 %v2590, %v2833
        %v2897 = vadd.f32 %v2591, %v2835
        %v2898 = vadd.f32 %v2592, %v2837
        %v2899 = vadd.f32 %v2593, %v2839
        %v2900 = vadd.f32 %v2594, %v2841
        %v2901 = vadd.f32 %v2595, %v2843
        %v2902 = vadd.f32 %v2596, %v2845
        %v2903 = vadd.f32 %v2597, %v2847
        %v2904 = vadd.f32 %v2598, %v2849
        %v2905 = vadd.f32 %v2599, %v2851
        %v2906 = vadd.f32 %v2600, %v2853
        %v2907 = vadd.f32 %v2601, %v2855
        %v2908 = vadd.f32 %v2602, %v2857
        %v2909 = vadd.f32 %v2603, %v2859
        %v2910 = vadd.f32 %v2604, %v2861
        %v2911 = vadd.f32 %v2605, %v2860
        %v2912 = vlaneseq
        %v2913 = vshrl.u32 %v2912, 7
        %v2914 = vsub.s32 5, %v2913
        %v2915 = vrot.slane %v1317, %v2914
        %v2916 = vmul.f32 %v1289, %v2915
        %v2917 = vmul.f32 %v1290, %v2915
        %v2918 = vmul.f32 %v1291, %v2915
        %v2919 = vmul.f32 %v1292, %v2915
        %v2920 = vmul.f32 %v1293, %v2915
        %v2921 = vmul.f32 %v1294, %v2915
        %v2922 = vmul.f32 %v1295, %v2915
        %v2923 = vmul.f32 %v1296, %v2915
        %v2924 = vmul.f32 %v1297, %v2915
        %v2925 = vmul.f32 %v1298, %v2915
        %v2926 = vmul.f32 %v1299, %v2915
        %v2927 = vmul.f32 %v1300, %v2915
        %v2928 = vmul.f32 %v1301, %v2915
        %v2929 = vmul.f32 %v1302, %v2915
        %v2930 = vmul.f32 %v1303, %v2915
        %v2931 = vmul.f32 %v1304, %v2915
        %v2932 = vmul.f32 %v1305, %v2915
        %v2933 = vmul.f32 %v1306, %v2915
        %v2934 = vmul.f32 %v1307, %v2915
        %v2935 = vmul.f32 %v1308, %v2915
        %v2936 = vmul.f32 %v1309, %v2915
        %v2937 = vmul.f32 %v1310, %v2915
        %v2938 = vmul.f32 %v1311, %v2915
        %v2939 = vmul.f32 %v1312, %v2915
        %v2940 = vmul.f32 %v1313, %v2915
        %v2966 = vrot.slane %v2916, 4
        %v2967 = vrot.slane %v2917, 4
        %v2968 = vsel %vm1789, %v2966, %v2967
        %v2969 = vrot.slane %v2918, 4
        %v2970 = vsel %vm1789, %v2967, %v2969
        %v2971 = vrot.slane %v2919, 4
        %v2972 = vsel %vm1789, %v2969, %v2971
        %v2973 = vrot.slane %v2920, 4
        %v2974 = vsel %vm1789, %v2971, %v2973
        %v2975 = vrot.slane %v2921, 4
        %v2976 = vsel %vm1789, %v2973, %v2975
        %v2977 = vrot.slane %v2922, 4
        %v2978 = vsel %vm1789, %v2975, %v2977
        %v2979 = vrot.slane %v2923, 4
        %v2980 = vsel %vm1789, %v2977, %v2979
        %v2981 = vrot.slane %v2924, 4
        %v2982 = vsel %vm1789, %v2979, %v2981
        %v2983 = vrot.slane %v2925, 4
        %v2984 = vsel %vm1789, %v2981, %v2983
        %v2985 = vrot.slane %v2926, 4
        %v2986 = vsel %vm1789, %v2983, %v2985
        %v2987 = vrot.slane %v2927, 4
        %v2988 = vsel %vm1789, %v2985, %v2987
        %v2989 = vrot.slane %v2928, 4
        %v2990 = vsel %vm1789, %v2987, %v2989
        %v2991 = vrot.slane %v2929, 4
        %v2992 = vsel %vm1789, %v2989, %v2991
        %v2993 = vrot.slane %v2930, 4
        %v2994 = vsel %vm1789, %v2991, %v2993
        %v2995 = vrot.slane %v2931, 4
        %v2996 = vsel %vm1789, %v2993, %v2995
        %v2997 = vrot.slane %v2932, 4
        %v2998 = vsel %vm1789, %v2995, %v2997
        %v2999 = vrot.slane %v2933, 4
        %v3000 = vsel %vm1789, %v2997, %v2999
        %v3001 = vrot.slane %v2934, 4
        %v3002 = vsel %vm1789, %v2999, %v3001
        %v3003 = vrot.slane %v2935, 4
        %v3004 = vsel %vm1789, %v3001, %v3003
        %v3005 = vrot.slane %v2936, 4
        %v3006 = vsel %vm1789, %v3003, %v3005
        %v3007 = vrot.slane %v2937, 4
        %v3008 = vsel %vm1789, %v3005, %v3007
        %v3009 = vrot.slane %v2938, 4
        %v3010 = vsel %vm1789, %v3007, %v3009
        %v3011 = vrot.slane %v2939, 4
        %v3012 = vsel %vm1789, %v3009, %v3011
        %v3013 = vrot.slane %v2940, 4
        %v3014 = vsel %vm1789, %v3011, %v3013
        %v3040 = vadd.f32 %v2734, %v2968
        %v3041 = vadd.f32 %v2735, %v2970
        %v3042 = vadd.f32 %v2736, %v2972
        %v3043 = vadd.f32 %v2737, %v2974
        %v3044 = vadd.f32 %v2738, %v2976
        %v3045 = vadd.f32 %v2739, %v2978
        %v3046 = vadd.f32 %v2740, %v2980
        %v3047 = vadd.f32 %v2741, %v2982
        %v3048 = vadd.f32 %v2742, %v2984
        %v3049 = vadd.f32 %v2743, %v2986
        %v3050 = vadd.f32 %v2744, %v2988
        %v3051 = vadd.f32 %v2745, %v2990
        %v3052 = vadd.f32 %v2746, %v2992
        %v3053 = vadd.f32 %v2747, %v2994
        %v3054 = vadd.f32 %v2748, %v2996
        %v3055 = vadd.f32 %v2749, %v2998
        %v3056 = vadd.f32 %v2750, %v3000
        %v3057 = vadd.f32 %v2751, %v3002
        %v3058 = vadd.f32 %v2752, %v3004
        %v3059 = vadd.f32 %v2753, %v3006
        %v3060 = vadd.f32 %v2754, %v3008
        %v3061 = vadd.f32 %v2755, %v3010
        %v3062 = vadd.f32 %v2756, %v3012
        %v3063 = vadd.f32 %v2757, %v3014
        %v3064 = vadd.f32 %v2758, %v3013
        %v3065 = vlaneseq
        %v3066 = vshrl.u32 %v3065, 7
        %v3067 = vsub.s32 6, %v3066
        %v3068 = vrot.slane %v1317, %v3067
        %v3069 = vmul.f32 %v1289, %v3068
        %v3070 = vmul.f32 %v1290, %v3068
        %v3071 = vmul.f32 %v1291, %v3068
        %v3072 = vmul.f32 %v1292, %v3068
        %v3073 = vmul.f32 %v1293, %v3068
        %v3074 = vmul.f32 %v1294, %v3068
        %v3075 = vmul.f32 %v1295, %v3068
        %v3076 = vmul.f32 %v1296, %v3068
        %v3077 = vmul.f32 %v1297, %v3068
        %v3078 = vmul.f32 %v1298, %v3068
        %v3079 = vmul.f32 %v1299, %v3068
        %v3080 = vmul.f32 %v1300, %v3068
        %v3081 = vmul.f32 %v1301, %v3068
        %v3082 = vmul.f32 %v1302, %v3068
        %v3083 = vmul.f32 %v1303, %v3068
        %v3084 = vmul.f32 %v1304, %v3068
        %v3085 = vmul.f32 %v1305, %v3068
        %v3086 = vmul.f32 %v1306, %v3068
        %v3087 = vmul.f32 %v1307, %v3068
        %v3088 = vmul.f32 %v1308, %v3068
        %v3089 = vmul.f32 %v1309, %v3068
        %v3090 = vmul.f32 %v1310, %v3068
        %v3091 = vmul.f32 %v1311, %v3068
        %v3092 = vmul.f32 %v1312, %v3068
        %v3093 = vmul.f32 %v1313, %v3068
        %v3119 = vrot.slane %v3069, 6
        %v3120 = vrot.slane %v3070, 6
        %v3121 = vsel %vm2096, %v3119, %v3120
        %v3122 = vrot.slane %v3071, 6
        %v3123 = vsel %vm2096, %v3120, %v3122
        %v3124 = vrot.slane %v3072, 6
        %v3125 = vsel %vm2096, %v3122, %v3124
        %v3126 = vrot.slane %v3073, 6
        %v3127 = vsel %vm2096, %v3124, %v3126
        %v3128 = vrot.slane %v3074, 6
        %v3129 = vsel %vm2096, %v3126, %v3128
        %v3130 = vrot.slane %v3075, 6
        %v3131 = vsel %vm2096, %v3128, %v3130
        %v3132 = vrot.slane %v3076, 6
        %v3133 = vsel %vm2096, %v3130, %v3132
        %v3134 = vrot.slane %v3077, 6
        %v3135 = vsel %vm2096, %v3132, %v3134
        %v3136 = vrot.slane %v3078, 6
        %v3137 = vsel %vm2096, %v3134, %v3136
        %v3138 = vrot.slane %v3079, 6
        %v3139 = vsel %vm2096, %v3136, %v3138
        %v3140 = vrot.slane %v3080, 6
        %v3141 = vsel %vm2096, %v3138, %v3140
        %v3142 = vrot.slane %v3081, 6
        %v3143 = vsel %vm2096, %v3140, %v3142
        %v3144 = vrot.slane %v3082, 6
        %v3145 = vsel %vm2096, %v3142, %v3144
        %v3146 = vrot.slane %v3083, 6
        %v3147 = vsel %vm2096, %v3144, %v3146
        %v3148 = vrot.slane %v3084, 6
        %v3149 = vsel %vm2096, %v3146, %v3148
        %v3150 = vrot.slane %v3085, 6
        %v3151 = vsel %vm2096, %v3148, %v3150
        %v3152 = vrot.slane %v3086, 6
        %v3153 = vsel %vm2096, %v3150, %v3152
        %v3154 = vrot.slane %v3087, 6
        %v3155 = vsel %vm2096, %v3152, %v3154
        %v3156 = vrot.slane %v3088, 6
        %v3157 = vsel %vm2096, %v3154, %v3156
        %v3158 = vrot.slane %v3089, 6
        %v3159 = vsel %vm2096, %v3156, %v3158
        %v3160 = vrot.slane %v3090, 6
        %v3161 = vsel %vm2096, %v3158, %v3160
        %v3162 = vrot.slane %v3091, 6
        %v3163 = vsel %vm2096, %v3160, %v3162
        %v3164 = vrot.slane %v3092, 6
        %v3165 = vsel %vm2096, %v3162, %v3164
        %v3166 = vrot.slane %v3093, 6
        %v3167 = vsel %vm2096, %v3164, %v3166
        %v3193 = vadd.f32 %v2887, %v3121
        %v3194 = vadd.f32 %v2888, %v3123
        %v3195 = vadd.f32 %v2889, %v3125
        %v3196 = vadd.f32 %v2890, %v3127
        %v3197 = vadd.f32 %v2891, %v3129
        %v3198 = vadd.f32 %v2892, %v3131
        %v3199 = vadd.f32 %v2893, %v3133
        %v3200 = vadd.f32 %v2894, %v3135
        %v3201 = vadd.f32 %v2895, %v3137
        %v3202 = vadd.f32 %v2896, %v3139
        %v3203 = vadd.f32 %v2897, %v3141
        %v3204 = vadd.f32 %v2898, %v3143
        %v3205 = vadd.f32 %v2899, %v3145
        %v3206 = vadd.f32 %v2900, %v3147
        %v3207 = vadd.f32 %v2901, %v3149
        %v3208 = vadd.f32 %v2902, %v3151
        %v3209 = vadd.f32 %v2903, %v3153
        %v3210 = vadd.f32 %v2904, %v3155
        %v3211 = vadd.f32 %v2905, %v3157
        %v3212 = vadd.f32 %v2906, %v3159
        %v3213 = vadd.f32 %v2907, %v3161
        %v3214 = vadd.f32 %v2908, %v3163
        %v3215 = vadd.f32 %v2909, %v3165
        %v3216 = vadd.f32 %v2910, %v3167
        %v3217 = vadd.f32 %v2911, %v3166
        %v3218 = vlaneseq
        %v3219 = vshrl.u32 %v3218, 7
        %v3220 = vsub.s32 7, %v3219
        %v3221 = vrot.slane %v1317, %v3220
        %v3222 = vmul.f32 %v1290, %v3221
        %v3223 = vmul.f32 %v1291, %v3221
        %v3224 = vmul.f32 %v1292, %v3221
        %v3225 = vmul.f32 %v1293, %v3221
        %v3226 = vmul.f32 %v1294, %v3221
        %v3227 = vmul.f32 %v1295, %v3221
        %v3228 = vmul.f32 %v1296, %v3221
        %v3229 = vmul.f32 %v1297, %v3221
        %v3230 = vmul.f32 %v1298, %v3221
        %v3231 = vmul.f32 %v1299, %v3221
        %v3232 = vmul.f32 %v1300, %v3221
        %v3233 = vmul.f32 %v1301, %v3221
        %v3234 = vmul.f32 %v1302, %v3221
        %v3235 = vmul.f32 %v1303, %v3221
        %v3236 = vmul.f32 %v1304, %v3221
        %v3237 = vmul.f32 %v1305, %v3221
        %v3238 = vmul.f32 %v1306, %v3221
        %v3239 = vmul.f32 %v1307, %v3221
        %v3240 = vmul.f32 %v1308, %v3221
        %v3241 = vmul.f32 %v1309, %v3221
        %v3242 = vmul.f32 %v1310, %v3221
        %v3243 = vmul.f32 %v1311, %v3221
        %v3244 = vmul.f32 %v1312, %v3221
        %v3245 = vmul.f32 %v1313, %v3221
        %v3270 = vrot.slane %v3222, 6
        %v3271 = vrot.slane %v3223, 6
        %v3272 = vsel %vm2096, %v3270, %v3271
        %v3273 = vrot.slane %v3224, 6
        %v3274 = vsel %vm2096, %v3271, %v3273
        %v3275 = vrot.slane %v3225, 6
        %v3276 = vsel %vm2096, %v3273, %v3275
        %v3277 = vrot.slane %v3226, 6
        %v3278 = vsel %vm2096, %v3275, %v3277
        %v3279 = vrot.slane %v3227, 6
        %v3280 = vsel %vm2096, %v3277, %v3279
        %v3281 = vrot.slane %v3228, 6
        %v3282 = vsel %vm2096, %v3279, %v3281
        %v3283 = vrot.slane %v3229, 6
        %v3284 = vsel %vm2096, %v3281, %v3283
        %v3285 = vrot.slane %v3230, 6
        %v3286 = vsel %vm2096, %v3283, %v3285
        %v3287 = vrot.slane %v3231, 6
        %v3288 = vsel %vm2096, %v3285, %v3287
        %v3289 = vrot.slane %v3232, 6
        %v3290 = vsel %vm2096, %v3287, %v3289
        %v3291 = vrot.slane %v3233, 6
        %v3292 = vsel %vm2096, %v3289, %v3291
        %v3293 = vrot.slane %v3234, 6
        %v3294 = vsel %vm2096, %v3291, %v3293
        %v3295 = vrot.slane %v3235, 6
        %v3296 = vsel %vm2096, %v3293, %v3295
        %v3297 = vrot.slane %v3236, 6
        %v3298 = vsel %vm2096, %v3295, %v3297
        %v3299 = vrot.slane %v3237, 6
        %v3300 = vsel %vm2096, %v3297, %v3299
        %v3301 = vrot.slane %v3238, 6
        %v3302 = vsel %vm2096, %v3299, %v3301
        %v3303 = vrot.slane %v3239, 6
        %v3304 = vsel %vm2096, %v3301, %v3303
        %v3305 = vrot.slane %v3240, 6
        %v3306 = vsel %vm2096, %v3303, %v3305
        %v3307 = vrot.slane %v3241, 6
        %v3308 = vsel %vm2096, %v3305, %v3307
        %v3309 = vrot.slane %v3242, 6
        %v3310 = vsel %vm2096, %v3307, %v3309
        %v3311 = vrot.slane %v3243, 6
        %v3312 = vsel %vm2096, %v3309, %v3311
        %v3313 = vrot.slane %v3244, 6
        %v3314 = vsel %vm2096, %v3311, %v3313
        %v3315 = vrot.slane %v3245, 6
        %v3316 = vsel %vm2096, %v3313, %v3315
        %v3342 = vadd.f32 %v3040, %v3270
        %v3343 = vadd.f32 %v3041, %v3272
        %v3344 = vadd.f32 %v3042, %v3274
        %v3345 = vadd.f32 %v3043, %v3276
        %v3346 = vadd.f32 %v3044, %v3278
        %v3347 = vadd.f32 %v3045, %v3280
        %v3348 = vadd.f32 %v3046, %v3282
        %v3349 = vadd.f32 %v3047, %v3284
        %v3350 = vadd.f32 %v3048, %v3286
        %v3351 = vadd.f32 %v3049, %v3288
        %v3352 = vadd.f32 %v3050, %v3290
        %v3353 = vadd.f32 %v3051, %v3292
        %v3354 = vadd.f32 %v3052, %v3294
        %v3355 = vadd.f32 %v3053, %v3296
        %v3356 = vadd.f32 %v3054, %v3298
        %v3357 = vadd.f32 %v3055, %v3300
        %v3358 = vadd.f32 %v3056, %v3302
        %v3359 = vadd.f32 %v3057, %v3304
        %v3360 = vadd.f32 %v3058, %v3306
        %v3361 = vadd.f32 %v3059, %v3308
        %v3362 = vadd.f32 %v3060, %v3310
        %v3363 = vadd.f32 %v3061, %v3312
        %v3364 = vadd.f32 %v3062, %v3314
        %v3365 = vadd.f32 %v3063, %v3316
        %v3366 = vadd.f32 %v3064, %v3315
        %v3367 = vlaneseq
        %v3368 = vshrl.u32 %v3367, 7
        %v3369 = vsub.s32 0, %v3368
        %v3370 = vrot.slane %v1318, %v3369
        %v3371 = vmul.f32 %v1290, %v3370
        %v3372 = vmul.f32 %v1291, %v3370
        %v3373 = vmul.f32 %v1292, %v3370
        %v3374 = vmul.f32 %v1293, %v3370
        %v3375 = vmul.f32 %v1294, %v3370
        %v3376 = vmul.f32 %v1295, %v3370
        %v3377 = vmul.f32 %v1296, %v3370
        %v3378 = vmul.f32 %v1297, %v3370
        %v3379 = vmul.f32 %v1298, %v3370
        %v3380 = vmul.f32 %v1299, %v3370
        %v3381 = vmul.f32 %v1300, %v3370
        %v3382 = vmul.f32 %v1301, %v3370
        %v3383 = vmul.f32 %v1302, %v3370
        %v3384 = vmul.f32 %v1303, %v3370
        %v3385 = vmul.f32 %v1304, %v3370
        %v3386 = vmul.f32 %v1305, %v3370
        %v3387 = vmul.f32 %v1306, %v3370
        %v3388 = vmul.f32 %v1307, %v3370
        %v3389 = vmul.f32 %v1308, %v3370
        %v3390 = vmul.f32 %v1309, %v3370
        %v3391 = vmul.f32 %v1310, %v3370
        %v3392 = vmul.f32 %v1311, %v3370
        %v3393 = vmul.f32 %v1312, %v3370
        %v3394 = vmul.f32 %v1313, %v3370
        %v3395 = vmul.f32 %v1314, %v3370
        %v3396 = vadd.f32 %v3193, %v3371
        %v3397 = vadd.f32 %v3194, %v3372
        %v3398 = vadd.f32 %v3195, %v3373
        %v3399 = vadd.f32 %v3196, %v3374
        %v3400 = vadd.f32 %v3197, %v3375
        %v3401 = vadd.f32 %v3198, %v3376
        %v3402 = vadd.f32 %v3199, %v3377
        %v3403 = vadd.f32 %v3200, %v3378
        %v3404 = vadd.f32 %v3201, %v3379
        %v3405 = vadd.f32 %v3202, %v3380
        %v3406 = vadd.f32 %v3203, %v3381
        %v3407 = vadd.f32 %v3204, %v3382
        %v3408 = vadd.f32 %v3205, %v3383
        %v3409 = vadd.f32 %v3206, %v3384
        %v3410 = vadd.f32 %v3207, %v3385
        %v3411 = vadd.f32 %v3208, %v3386
        %v3412 = vadd.f32 %v3209, %v3387
        %v3413 = vadd.f32 %v3210, %v3388
        %v3414 = vadd.f32 %v3211, %v3389
        %v3415 = vadd.f32 %v3212, %v3390
        %v3416 = vadd.f32 %v3213, %v3391
        %v3417 = vadd.f32 %v3214, %v3392
        %v3418 = vadd.f32 %v3215, %v3393
        %v3419 = vadd.f32 %v3216, %v3394
        %v3420 = vadd.f32 %v3217, %v3395
        %v3421 = vlaneseq
        %v3422 = vshrl.u32 %v3421, 7
        %v3423 = vsub.s32 1, %v3422
        %v3424 = vrot.slane %v1318, %v3423
        %v3425 = vmul.f32 %v1290, %v3424
        %v3426 = vmul.f32 %v1291, %v3424
        %v3427 = vmul.f32 %v1292, %v3424
        %v3428 = vmul.f32 %v1293, %v3424
        %v3429 = vmul.f32 %v1294, %v3424
        %v3430 = vmul.f32 %v1295, %v3424
        %v3431 = vmul.f32 %v1296, %v3424
        %v3432 = vmul.f32 %v1297, %v3424
        %v3433 = vmul.f32 %v1298, %v3424
        %v3434 = vmul.f32 %v1299, %v3424
        %v3435 = vmul.f32 %v1300, %v3424
        %v3436 = vmul.f32 %v1301, %v3424
        %v3437 = vmul.f32 %v1302, %v3424
        %v3438 = vmul.f32 %v1303, %v3424
        %v3439 = vmul.f32 %v1304, %v3424
        %v3440 = vmul.f32 %v1305, %v3424
        %v3441 = vmul.f32 %v1306, %v3424
        %v3442 = vmul.f32 %v1307, %v3424
        %v3443 = vmul.f32 %v1308, %v3424
        %v3444 = vmul.f32 %v1309, %v3424
        %v3445 = vmul.f32 %v1310, %v3424
        %v3446 = vmul.f32 %v1311, %v3424
        %v3447 = vmul.f32 %v1312, %v3424
        %v3448 = vmul.f32 %v1313, %v3424
        %v3449 = vmul.f32 %v1314, %v3424
        %v3450 = vadd.f32 %v3342, %v3425
        %v3451 = vadd.f32 %v3343, %v3426
        %v3452 = vadd.f32 %v3344, %v3427
        %v3453 = vadd.f32 %v3345, %v3428
        %v3454 = vadd.f32 %v3346, %v3429
        %v3455 = vadd.f32 %v3347, %v3430
        %v3456 = vadd.f32 %v3348, %v3431
        %v3457 = vadd.f32 %v3349, %v3432
        %v3458 = vadd.f32 %v3350, %v3433
        %v3459 = vadd.f32 %v3351, %v3434
        %v3460 = vadd.f32 %v3352, %v3435
        %v3461 = vadd.f32 %v3353, %v3436
        %v3462 = vadd.f32 %v3354, %v3437
        %v3463 = vadd.f32 %v3355, %v3438
        %v3464 = vadd.f32 %v3356, %v3439
        %v3465 = vadd.f32 %v3357, %v3440
        %v3466 = vadd.f32 %v3358, %v3441
        %v3467 = vadd.f32 %v3359, %v3442
        %v3468 = vadd.f32 %v3360, %v3443
        %v3469 = vadd.f32 %v3361, %v3444
        %v3470 = vadd.f32 %v3362, %v3445
        %v3471 = vadd.f32 %v3363, %v3446
        %v3472 = vadd.f32 %v3364, %v3447
        %v3473 = vadd.f32 %v3365, %v3448
        %v3474 = vadd.f32 %v3366, %v3449
        %v3475 = vlaneseq
        %v3476 = vshrl.u32 %v3475, 7
        %v3477 = vsub.s32 2, %v3476
        %v3478 = vrot.slane %v1318, %v3477
        %v3479 = vmul.f32 %v1290, %v3478
        %v3480 = vmul.f32 %v1291, %v3478
        %v3481 = vmul.f32 %v1292, %v3478
        %v3482 = vmul.f32 %v1293, %v3478
        %v3483 = vmul.f32 %v1294, %v3478
        %v3484 = vmul.f32 %v1295, %v3478
        %v3485 = vmul.f32 %v1296, %v3478
        %v3486 = vmul.f32 %v1297, %v3478
        %v3487 = vmul.f32 %v1298, %v3478
        %v3488 = vmul.f32 %v1299, %v3478
        %v3489 = vmul.f32 %v1300, %v3478
        %v3490 = vmul.f32 %v1301, %v3478
        %v3491 = vmul.f32 %v1302, %v3478
        %v3492 = vmul.f32 %v1303, %v3478
        %v3493 = vmul.f32 %v1304, %v3478
        %v3494 = vmul.f32 %v1305, %v3478
        %v3495 = vmul.f32 %v1306, %v3478
        %v3496 = vmul.f32 %v1307, %v3478
        %v3497 = vmul.f32 %v1308, %v3478
        %v3498 = vmul.f32 %v1309, %v3478
        %v3499 = vmul.f32 %v1310, %v3478
        %v3500 = vmul.f32 %v1311, %v3478
        %v3501 = vmul.f32 %v1312, %v3478
        %v3502 = vmul.f32 %v1313, %v3478
        %v3503 = vmul.f32 %v1314, %v3478
        %v3529 = vrot.slane %v3479, 2
        %v3530 = vrot.slane %v3480, 2
        %v3531 = vsel %vm1482, %v3529, %v3530
        %v3532 = vrot.slane %v3481, 2
        %v3533 = vsel %vm1482, %v3530, %v3532
        %v3534 = vrot.slane %v3482, 2
        %v3535 = vsel %vm1482, %v3532, %v3534
        %v3536 = vrot.slane %v3483, 2
        %v3537 = vsel %vm1482, %v3534, %v3536
        %v3538 = vrot.slane %v3484, 2
        %v3539 = vsel %vm1482, %v3536, %v3538
        %v3540 = vrot.slane %v3485, 2
        %v3541 = vsel %vm1482, %v3538, %v3540
        %v3542 = vrot.slane %v3486, 2
        %v3543 = vsel %vm1482, %v3540, %v3542
        %v3544 = vrot.slane %v3487, 2
        %v3545 = vsel %vm1482, %v3542, %v3544
        %v3546 = vrot.slane %v3488, 2
        %v3547 = vsel %vm1482, %v3544, %v3546
        %v3548 = vrot.slane %v3489, 2
        %v3549 = vsel %vm1482, %v3546, %v3548
        %v3550 = vrot.slane %v3490, 2
        %v3551 = vsel %vm1482, %v3548, %v3550
        %v3552 = vrot.slane %v3491, 2
        %v3553 = vsel %vm1482, %v3550, %v3552
        %v3554 = vrot.slane %v3492, 2
        %v3555 = vsel %vm1482, %v3552, %v3554
        %v3556 = vrot.slane %v3493, 2
        %v3557 = vsel %vm1482, %v3554, %v3556
        %v3558 = vrot.slane %v3494, 2
        %v3559 = vsel %vm1482, %v3556, %v3558
        %v3560 = vrot.slane %v3495, 2
        %v3561 = vsel %vm1482, %v3558, %v3560
        %v3562 = vrot.slane %v3496, 2
        %v3563 = vsel %vm1482, %v3560, %v3562
        %v3564 = vrot.slane %v3497, 2
        %v3565 = vsel %vm1482, %v3562, %v3564
        %v3566 = vrot.slane %v3498, 2
        %v3567 = vsel %vm1482, %v3564, %v3566
        %v3568 = vrot.slane %v3499, 2
        %v3569 = vsel %vm1482, %v3566, %v3568
        %v3570 = vrot.slane %v3500, 2
        %v3571 = vsel %vm1482, %v3568, %v3570
        %v3572 = vrot.slane %v3501, 2
        %v3573 = vsel %vm1482, %v3570, %v3572
        %v3574 = vrot.slane %v3502, 2
        %v3575 = vsel %vm1482, %v3572, %v3574
        %v3576 = vrot.slane %v3503, 2
        %v3577 = vsel %vm1482, %v3574, %v3576
        %v3603 = vadd.f32 %v3396, %v3531
        %v3604 = vadd.f32 %v3397, %v3533
        %v3605 = vadd.f32 %v3398, %v3535
        %v3606 = vadd.f32 %v3399, %v3537
        %v3607 = vadd.f32 %v3400, %v3539
        %v3608 = vadd.f32 %v3401, %v3541
        %v3609 = vadd.f32 %v3402, %v3543
        %v3610 = vadd.f32 %v3403, %v3545
        %v3611 = vadd.f32 %v3404, %v3547
        %v3612 = vadd.f32 %v3405, %v3549
        %v3613 = vadd.f32 %v3406, %v3551
        %v3614 = vadd.f32 %v3407, %v3553
        %v3615 = vadd.f32 %v3408, %v3555
        %v3616 = vadd.f32 %v3409, %v3557
        %v3617 = vadd.f32 %v3410, %v3559
        %v3618 = vadd.f32 %v3411, %v3561
        %v3619 = vadd.f32 %v3412, %v3563
        %v3620 = vadd.f32 %v3413, %v3565
        %v3621 = vadd.f32 %v3414, %v3567
        %v3622 = vadd.f32 %v3415, %v3569
        %v3623 = vadd.f32 %v3416, %v3571
        %v3624 = vadd.f32 %v3417, %v3573
        %v3625 = vadd.f32 %v3418, %v3575
        %v3626 = vadd.f32 %v3419, %v3577
        %v3627 = vadd.f32 %v3420, %v3576
        %v3628 = vlaneseq
        %v3629 = vshrl.u32 %v3628, 7
        %v3630 = vsub.s32 3, %v3629
        %v3631 = vrot.slane %v1318, %v3630
        %v3632 = vmul.f32 %v1290, %v3631
        %v3633 = vmul.f32 %v1291, %v3631
        %v3634 = vmul.f32 %v1292, %v3631
        %v3635 = vmul.f32 %v1293, %v3631
        %v3636 = vmul.f32 %v1294, %v3631
        %v3637 = vmul.f32 %v1295, %v3631
        %v3638 = vmul.f32 %v1296, %v3631
        %v3639 = vmul.f32 %v1297, %v3631
        %v3640 = vmul.f32 %v1298, %v3631
        %v3641 = vmul.f32 %v1299, %v3631
        %v3642 = vmul.f32 %v1300, %v3631
        %v3643 = vmul.f32 %v1301, %v3631
        %v3644 = vmul.f32 %v1302, %v3631
        %v3645 = vmul.f32 %v1303, %v3631
        %v3646 = vmul.f32 %v1304, %v3631
        %v3647 = vmul.f32 %v1305, %v3631
        %v3648 = vmul.f32 %v1306, %v3631
        %v3649 = vmul.f32 %v1307, %v3631
        %v3650 = vmul.f32 %v1308, %v3631
        %v3651 = vmul.f32 %v1309, %v3631
        %v3652 = vmul.f32 %v1310, %v3631
        %v3653 = vmul.f32 %v1311, %v3631
        %v3654 = vmul.f32 %v1312, %v3631
        %v3655 = vmul.f32 %v1313, %v3631
        %v3656 = vmul.f32 %v1314, %v3631
        %v3682 = vrot.slane %v3632, 2
        %v3683 = vrot.slane %v3633, 2
        %v3684 = vsel %vm1482, %v3682, %v3683
        %v3685 = vrot.slane %v3634, 2
        %v3686 = vsel %vm1482, %v3683, %v3685
        %v3687 = vrot.slane %v3635, 2
        %v3688 = vsel %vm1482, %v3685, %v3687
        %v3689 = vrot.slane %v3636, 2
        %v3690 = vsel %vm1482, %v3687, %v3689
        %v3691 = vrot.slane %v3637, 2
        %v3692 = vsel %vm1482, %v3689, %v3691
        %v3693 = vrot.slane %v3638, 2
        %v3694 = vsel %vm1482, %v3691, %v3693
        %v3695 = vrot.slane %v3639, 2
        %v3696 = vsel %vm1482, %v3693, %v3695
        %v3697 = vrot.slane %v3640, 2
        %v3698 = vsel %vm1482, %v3695, %v3697
        %v3699 = vrot.slane %v3641, 2
        %v3700 = vsel %vm1482, %v3697, %v3699
        %v3701 = vrot.slane %v3642, 2
        %v3702 = vsel %vm1482, %v3699, %v3701
        %v3703 = vrot.slane %v3643, 2
        %v3704 = vsel %vm1482, %v3701, %v3703
        %v3705 = vrot.slane %v3644, 2
        %v3706 = vsel %vm1482, %v3703, %v3705
        %v3707 = vrot.slane %v3645, 2
        %v3708 = vsel %vm1482, %v3705, %v3707
        %v3709 = vrot.slane %v3646, 2
        %v3710 = vsel %vm1482, %v3707, %v3709
        %v3711 = vrot.slane %v3647, 2
        %v3712 = vsel %vm1482, %v3709, %v3711
        %v3713 = vrot.slane %v3648, 2
        %v3714 = vsel %vm1482, %v3711, %v3713
        %v3715 = vrot.slane %v3649, 2
        %v3716 = vsel %vm1482, %v3713, %v3715
        %v3717 = vrot.slane %v3650, 2
        %v3718 = vsel %vm1482, %v3715, %v3717
        %v3719 = vrot.slane %v3651, 2
        %v3720 = vsel %vm1482, %v3717, %v3719
        %v3721 = vrot.slane %v3652, 2
        %v3722 = vsel %vm1482, %v3719, %v3721
        %v3723 = vrot.slane %v3653, 2
        %v3724 = vsel %vm1482, %v3721, %v3723
        %v3725 = vrot.slane %v3654, 2
        %v3726 = vsel %vm1482, %v3723, %v3725
        %v3727 = vrot.slane %v3655, 2
        %v3728 = vsel %vm1482, %v3725, %v3727
        %v3729 = vrot.slane %v3656, 2
        %v3730 = vsel %vm1482, %v3727, %v3729
        %v3756 = vadd.f32 %v3450, %v3684
        %v3757 = vadd.f32 %v3451, %v3686
        %v3758 = vadd.f32 %v3452, %v3688
        %v3759 = vadd.f32 %v3453, %v3690
        %v3760 = vadd.f32 %v3454, %v3692
        %v3761 = vadd.f32 %v3455, %v3694
        %v3762 = vadd.f32 %v3456, %v3696
        %v3763 = vadd.f32 %v3457, %v3698
        %v3764 = vadd.f32 %v3458, %v3700
        %v3765 = vadd.f32 %v3459, %v3702
        %v3766 = vadd.f32 %v3460, %v3704
        %v3767 = vadd.f32 %v3461, %v3706
        %v3768 = vadd.f32 %v3462, %v3708
        %v3769 = vadd.f32 %v3463, %v3710
        %v3770 = vadd.f32 %v3464, %v3712
        %v3771 = vadd.f32 %v3465, %v3714
        %v3772 = vadd.f32 %v3466, %v3716
        %v3773 = vadd.f32 %v3467, %v3718
        %v3774 = vadd.f32 %v3468, %v3720
        %v3775 = vadd.f32 %v3469, %v3722
        %v3776 = vadd.f32 %v3470, %v3724
        %v3777 = vadd.f32 %v3471, %v3726
        %v3778 = vadd.f32 %v3472, %v3728
        %v3779 = vadd.f32 %v3473, %v3730
        %v3780 = vadd.f32 %v3474, %v3729
        %v3781 = vlaneseq
        %v3782 = vshrl.u32 %v3781, 7
        %v3783 = vsub.s32 4, %v3782
        %v3784 = vrot.slane %v1318, %v3783
        %v3785 = vmul.f32 %v1290, %v3784
        %v3786 = vmul.f32 %v1291, %v3784
        %v3787 = vmul.f32 %v1292, %v3784
        %v3788 = vmul.f32 %v1293, %v3784
        %v3789 = vmul.f32 %v1294, %v3784
        %v3790 = vmul.f32 %v1295, %v3784
        %v3791 = vmul.f32 %v1296, %v3784
        %v3792 = vmul.f32 %v1297, %v3784
        %v3793 = vmul.f32 %v1298, %v3784
        %v3794 = vmul.f32 %v1299, %v3784
        %v3795 = vmul.f32 %v1300, %v3784
        %v3796 = vmul.f32 %v1301, %v3784
        %v3797 = vmul.f32 %v1302, %v3784
        %v3798 = vmul.f32 %v1303, %v3784
        %v3799 = vmul.f32 %v1304, %v3784
        %v3800 = vmul.f32 %v1305, %v3784
        %v3801 = vmul.f32 %v1306, %v3784
        %v3802 = vmul.f32 %v1307, %v3784
        %v3803 = vmul.f32 %v1308, %v3784
        %v3804 = vmul.f32 %v1309, %v3784
        %v3805 = vmul.f32 %v1310, %v3784
        %v3806 = vmul.f32 %v1311, %v3784
        %v3807 = vmul.f32 %v1312, %v3784
        %v3808 = vmul.f32 %v1313, %v3784
        %v3809 = vmul.f32 %v1314, %v3784
        %v3835 = vrot.slane %v3785, 4
        %v3836 = vrot.slane %v3786, 4
        %v3837 = vsel %vm1789, %v3835, %v3836
        %v3838 = vrot.slane %v3787, 4
        %v3839 = vsel %vm1789, %v3836, %v3838
        %v3840 = vrot.slane %v3788, 4
        %v3841 = vsel %vm1789, %v3838, %v3840
        %v3842 = vrot.slane %v3789, 4
        %v3843 = vsel %vm1789, %v3840, %v3842
        %v3844 = vrot.slane %v3790, 4
        %v3845 = vsel %vm1789, %v3842, %v3844
        %v3846 = vrot.slane %v3791, 4
        %v3847 = vsel %vm1789, %v3844, %v3846
        %v3848 = vrot.slane %v3792, 4
        %v3849 = vsel %vm1789, %v3846, %v3848
        %v3850 = vrot.slane %v3793, 4
        %v3851 = vsel %vm1789, %v3848, %v3850
        %v3852 = vrot.slane %v3794, 4
        %v3853 = vsel %vm1789, %v3850, %v3852
        %v3854 = vrot.slane %v3795, 4
        %v3855 = vsel %vm1789, %v3852, %v3854
        %v3856 = vrot.slane %v3796, 4
        %v3857 = vsel %vm1789, %v3854, %v3856
        %v3858 = vrot.slane %v3797, 4
        %v3859 = vsel %vm1789, %v3856, %v3858
        %v3860 = vrot.slane %v3798, 4
        %v3861 = vsel %vm1789, %v3858, %v3860
        %v3862 = vrot.slane %v3799, 4
        %v3863 = vsel %vm1789, %v3860, %v3862
        %v3864 = vrot.slane %v3800, 4
        %v3865 = vsel %vm1789, %v3862, %v3864
        %v3866 = vrot.slane %v3801, 4
        %v3867 = vsel %vm1789, %v3864, %v3866
        %v3868 = vrot.slane %v3802, 4
        %v3869 = vsel %vm1789, %v3866, %v3868
        %v3870 = vrot.slane %v3803, 4
        %v3871 = vsel %vm1789, %v3868, %v3870
        %v3872 = vrot.slane %v3804, 4
        %v3873 = vsel %vm1789, %v3870, %v3872
        %v3874 = vrot.slane %v3805, 4
        %v3875 = vsel %vm1789, %v3872, %v3874
        %v3876 = vrot.slane %v3806, 4
        %v3877 = vsel %vm1789, %v3874, %v3876
        %v3878 = vrot.slane %v3807, 4
        %v3879 = vsel %vm1789, %v3876, %v3878
        %v3880 = vrot.slane %v3808, 4
        %v3881 = vsel %vm1789, %v3878, %v3880
        %v3882 = vrot.slane %v3809, 4
        %v3883 = vsel %vm1789, %v3880, %v3882
        %v3909 = vadd.f32 %v3603, %v3837
        %v3910 = vadd.f32 %v3604, %v3839
        %v3911 = vadd.f32 %v3605, %v3841
        %v3912 = vadd.f32 %v3606, %v3843
        %v3913 = vadd.f32 %v3607, %v3845
        %v3914 = vadd.f32 %v3608, %v3847
        %v3915 = vadd.f32 %v3609, %v3849
        %v3916 = vadd.f32 %v3610, %v3851
        %v3917 = vadd.f32 %v3611, %v3853
        %v3918 = vadd.f32 %v3612, %v3855
        %v3919 = vadd.f32 %v3613, %v3857
        %v3920 = vadd.f32 %v3614, %v3859
        %v3921 = vadd.f32 %v3615, %v3861
        %v3922 = vadd.f32 %v3616, %v3863
        %v3923 = vadd.f32 %v3617, %v3865
        %v3924 = vadd.f32 %v3618, %v3867
        %v3925 = vadd.f32 %v3619, %v3869
        %v3926 = vadd.f32 %v3620, %v3871
        %v3927 = vadd.f32 %v3621, %v3873
        %v3928 = vadd.f32 %v3622, %v3875
        %v3929 = vadd.f32 %v3623, %v3877
        %v3930 = vadd.f32 %v3624, %v3879
        %v3931 = vadd.f32 %v3625, %v3881
        %v3932 = vadd.f32 %v3626, %v3883
        %v3933 = vadd.f32 %v3627, %v3882
        %v3934 = vlaneseq
        %v3935 = vshrl.u32 %v3934, 7
        %v3936 = vsub.s32 5, %v3935
        %v3937 = vrot.slane %v1318, %v3936
        %v3938 = vmul.f32 %v1290, %v3937
        %v3939 = vmul.f32 %v1291, %v3937
        %v3940 = vmul.f32 %v1292, %v3937
        %v3941 = vmul.f32 %v1293, %v3937
        %v3942 = vmul.f32 %v1294, %v3937
        %v3943 = vmul.f32 %v1295, %v3937
        %v3944 = vmul.f32 %v1296, %v3937
        %v3945 = vmul.f32 %v1297, %v3937
        %v3946 = vmul.f32 %v1298, %v3937
        %v3947 = vmul.f32 %v1299, %v3937
        %v3948 = vmul.f32 %v1300, %v3937
        %v3949 = vmul.f32 %v1301, %v3937
        %v3950 = vmul.f32 %v1302, %v3937
        %v3951 = vmul.f32 %v1303, %v3937
        %v3952 = vmul.f32 %v1304, %v3937
        %v3953 = vmul.f32 %v1305, %v3937
        %v3954 = vmul.f32 %v1306, %v3937
        %v3955 = vmul.f32 %v1307, %v3937
        %v3956 = vmul.f32 %v1308, %v3937
        %v3957 = vmul.f32 %v1309, %v3937
        %v3958 = vmul.f32 %v1310, %v3937
        %v3959 = vmul.f32 %v1311, %v3937
        %v3960 = vmul.f32 %v1312, %v3937
        %v3961 = vmul.f32 %v1313, %v3937
        %v3962 = vmul.f32 %v1314, %v3937
        %v3988 = vrot.slane %v3938, 4
        %v3989 = vrot.slane %v3939, 4
        %v3990 = vsel %vm1789, %v3988, %v3989
        %v3991 = vrot.slane %v3940, 4
        %v3992 = vsel %vm1789, %v3989, %v3991
        %v3993 = vrot.slane %v3941, 4
        %v3994 = vsel %vm1789, %v3991, %v3993
        %v3995 = vrot.slane %v3942, 4
        %v3996 = vsel %vm1789, %v3993, %v3995
        %v3997 = vrot.slane %v3943, 4
        %v3998 = vsel %vm1789, %v3995, %v3997
        %v3999 = vrot.slane %v3944, 4
        %v4000 = vsel %vm1789, %v3997, %v3999
        %v4001 = vrot.slane %v3945, 4
        %v4002 = vsel %vm1789, %v3999, %v4001
        %v4003 = vrot.slane %v3946, 4
        %v4004 = vsel %vm1789, %v4001, %v4003
        %v4005 = vrot.slane %v3947, 4
        %v4006 = vsel %vm1789, %v4003, %v4005
        %v4007 = vrot.slane %v3948, 4
        %v4008 = vsel %vm1789, %v4005, %v4007
        %v4009 = vrot.slane %v3949, 4
        %v4010 = vsel %vm1789, %v4007, %v4009
        %v4011 = vrot.slane %v3950, 4
        %v4012 = vsel %vm1789, %v4009, %v4011
        %v4013 = vrot.slane %v3951, 4
        %v4014 = vsel %vm1789, %v4011, %v4013
        %v4015 = vrot.slane %v3952, 4
        %v4016 = vsel %vm1789, %v4013, %v4015
        %v4017 = vrot.slane %v3953, 4
        %v4018 = vsel %vm1789, %v4015, %v4017
        %v4019 = vrot.slane %v3954, 4
        %v4020 = vsel %vm1789, %v4017, %v4019
        %v4021 = vrot.slane %v3955, 4
        %v4022 = vsel %vm1789, %v4019, %v4021
        %v4023 = vrot.slane %v3956, 4
        %v4024 = vsel %vm1789, %v4021, %v4023
        %v4025 = vrot.slane %v3957, 4
        %v4026 = vsel %vm1789, %v4023, %v4025
        %v4027 = vrot.slane %v3958, 4
        %v4028 = vsel %vm1789, %v4025, %v4027
        %v4029 = vrot.slane %v3959, 4
        %v4030 = vsel %vm1789, %v4027, %v4029
        %v4031 = vrot.slane %v3960, 4
        %v4032 = vsel %vm1789, %v4029, %v4031
        %v4033 = vrot.slane %v3961, 4
        %v4034 = vsel %vm1789, %v4031, %v4033
        %v4035 = vrot.slane %v3962, 4
        %v4036 = vsel %vm1789, %v4033, %v4035
        %v4062 = vadd.f32 %v3756, %v3990
        %v4063 = vadd.f32 %v3757, %v3992
        %v4064 = vadd.f32 %v3758, %v3994
        %v4065 = vadd.f32 %v3759, %v3996
        %v4066 = vadd.f32 %v3760, %v3998
        %v4067 = vadd.f32 %v3761, %v4000
        %v4068 = vadd.f32 %v3762, %v4002
        %v4069 = vadd.f32 %v3763, %v4004
        %v4070 = vadd.f32 %v3764, %v4006
        %v4071 = vadd.f32 %v3765, %v4008
        %v4072 = vadd.f32 %v3766, %v4010
        %v4073 = vadd.f32 %v3767, %v4012
        %v4074 = vadd.f32 %v3768, %v4014
        %v4075 = vadd.f32 %v3769, %v4016
        %v4076 = vadd.f32 %v3770, %v4018
        %v4077 = vadd.f32 %v3771, %v4020
        %v4078 = vadd.f32 %v3772, %v4022
        %v4079 = vadd.f32 %v3773, %v4024
        %v4080 = vadd.f32 %v3774, %v4026
        %v4081 = vadd.f32 %v3775, %v4028
        %v4082 = vadd.f32 %v3776, %v4030
        %v4083 = vadd.f32 %v3777, %v4032
        %v4084 = vadd.f32 %v3778, %v4034
        %v4085 = vadd.f32 %v3779, %v4036
        %v4086 = vadd.f32 %v3780, %v4035
        %v4087 = vlaneseq
        %v4088 = vshrl.u32 %v4087, 7
        %v4089 = vsub.s32 6, %v4088
        %v4090 = vrot.slane %v1318, %v4089
        %v4091 = vmul.f32 %v1290, %v4090
        %v4092 = vmul.f32 %v1291, %v4090
        %v4093 = vmul.f32 %v1292, %v4090
        %v4094 = vmul.f32 %v1293, %v4090
        %v4095 = vmul.f32 %v1294, %v4090
        %v4096 = vmul.f32 %v1295, %v4090
        %v4097 = vmul.f32 %v1296, %v4090
        %v4098 = vmul.f32 %v1297, %v4090
        %v4099 = vmul.f32 %v1298, %v4090
        %v4100 = vmul.f32 %v1299, %v4090
        %v4101 = vmul.f32 %v1300, %v4090
        %v4102 = vmul.f32 %v1301, %v4090
        %v4103 = vmul.f32 %v1302, %v4090
        %v4104 = vmul.f32 %v1303, %v4090
        %v4105 = vmul.f32 %v1304, %v4090
        %v4106 = vmul.f32 %v1305, %v4090
        %v4107 = vmul.f32 %v1306, %v4090
        %v4108 = vmul.f32 %v1307, %v4090
        %v4109 = vmul.f32 %v1308, %v4090
        %v4110 = vmul.f32 %v1309, %v4090
        %v4111 = vmul.f32 %v1310, %v4090
        %v4112 = vmul.f32 %v1311, %v4090
        %v4113 = vmul.f32 %v1312, %v4090
        %v4114 = vmul.f32 %v1313, %v4090
        %v4115 = vmul.f32 %v1314, %v4090
        %v4141 = vrot.slane %v4091, 6
        %v4142 = vrot.slane %v4092, 6
        %v4143 = vsel %vm2096, %v4141, %v4142
        %v4144 = vrot.slane %v4093, 6
        %v4145 = vsel %vm2096, %v4142, %v4144
        %v4146 = vrot.slane %v4094, 6
        %v4147 = vsel %vm2096, %v4144, %v4146
        %v4148 = vrot.slane %v4095, 6
        %v4149 = vsel %vm2096, %v4146, %v4148
        %v4150 = vrot.slane %v4096, 6
        %v4151 = vsel %vm2096, %v4148, %v4150
        %v4152 = vrot.slane %v4097, 6
        %v4153 = vsel %vm2096, %v4150, %v4152
        %v4154 = vrot.slane %v4098, 6
        %v4155 = vsel %vm2096, %v4152, %v4154
        %v4156 = vrot.slane %v4099, 6
        %v4157 = vsel %vm2096, %v4154, %v4156
        %v4158 = vrot.slane %v4100, 6
        %v4159 = vsel %vm2096, %v4156, %v4158
        %v4160 = vrot.slane %v4101, 6
        %v4161 = vsel %vm2096, %v4158, %v4160
        %v4162 = vrot.slane %v4102, 6
        %v4163 = vsel %vm2096, %v4160, %v4162
        %v4164 = vrot.slane %v4103, 6
        %v4165 = vsel %vm2096, %v4162, %v4164
        %v4166 = vrot.slane %v4104, 6
        %v4167 = vsel %vm2096, %v4164, %v4166
        %v4168 = vrot.slane %v4105, 6
        %v4169 = vsel %vm2096, %v4166, %v4168
        %v4170 = vrot.slane %v4106, 6
        %v4171 = vsel %vm2096, %v4168, %v4170
        %v4172 = vrot.slane %v4107, 6
        %v4173 = vsel %vm2096, %v4170, %v4172
        %v4174 = vrot.slane %v4108, 6
        %v4175 = vsel %vm2096, %v4172, %v4174
        %v4176 = vrot.slane %v4109, 6
        %v4177 = vsel %vm2096, %v4174, %v4176
        %v4178 = vrot.slane %v4110, 6
        %v4179 = vsel %vm2096, %v4176, %v4178
        %v4180 = vrot.slane %v4111, 6
        %v4181 = vsel %vm2096, %v4178, %v4180
        %v4182 = vrot.slane %v4112, 6
        %v4183 = vsel %vm2096, %v4180, %v4182
        %v4184 = vrot.slane %v4113, 6
        %v4185 = vsel %vm2096, %v4182, %v4184
        %v4186 = vrot.slane %v4114, 6
        %v4187 = vsel %vm2096, %v4184, %v4186
        %v4188 = vrot.slane %v4115, 6
        %v4189 = vsel %vm2096, %v4186, %v4188
        %v4215 = vadd.f32 %v3909, %v4143
        %v4216 = vadd.f32 %v3910, %v4145
        %v4217 = vadd.f32 %v3911, %v4147
        %v4218 = vadd.f32 %v3912, %v4149
        %v4219 = vadd.f32 %v3913, %v4151
        %v4220 = vadd.f32 %v3914, %v4153
        %v4221 = vadd.f32 %v3915, %v4155
        %v4222 = vadd.f32 %v3916, %v4157
        %v4223 = vadd.f32 %v3917, %v4159
        %v4224 = vadd.f32 %v3918, %v4161
        %v4225 = vadd.f32 %v3919, %v4163
        %v4226 = vadd.f32 %v3920, %v4165
        %v4227 = vadd.f32 %v3921, %v4167
        %v4228 = vadd.f32 %v3922, %v4169
        %v4229 = vadd.f32 %v3923, %v4171
        %v4230 = vadd.f32 %v3924, %v4173
        %v4231 = vadd.f32 %v3925, %v4175
        %v4232 = vadd.f32 %v3926, %v4177
        %v4233 = vadd.f32 %v3927, %v4179
        %v4234 = vadd.f32 %v3928, %v4181
        %v4235 = vadd.f32 %v3929, %v4183
        %v4236 = vadd.f32 %v3930, %v4185
        %v4237 = vadd.f32 %v3931, %v4187
        %v4238 = vadd.f32 %v3932, %v4189
        %v4239 = vadd.f32 %v3933, %v4188
        %v4240 = vlaneseq
        %v4241 = vshrl.u32 %v4240, 7
        %v4242 = vsub.s32 7, %v4241
        %v4243 = vrot.slane %v1318, %v4242
        %v4244 = vmul.f32 %v1291, %v4243
        %v4245 = vmul.f32 %v1292, %v4243
        %v4246 = vmul.f32 %v1293, %v4243
        %v4247 = vmul.f32 %v1294, %v4243
        %v4248 = vmul.f32 %v1295, %v4243
        %v4249 = vmul.f32 %v1296, %v4243
        %v4250 = vmul.f32 %v1297, %v4243
        %v4251 = vmul.f32 %v1298, %v4243
        %v4252 = vmul.f32 %v1299, %v4243
        %v4253 = vmul.f32 %v1300, %v4243
        %v4254 = vmul.f32 %v1301, %v4243
        %v4255 = vmul.f32 %v1302, %v4243
        %v4256 = vmul.f32 %v1303, %v4243
        %v4257 = vmul.f32 %v1304, %v4243
        %v4258 = vmul.f32 %v1305, %v4243
        %v4259 = vmul.f32 %v1306, %v4243
        %v4260 = vmul.f32 %v1307, %v4243
        %v4261 = vmul.f32 %v1308, %v4243
        %v4262 = vmul.f32 %v1309, %v4243
        %v4263 = vmul.f32 %v1310, %v4243
        %v4264 = vmul.f32 %v1311, %v4243
        %v4265 = vmul.f32 %v1312, %v4243
        %v4266 = vmul.f32 %v1313, %v4243
        %v4267 = vmul.f32 %v1314, %v4243
        %v4292 = vrot.slane %v4244, 6
        %v4293 = vrot.slane %v4245, 6
        %v4294 = vsel %vm2096, %v4292, %v4293
        %v4295 = vrot.slane %v4246, 6
        %v4296 = vsel %vm2096, %v4293, %v4295
        %v4297 = vrot.slane %v4247, 6
        %v4298 = vsel %vm2096, %v4295, %v4297
        %v4299 = vrot.slane %v4248, 6
        %v4300 = vsel %vm2096, %v4297, %v4299
        %v4301 = vrot.slane %v4249, 6
        %v4302 = vsel %vm2096, %v4299, %v4301
        %v4303 = vrot.slane %v4250, 6
        %v4304 = vsel %vm2096, %v4301, %v4303
        %v4305 = vrot.slane %v4251, 6
        %v4306 = vsel %vm2096, %v4303, %v4305
        %v4307 = vrot.slane %v4252, 6
        %v4308 = vsel %vm2096, %v4305, %v4307
        %v4309 = vrot.slane %v4253, 6
        %v4310 = vsel %vm2096, %v4307, %v4309
        %v4311 = vrot.slane %v4254, 6
        %v4312 = vsel %vm2096, %v4309, %v4311
        %v4313 = vrot.slane %v4255, 6
        %v4314 = vsel %vm2096, %v4311, %v4313
        %v4315 = vrot.slane %v4256, 6
        %v4316 = vsel %vm2096, %v4313, %v4315
        %v4317 = vrot.slane %v4257, 6
        %v4318 = vsel %vm2096, %v4315, %v4317
        %v4319 = vrot.slane %v4258, 6
        %v4320 = vsel %vm2096, %v4317, %v4319
        %v4321 = vrot.slane %v4259, 6
        %v4322 = vsel %vm2096, %v4319, %v4321
        %v4323 = vrot.slane %v4260, 6
        %v4324 = vsel %vm2096, %v4321, %v4323
        %v4325 = vrot.slane %v4261, 6
        %v4326 = vsel %vm2096, %v4323, %v4325
        %v4327 = vrot.slane %v4262, 6
        %v4328 = vsel %vm2096, %v4325, %v4327
        %v4329 = vrot.slane %v4263, 6
        %v4330 = vsel %vm2096, %v4327, %v4329
        %v4331 = vrot.slane %v4264, 6
        %v4332 = vsel %vm2096, %v4329, %v4331
        %v4333 = vrot.slane %v4265, 6
        %v4334 = vsel %vm2096, %v4331, %v4333
        %v4335 = vrot.slane %v4266, 6
        %v4336 = vsel %vm2096, %v4333, %v4335
        %v4337 = vrot.slane %v4267, 6
        %v4338 = vsel %vm2096, %v4335, %v4337
        %v4364 = vadd.f32 %v4062, %v4292
        %v4365 = vadd.f32 %v4063, %v4294
        %v4366 = vadd.f32 %v4064, %v4296
        %v4367 = vadd.f32 %v4065, %v4298
        %v4368 = vadd.f32 %v4066, %v4300
        %v4369 = vadd.f32 %v4067, %v4302
        %v4370 = vadd.f32 %v4068, %v4304
        %v4371 = vadd.f32 %v4069, %v4306
        %v4372 = vadd.f32 %v4070, %v4308
        %v4373 = vadd.f32 %v4071, %v4310
        %v4374 = vadd.f32 %v4072, %v4312
        %v4375 = vadd.f32 %v4073, %v4314
        %v4376 = vadd.f32 %v4074, %v4316
        %v4377 = vadd.f32 %v4075, %v4318
        %v4378 = vadd.f32 %v4076, %v4320
        %v4379 = vadd.f32 %v4077, %v4322
        %v4380 = vadd.f32 %v4078, %v4324
        %v4381 = vadd.f32 %v4079, %v4326
        %v4382 = vadd.f32 %v4080, %v4328
        %v4383 = vadd.f32 %v4081, %v4330
        %v4384 = vadd.f32 %v4082, %v4332
        %v4385 = vadd.f32 %v4083, %v4334
        %v4386 = vadd.f32 %v4084, %v4336
        %v4387 = vadd.f32 %v4085, %v4338
        %v4388 = vadd.f32 %v4086, %v4337
        %v4389 = vlaneseq
        %v4390 = vshrl.u32 %v4389, 7
        %v4391 = vsub.s32 0, %v4390
        %v4392 = vrot.slane %v1319, %v4391
        %v4393 = vmul.f32 %v1291, %v4392
        %v4394 = vmul.f32 %v1292, %v4392
        %v4395 = vmul.f32 %v1293, %v4392
        %v4396 = vmul.f32 %v1294, %v4392
        %v4397 = vmul.f32 %v1295, %v4392
        %v4398 = vmul.f32 %v1296, %v4392
        %v4399 = vmul.f32 %v1297, %v4392
        %v4400 = vmul.f32 %v1298, %v4392
        %v4401 = vmul.f32 %v1299, %v4392
        %v4402 = vmul.f32 %v1300, %v4392
        %v4403 = vmul.f32 %v1301, %v4392
        %v4404 = vmul.f32 %v1302, %v4392
        %v4405 = vmul.f32 %v1303, %v4392
        %v4406 = vmul.f32 %v1304, %v4392
        %v4407 = vmul.f32 %v1305, %v4392
        %v4408 = vmul.f32 %v1306, %v4392
        %v4409 = vmul.f32 %v1307, %v4392
        %v4410 = vmul.f32 %v1308, %v4392
        %v4411 = vmul.f32 %v1309, %v4392
        %v4412 = vmul.f32 %v1310, %v4392
        %v4413 = vmul.f32 %v1311, %v4392
        %v4414 = vmul.f32 %v1312, %v4392
        %v4415 = vmul.f32 %v1313, %v4392
        %v4416 = vmul.f32 %v1314, %v4392
        %v4417 = vmul.f32 %v1315, %v4392
        %v4418 = vadd.f32 %v4215, %v4393
        %v4419 = vadd.f32 %v4216, %v4394
        %v4420 = vadd.f32 %v4217, %v4395
        %v4421 = vadd.f32 %v4218, %v4396
        %v4422 = vadd.f32 %v4219, %v4397
        %v4423 = vadd.f32 %v4220, %v4398
        %v4424 = vadd.f32 %v4221, %v4399
        %v4425 = vadd.f32 %v4222, %v4400
        %v4426 = vadd.f32 %v4223, %v4401
        %v4427 = vadd.f32 %v4224, %v4402
        %v4428 = vadd.f32 %v4225, %v4403
        %v4429 = vadd.f32 %v4226, %v4404
        %v4430 = vadd.f32 %v4227, %v4405
        %v4431 = vadd.f32 %v4228, %v4406
        %v4432 = vadd.f32 %v4229, %v4407
        %v4433 = vadd.f32 %v4230, %v4408
        %v4434 = vadd.f32 %v4231, %v4409
        %v4435 = vadd.f32 %v4232, %v4410
        %v4436 = vadd.f32 %v4233, %v4411
        %v4437 = vadd.f32 %v4234, %v4412
        %v4438 = vadd.f32 %v4235, %v4413
        %v4439 = vadd.f32 %v4236, %v4414
        %v4440 = vadd.f32 %v4237, %v4415
        %v4441 = vadd.f32 %v4238, %v4416
        %v4442 = vadd.f32 %v4239, %v4417
        %v4443 = vlaneseq
        %v4444 = vshrl.u32 %v4443, 7
        %v4445 = vsub.s32 1, %v4444
        %v4446 = vrot.slane %v1319, %v4445
        %v4447 = vmul.f32 %v1291, %v4446
        %v4448 = vmul.f32 %v1292, %v4446
        %v4449 = vmul.f32 %v1293, %v4446
        %v4450 = vmul.f32 %v1294, %v4446
        %v4451 = vmul.f32 %v1295, %v4446
        %v4452 = vmul.f32 %v1296, %v4446
        %v4453 = vmul.f32 %v1297, %v4446
        %v4454 = vmul.f32 %v1298, %v4446
        %v4455 = vmul.f32 %v1299, %v4446
        %v4456 = vmul.f32 %v1300, %v4446
        %v4457 = vmul.f32 %v1301, %v4446
        %v4458 = vmul.f32 %v1302, %v4446
        %v4459 = vmul.f32 %v1303, %v4446
        %v4460 = vmul.f32 %v1304, %v4446
        %v4461 = vmul.f32 %v1305, %v4446
        %v4462 = vmul.f32 %v1306, %v4446
        %v4463 = vmul.f32 %v1307, %v4446
        %v4464 = vmul.f32 %v1308, %v4446
        %v4465 = vmul.f32 %v1309, %v4446
        %v4466 = vmul.f32 %v1310, %v4446
        %v4467 = vmul.f32 %v1311, %v4446
        %v4468 = vmul.f32 %v1312, %v4446
        %v4469 = vmul.f32 %v1313, %v4446
        %v4470 = vmul.f32 %v1314, %v4446
        %v4471 = vmul.f32 %v1315, %v4446
        %v4472 = vadd.f32 %v4364, %v4447
        %v4473 = vadd.f32 %v4365, %v4448
        %v4474 = vadd.f32 %v4366, %v4449
        %v4475 = vadd.f32 %v4367, %v4450
        %v4476 = vadd.f32 %v4368, %v4451
        %v4477 = vadd.f32 %v4369, %v4452
        %v4478 = vadd.f32 %v4370, %v4453
        %v4479 = vadd.f32 %v4371, %v4454
        %v4480 = vadd.f32 %v4372, %v4455
        %v4481 = vadd.f32 %v4373, %v4456
        %v4482 = vadd.f32 %v4374, %v4457
        %v4483 = vadd.f32 %v4375, %v4458
        %v4484 = vadd.f32 %v4376, %v4459
        %v4485 = vadd.f32 %v4377, %v4460
        %v4486 = vadd.f32 %v4378, %v4461
        %v4487 = vadd.f32 %v4379, %v4462
        %v4488 = vadd.f32 %v4380, %v4463
        %v4489 = vadd.f32 %v4381, %v4464
        %v4490 = vadd.f32 %v4382, %v4465
        %v4491 = vadd.f32 %v4383, %v4466
        %v4492 = vadd.f32 %v4384, %v4467
        %v4493 = vadd.f32 %v4385, %v4468
        %v4494 = vadd.f32 %v4386, %v4469
        %v4495 = vadd.f32 %v4387, %v4470
        %v4496 = vadd.f32 %v4388, %v4471
        %v4497 = vlaneseq
        %v4498 = vshrl.u32 %v4497, 7
        %v4499 = vsub.s32 2, %v4498
        %v4500 = vrot.slane %v1319, %v4499
        %v4501 = vmul.f32 %v1291, %v4500
        %v4502 = vmul.f32 %v1292, %v4500
        %v4503 = vmul.f32 %v1293, %v4500
        %v4504 = vmul.f32 %v1294, %v4500
        %v4505 = vmul.f32 %v1295, %v4500
        %v4506 = vmul.f32 %v1296, %v4500
        %v4507 = vmul.f32 %v1297, %v4500
        %v4508 = vmul.f32 %v1298, %v4500
        %v4509 = vmul.f32 %v1299, %v4500
        %v4510 = vmul.f32 %v1300, %v4500
        %v4511 = vmul.f32 %v1301, %v4500
        %v4512 = vmul.f32 %v1302, %v4500
        %v4513 = vmul.f32 %v1303, %v4500
        %v4514 = vmul.f32 %v1304, %v4500
        %v4515 = vmul.f32 %v1305, %v4500
        %v4516 = vmul.f32 %v1306, %v4500
        %v4517 = vmul.f32 %v1307, %v4500
        %v4518 = vmul.f32 %v1308, %v4500
        %v4519 = vmul.f32 %v1309, %v4500
        %v4520 = vmul.f32 %v1310, %v4500
        %v4521 = vmul.f32 %v1311, %v4500
        %v4522 = vmul.f32 %v1312, %v4500
        %v4523 = vmul.f32 %v1313, %v4500
        %v4524 = vmul.f32 %v1314, %v4500
        %v4525 = vmul.f32 %v1315, %v4500
        %v4551 = vrot.slane %v4501, 2
        %v4552 = vrot.slane %v4502, 2
        %v4553 = vsel %vm1482, %v4551, %v4552
        %v4554 = vrot.slane %v4503, 2
        %v4555 = vsel %vm1482, %v4552, %v4554
        %v4556 = vrot.slane %v4504, 2
        %v4557 = vsel %vm1482, %v4554, %v4556
        %v4558 = vrot.slane %v4505, 2
        %v4559 = vsel %vm1482, %v4556, %v4558
        %v4560 = vrot.slane %v4506, 2
        %v4561 = vsel %vm1482, %v4558, %v4560
        %v4562 = vrot.slane %v4507, 2
        %v4563 = vsel %vm1482, %v4560, %v4562
        %v4564 = vrot.slane %v4508, 2
        %v4565 = vsel %vm1482, %v4562, %v4564
        %v4566 = vrot.slane %v4509, 2
        %v4567 = vsel %vm1482, %v4564, %v4566
        %v4568 = vrot.slane %v4510, 2
        %v4569 = vsel %vm1482, %v4566, %v4568
        %v4570 = vrot.slane %v4511, 2
        %v4571 = vsel %vm1482, %v4568, %v4570
        %v4572 = vrot.slane %v4512, 2
        %v4573 = vsel %vm1482, %v4570, %v4572
        %v4574 = vrot.slane %v4513, 2
        %v4575 = vsel %vm1482, %v4572, %v4574
        %v4576 = vrot.slane %v4514, 2
        %v4577 = vsel %vm1482, %v4574, %v4576
        %v4578 = vrot.slane %v4515, 2
        %v4579 = vsel %vm1482, %v4576, %v4578
        %v4580 = vrot.slane %v4516, 2
        %v4581 = vsel %vm1482, %v4578, %v4580
        %v4582 = vrot.slane %v4517, 2
        %v4583 = vsel %vm1482, %v4580, %v4582
        %v4584 = vrot.slane %v4518, 2
        %v4585 = vsel %vm1482, %v4582, %v4584
        %v4586 = vrot.slane %v4519, 2
        %v4587 = vsel %vm1482, %v4584, %v4586
        %v4588 = vrot.slane %v4520, 2
        %v4589 = vsel %vm1482, %v4586, %v4588
        %v4590 = vrot.slane %v4521, 2
        %v4591 = vsel %vm1482, %v4588, %v4590
        %v4592 = vrot.slane %v4522, 2
        %v4593 = vsel %vm1482, %v4590, %v4592
        %v4594 = vrot.slane %v4523, 2
        %v4595 = vsel %vm1482, %v4592, %v4594
        %v4596 = vrot.slane %v4524, 2
        %v4597 = vsel %vm1482, %v4594, %v4596
        %v4598 = vrot.slane %v4525, 2
        %v4599 = vsel %vm1482, %v4596, %v4598
        %v4625 = vadd.f32 %v4418, %v4553
        %v4626 = vadd.f32 %v4419, %v4555
        %v4627 = vadd.f32 %v4420, %v4557
        %v4628 = vadd.f32 %v4421, %v4559
        %v4629 = vadd.f32 %v4422, %v4561
        %v4630 = vadd.f32 %v4423, %v4563
        %v4631 = vadd.f32 %v4424, %v4565
        %v4632 = vadd.f32 %v4425, %v4567
        %v4633 = vadd.f32 %v4426, %v4569
        %v4634 = vadd.f32 %v4427, %v4571
        %v4635 = vadd.f32 %v4428, %v4573
        %v4636 = vadd.f32 %v4429, %v4575
        %v4637 = vadd.f32 %v4430, %v4577
        %v4638 = vadd.f32 %v4431, %v4579
        %v4639 = vadd.f32 %v4432, %v4581
        %v4640 = vadd.f32 %v4433, %v4583
        %v4641 = vadd.f32 %v4434, %v4585
        %v4642 = vadd.f32 %v4435, %v4587
        %v4643 = vadd.f32 %v4436, %v4589
        %v4644 = vadd.f32 %v4437, %v4591
        %v4645 = vadd.f32 %v4438, %v4593
        %v4646 = vadd.f32 %v4439, %v4595
        %v4647 = vadd.f32 %v4440, %v4597
        %v4648 = vadd.f32 %v4441, %v4599
        %v4649 = vadd.f32 %v4442, %v4598
        %v4650 = vlaneseq
        %v4651 = vshrl.u32 %v4650, 7
        %v4652 = vsub.s32 3, %v4651
        %v4653 = vrot.slane %v1319, %v4652
        %v4654 = vmul.f32 %v1291, %v4653
        %v4655 = vmul.f32 %v1292, %v4653
        %v4656 = vmul.f32 %v1293, %v4653
        %v4657 = vmul.f32 %v1294, %v4653
        %v4658 = vmul.f32 %v1295, %v4653
        %v4659 = vmul.f32 %v1296, %v4653
        %v4660 = vmul.f32 %v1297, %v4653
        %v4661 = vmul.f32 %v1298, %v4653
        %v4662 = vmul.f32 %v1299, %v4653
        %v4663 = vmul.f32 %v1300, %v4653
        %v4664 = vmul.f32 %v1301, %v4653
        %v4665 = vmul.f32 %v1302, %v4653
        %v4666 = vmul.f32 %v1303, %v4653
        %v4667 = vmul.f32 %v1304, %v4653
        %v4668 = vmul.f32 %v1305, %v4653
        %v4669 = vmul.f32 %v1306, %v4653
        %v4670 = vmul.f32 %v1307, %v4653
        %v4671 = vmul.f32 %v1308, %v4653
        %v4672 = vmul.f32 %v1309, %v4653
        %v4673 = vmul.f32 %v1310, %v4653
        %v4674 = vmul.f32 %v1311, %v4653
        %v4675 = vmul.f32 %v1312, %v4653
        %v4676 = vmul.f32 %v1313, %v4653
        %v4677 = vmul.f32 %v1314, %v4653
        %v4678 = vmul.f32 %v1315, %v4653
        %v4704 = vrot.slane %v4654, 2
        %v4705 = vrot.slane %v4655, 2
        %v4706 = vsel %vm1482, %v4704, %v4705
        %v4707 = vrot.slane %v4656, 2
        %v4708 = vsel %vm1482, %v4705, %v4707
        %v4709 = vrot.slane %v4657, 2
        %v4710 = vsel %vm1482, %v4707, %v4709
        %v4711 = vrot.slane %v4658, 2
        %v4712 = vsel %vm1482, %v4709, %v4711
        %v4713 = vrot.slane %v4659, 2
        %v4714 = vsel %vm1482, %v4711, %v4713
        %v4715 = vrot.slane %v4660, 2
        %v4716 = vsel %vm1482, %v4713, %v4715
        %v4717 = vrot.slane %v4661, 2
        %v4718 = vsel %vm1482, %v4715, %v4717
        %v4719 = vrot.slane %v4662, 2
        %v4720 = vsel %vm1482, %v4717, %v4719
        %v4721 = vrot.slane %v4663, 2
        %v4722 = vsel %vm1482, %v4719, %v4721
        %v4723 = vrot.slane %v4664, 2
        %v4724 = vsel %vm1482, %v4721, %v4723
        %v4725 = vrot.slane %v4665, 2
        %v4726 = vsel %vm1482, %v4723, %v4725
        %v4727 = vrot.slane %v4666, 2
        %v4728 = vsel %vm1482, %v4725, %v4727
        %v4729 = vrot.slane %v4667, 2
        %v4730 = vsel %vm1482, %v4727, %v4729
        %v4731 = vrot.slane %v4668, 2
        %v4732 = vsel %vm1482, %v4729, %v4731
        %v4733 = vrot.slane %v4669, 2
        %v4734 = vsel %vm1482, %v4731, %v4733
        %v4735 = vrot.slane %v4670, 2
        %v4736 = vsel %vm1482, %v4733, %v4735
        %v4737 = vrot.slane %v4671, 2
        %v4738 = vsel %vm1482, %v4735, %v4737
        %v4739 = vrot.slane %v4672, 2
        %v4740 = vsel %vm1482, %v4737, %v4739
        %v4741 = vrot.slane %v4673, 2
        %v4742 = vsel %vm1482, %v4739, %v4741
        %v4743 = vrot.slane %v4674, 2
        %v4744 = vsel %vm1482, %v4741, %v4743
        %v4745 = vrot.slane %v4675, 2
        %v4746 = vsel %vm1482, %v4743, %v4745
        %v4747 = vrot.slane %v4676, 2
        %v4748 = vsel %vm1482, %v4745, %v4747
        %v4749 = vrot.slane %v4677, 2
        %v4750 = vsel %vm1482, %v4747, %v4749
        %v4751 = vrot.slane %v4678, 2
        %v4752 = vsel %vm1482, %v4749, %v4751
        %v4778 = vadd.f32 %v4472, %v4706
        %v4779 = vadd.f32 %v4473, %v4708
        %v4780 = vadd.f32 %v4474, %v4710
        %v4781 = vadd.f32 %v4475, %v4712
        %v4782 = vadd.f32 %v4476, %v4714
        %v4783 = vadd.f32 %v4477, %v4716
        %v4784 = vadd.f32 %v4478, %v4718
        %v4785 = vadd.f32 %v4479, %v4720
        %v4786 = vadd.f32 %v4480, %v4722
        %v4787 = vadd.f32 %v4481, %v4724
        %v4788 = vadd.f32 %v4482, %v4726
        %v4789 = vadd.f32 %v4483, %v4728
        %v4790 = vadd.f32 %v4484, %v4730
        %v4791 = vadd.f32 %v4485, %v4732
        %v4792 = vadd.f32 %v4486, %v4734
        %v4793 = vadd.f32 %v4487, %v4736
        %v4794 = vadd.f32 %v4488, %v4738
        %v4795 = vadd.f32 %v4489, %v4740
        %v4796 = vadd.f32 %v4490, %v4742
        %v4797 = vadd.f32 %v4491, %v4744
        %v4798 = vadd.f32 %v4492, %v4746
        %v4799 = vadd.f32 %v4493, %v4748
        %v4800 = vadd.f32 %v4494, %v4750
        %v4801 = vadd.f32 %v4495, %v4752
        %v4802 = vadd.f32 %v4496, %v4751
        %v4803 = vlaneseq
        %v4804 = vshrl.u32 %v4803, 7
        %v4805 = vsub.s32 4, %v4804
        %v4806 = vrot.slane %v1319, %v4805
        %v4807 = vmul.f32 %v1291, %v4806
        %v4808 = vmul.f32 %v1292, %v4806
        %v4809 = vmul.f32 %v1293, %v4806
        %v4810 = vmul.f32 %v1294, %v4806
        %v4811 = vmul.f32 %v1295, %v4806
        %v4812 = vmul.f32 %v1296, %v4806
        %v4813 = vmul.f32 %v1297, %v4806
        %v4814 = vmul.f32 %v1298, %v4806
        %v4815 = vmul.f32 %v1299, %v4806
        %v4816 = vmul.f32 %v1300, %v4806
        %v4817 = vmul.f32 %v1301, %v4806
        %v4818 = vmul.f32 %v1302, %v4806
        %v4819 = vmul.f32 %v1303, %v4806
        %v4820 = vmul.f32 %v1304, %v4806
        %v4821 = vmul.f32 %v1305, %v4806
        %v4822 = vmul.f32 %v1306, %v4806
        %v4823 = vmul.f32 %v1307, %v4806
        %v4824 = vmul.f32 %v1308, %v4806
        %v4825 = vmul.f32 %v1309, %v4806
        %v4826 = vmul.f32 %v1310, %v4806
        %v4827 = vmul.f32 %v1311, %v4806
        %v4828 = vmul.f32 %v1312, %v4806
        %v4829 = vmul.f32 %v1313, %v4806
        %v4830 = vmul.f32 %v1314, %v4806
        %v4831 = vmul.f32 %v1315, %v4806
        %v4857 = vrot.slane %v4807, 4
        %v4858 = vrot.slane %v4808, 4
        %v4859 = vsel %vm1789, %v4857, %v4858
        %v4860 = vrot.slane %v4809, 4
        %v4861 = vsel %vm1789, %v4858, %v4860
        %v4862 = vrot.slane %v4810, 4
        %v4863 = vsel %vm1789, %v4860, %v4862
        %v4864 = vrot.slane %v4811, 4
        %v4865 = vsel %vm1789, %v4862, %v4864
        %v4866 = vrot.slane %v4812, 4
        %v4867 = vsel %vm1789, %v4864, %v4866
        %v4868 = vrot.slane %v4813, 4
        %v4869 = vsel %vm1789, %v4866, %v4868
        %v4870 = vrot.slane %v4814, 4
        %v4871 = vsel %vm1789, %v4868, %v4870
        %v4872 = vrot.slane %v4815, 4
        %v4873 = vsel %vm1789, %v4870, %v4872
        %v4874 = vrot.slane %v4816, 4
        %v4875 = vsel %vm1789, %v4872, %v4874
        %v4876 = vrot.slane %v4817, 4
        %v4877 = vsel %vm1789, %v4874, %v4876
        %v4878 = vrot.slane %v4818, 4
        %v4879 = vsel %vm1789, %v4876, %v4878
        %v4880 = vrot.slane %v4819, 4
        %v4881 = vsel %vm1789, %v4878, %v4880
        %v4882 = vrot.slane %v4820, 4
        %v4883 = vsel %vm1789, %v4880, %v4882
        %v4884 = vrot.slane %v4821, 4
        %v4885 = vsel %vm1789, %v4882, %v4884
        %v4886 = vrot.slane %v4822, 4
        %v4887 = vsel %vm1789, %v4884, %v4886
        %v4888 = vrot.slane %v4823, 4
        %v4889 = vsel %vm1789, %v4886, %v4888
        %v4890 = vrot.slane %v4824, 4
        %v4891 = vsel %vm1789, %v4888, %v4890
        %v4892 = vrot.slane %v4825, 4
        %v4893 = vsel %vm1789, %v4890, %v4892
        %v4894 = vrot.slane %v4826, 4
        %v4895 = vsel %vm1789, %v4892, %v4894
        %v4896 = vrot.slane %v4827, 4
        %v4897 = vsel %vm1789, %v4894, %v4896
        %v4898 = vrot.slane %v4828, 4
        %v4899 = vsel %vm1789, %v4896, %v4898
        %v4900 = vrot.slane %v4829, 4
        %v4901 = vsel %vm1789, %v4898, %v4900
        %v4902 = vrot.slane %v4830, 4
        %v4903 = vsel %vm1789, %v4900, %v4902
        %v4904 = vrot.slane %v4831, 4
        %v4905 = vsel %vm1789, %v4902, %v4904
        %v4931 = vadd.f32 %v4625, %v4859
        %v4932 = vadd.f32 %v4626, %v4861
        %v4933 = vadd.f32 %v4627, %v4863
        %v4934 = vadd.f32 %v4628, %v4865
        %v4935 = vadd.f32 %v4629, %v4867
        %v4936 = vadd.f32 %v4630, %v4869
        %v4937 = vadd.f32 %v4631, %v4871
        %v4938 = vadd.f32 %v4632, %v4873
        %v4939 = vadd.f32 %v4633, %v4875
        %v4940 = vadd.f32 %v4634, %v4877
        %v4941 = vadd.f32 %v4635, %v4879
        %v4942 = vadd.f32 %v4636, %v4881
        %v4943 = vadd.f32 %v4637, %v4883
        %v4944 = vadd.f32 %v4638, %v4885
        %v4945 = vadd.f32 %v4639, %v4887
        %v4946 = vadd.f32 %v4640, %v4889
        %v4947 = vadd.f32 %v4641, %v4891
        %v4948 = vadd.f32 %v4642, %v4893
        %v4949 = vadd.f32 %v4643, %v4895
        %v4950 = vadd.f32 %v4644, %v4897
        %v4951 = vadd.f32 %v4645, %v4899
        %v4952 = vadd.f32 %v4646, %v4901
        %v4953 = vadd.f32 %v4647, %v4903
        %v4954 = vadd.f32 %v4648, %v4905
        %v4955 = vadd.f32 %v4649, %v4904
        %v4956 = vlaneseq
        %v4957 = vshrl.u32 %v4956, 7
        %v4958 = vsub.s32 5, %v4957
        %v4959 = vrot.slane %v1319, %v4958
        %v4960 = vmul.f32 %v1291, %v4959
        %v4961 = vmul.f32 %v1292, %v4959
        %v4962 = vmul.f32 %v1293, %v4959
        %v4963 = vmul.f32 %v1294, %v4959
        %v4964 = vmul.f32 %v1295, %v4959
        %v4965 = vmul.f32 %v1296, %v4959
        %v4966 = vmul.f32 %v1297, %v4959
        %v4967 = vmul.f32 %v1298, %v4959
        %v4968 = vmul.f32 %v1299, %v4959
        %v4969 = vmul.f32 %v1300, %v4959
        %v4970 = vmul.f32 %v1301, %v4959
        %v4971 = vmul.f32 %v1302, %v4959
        %v4972 = vmul.f32 %v1303, %v4959
        %v4973 = vmul.f32 %v1304, %v4959
        %v4974 = vmul.f32 %v1305, %v4959
        %v4975 = vmul.f32 %v1306, %v4959
        %v4976 = vmul.f32 %v1307, %v4959
        %v4977 = vmul.f32 %v1308, %v4959
        %v4978 = vmul.f32 %v1309, %v4959
        %v4979 = vmul.f32 %v1310, %v4959
        %v4980 = vmul.f32 %v1311, %v4959
        %v4981 = vmul.f32 %v1312, %v4959
        %v4982 = vmul.f32 %v1313, %v4959
        %v4983 = vmul.f32 %v1314, %v4959
        %v4984 = vmul.f32 %v1315, %v4959
        %v5010 = vrot.slane %v4960, 4
        %v5011 = vrot.slane %v4961, 4
        %v5012 = vsel %vm1789, %v5010, %v5011
        %v5013 = vrot.slane %v4962, 4
        %v5014 = vsel %vm1789, %v5011, %v5013
        %v5015 = vrot.slane %v4963, 4
        %v5016 = vsel %vm1789, %v5013, %v5015
        %v5017 = vrot.slane %v4964, 4
        %v5018 = vsel %vm1789, %v5015, %v5017
        %v5019 = vrot.slane %v4965, 4
        %v5020 = vsel %vm1789, %v5017, %v5019
        %v5021 = vrot.slane %v4966, 4
        %v5022 = vsel %vm1789, %v5019, %v5021
        %v5023 = vrot.slane %v4967, 4
        %v5024 = vsel %vm1789, %v5021, %v5023
        %v5025 = vrot.slane %v4968, 4
        %v5026 = vsel %vm1789, %v5023, %v5025
        %v5027 = vrot.slane %v4969, 4
        %v5028 = vsel %vm1789, %v5025, %v5027
        %v5029 = vrot.slane %v4970, 4
        %v5030 = vsel %vm1789, %v5027, %v5029
        %v5031 = vrot.slane %v4971, 4
        %v5032 = vsel %vm1789, %v5029, %v5031
        %v5033 = vrot.slane %v4972, 4
        %v5034 = vsel %vm1789, %v5031, %v5033
        %v5035 = vrot.slane %v4973, 4
        %v5036 = vsel %vm1789, %v5033, %v5035
        %v5037 = vrot.slane %v4974, 4
        %v5038 = vsel %vm1789, %v5035, %v5037
        %v5039 = vrot.slane %v4975, 4
        %v5040 = vsel %vm1789, %v5037, %v5039
        %v5041 = vrot.slane %v4976, 4
        %v5042 = vsel %vm1789, %v5039, %v5041
        %v5043 = vrot.slane %v4977, 4
        %v5044 = vsel %vm1789, %v5041, %v5043
        %v5045 = vrot.slane %v4978, 4
        %v5046 = vsel %vm1789, %v5043, %v5045
        %v5047 = vrot.slane %v4979, 4
        %v5048 = vsel %vm1789, %v5045, %v5047
        %v5049 = vrot.slane %v4980, 4
        %v5050 = vsel %vm1789, %v5047, %v5049
        %v5051 = vrot.slane %v4981, 4
        %v5052 = vsel %vm1789, %v5049, %v5051
        %v5053 = vrot.slane %v4982, 4
        %v5054 = vsel %vm1789, %v5051, %v5053
        %v5055 = vrot.slane %v4983, 4
        %v5056 = vsel %vm1789, %v5053, %v5055
        %v5057 = vrot.slane %v4984, 4
        %v5058 = vsel %vm1789, %v5055, %v5057
        %v5084 = vadd.f32 %v4778, %v5012
        %v5085 = vadd.f32 %v4779, %v5014
        %v5086 = vadd.f32 %v4780, %v5016
        %v5087 = vadd.f32 %v4781, %v5018
        %v5088 = vadd.f32 %v4782, %v5020
        %v5089 = vadd.f32 %v4783, %v5022
        %v5090 = vadd.f32 %v4784, %v5024
        %v5091 = vadd.f32 %v4785, %v5026
        %v5092 = vadd.f32 %v4786, %v5028
        %v5093 = vadd.f32 %v4787, %v5030
        %v5094 = vadd.f32 %v4788, %v5032
        %v5095 = vadd.f32 %v4789, %v5034
        %v5096 = vadd.f32 %v4790, %v5036
        %v5097 = vadd.f32 %v4791, %v5038
        %v5098 = vadd.f32 %v4792, %v5040
        %v5099 = vadd.f32 %v4793, %v5042
        %v5100 = vadd.f32 %v4794, %v5044
        %v5101 = vadd.f32 %v4795, %v5046
        %v5102 = vadd.f32 %v4796, %v5048
        %v5103 = vadd.f32 %v4797, %v5050
        %v5104 = vadd.f32 %v4798, %v5052
        %v5105 = vadd.f32 %v4799, %v5054
        %v5106 = vadd.f32 %v4800, %v5056
        %v5107 = vadd.f32 %v4801, %v5058
        %v5108 = vadd.f32 %v4802, %v5057
        %v5109 = vlaneseq
        %v5110 = vshrl.u32 %v5109, 7
        %v5111 = vsub.s32 6, %v5110
        %v5112 = vrot.slane %v1319, %v5111
        %v5113 = vmul.f32 %v1291, %v5112
        %v5114 = vmul.f32 %v1292, %v5112
        %v5115 = vmul.f32 %v1293, %v5112
        %v5116 = vmul.f32 %v1294, %v5112
        %v5117 = vmul.f32 %v1295, %v5112
        %v5118 = vmul.f32 %v1296, %v5112
        %v5119 = vmul.f32 %v1297, %v5112
        %v5120 = vmul.f32 %v1298, %v5112
        %v5121 = vmul.f32 %v1299, %v5112
        %v5122 = vmul.f32 %v1300, %v5112
        %v5123 = vmul.f32 %v1301, %v5112
        %v5124 = vmul.f32 %v1302, %v5112
        %v5125 = vmul.f32 %v1303, %v5112
        %v5126 = vmul.f32 %v1304, %v5112
        %v5127 = vmul.f32 %v1305, %v5112
        %v5128 = vmul.f32 %v1306, %v5112
        %v5129 = vmul.f32 %v1307, %v5112
        %v5130 = vmul.f32 %v1308, %v5112
        %v5131 = vmul.f32 %v1309, %v5112
        %v5132 = vmul.f32 %v1310, %v5112
        %v5133 = vmul.f32 %v1311, %v5112
        %v5134 = vmul.f32 %v1312, %v5112
        %v5135 = vmul.f32 %v1313, %v5112
        %v5136 = vmul.f32 %v1314, %v5112
        %v5137 = vmul.f32 %v1315, %v5112
        %v5163 = vrot.slane %v5113, 6
        %v5164 = vrot.slane %v5114, 6
        %v5165 = vsel %vm2096, %v5163, %v5164
        %v5166 = vrot.slane %v5115, 6
        %v5167 = vsel %vm2096, %v5164, %v5166
        %v5168 = vrot.slane %v5116, 6
        %v5169 = vsel %vm2096, %v5166, %v5168
        %v5170 = vrot.slane %v5117, 6
        %v5171 = vsel %vm2096, %v5168, %v5170
        %v5172 = vrot.slane %v5118, 6
        %v5173 = vsel %vm2096, %v5170, %v5172
        %v5174 = vrot.slane %v5119, 6
        %v5175 = vsel %vm2096, %v5172, %v5174
        %v5176 = vrot.slane %v5120, 6
        %v5177 = vsel %vm2096, %v5174, %v5176
        %v5178 = vrot.slane %v5121, 6
        %v5179 = vsel %vm2096, %v5176, %v5178
        %v5180 = vrot.slane %v5122, 6
        %v5181 = vsel %vm2096, %v5178, %v5180
        %v5182 = vrot.slane %v5123, 6
        %v5183 = vsel %vm2096, %v5180, %v5182
        %v5184 = vrot.slane %v5124, 6
        %v5185 = vsel %vm2096, %v5182, %v5184
        %v5186 = vrot.slane %v5125, 6
        %v5187 = vsel %vm2096, %v5184, %v5186
        %v5188 = vrot.slane %v5126, 6
        %v5189 = vsel %vm2096, %v5186, %v5188
        %v5190 = vrot.slane %v5127, 6
        %v5191 = vsel %vm2096, %v5188, %v5190
        %v5192 = vrot.slane %v5128, 6
        %v5193 = vsel %vm2096, %v5190, %v5192
        %v5194 = vrot.slane %v5129, 6
        %v5195 = vsel %vm2096, %v5192, %v5194
        %v5196 = vrot.slane %v5130, 6
        %v5197 = vsel %vm2096, %v5194, %v5196
        %v5198 = vrot.slane %v5131, 6
        %v5199 = vsel %vm2096, %v5196, %v5198
        %v5200 = vrot.slane %v5132, 6
        %v5201 = vsel %vm2096, %v5198, %v5200
        %v5202 = vrot.slane %v5133, 6
        %v5203 = vsel %vm2096, %v5200, %v5202
        %v5204 = vrot.slane %v5134, 6
        %v5205 = vsel %vm2096, %v5202, %v5204
        %v5206 = vrot.slane %v5135, 6
        %v5207 = vsel %vm2096, %v5204, %v5206
        %v5208 = vrot.slane %v5136, 6
        %v5209 = vsel %vm2096, %v5206, %v5208
        %v5210 = vrot.slane %v5137, 6
        %v5211 = vsel %vm2096, %v5208, %v5210
        %v5237 = vadd.f32 %v4931, %v5165
        %v5238 = vadd.f32 %v4932, %v5167
        %v5239 = vadd.f32 %v4933, %v5169
        %v5240 = vadd.f32 %v4934, %v5171
        %v5241 = vadd.f32 %v4935, %v5173
        %v5242 = vadd.f32 %v4936, %v5175
        %v5243 = vadd.f32 %v4937, %v5177
        %v5244 = vadd.f32 %v4938, %v5179
        %v5245 = vadd.f32 %v4939, %v5181
        %v5246 = vadd.f32 %v4940, %v5183
        %v5247 = vadd.f32 %v4941, %v5185
        %v5248 = vadd.f32 %v4942, %v5187
        %v5249 = vadd.f32 %v4943, %v5189
        %v5250 = vadd.f32 %v4944, %v5191
        %v5251 = vadd.f32 %v4945, %v5193
        %v5252 = vadd.f32 %v4946, %v5195
        %v5253 = vadd.f32 %v4947, %v5197
        %v5254 = vadd.f32 %v4948, %v5199
        %v5255 = vadd.f32 %v4949, %v5201
        %v5256 = vadd.f32 %v4950, %v5203
        %v5257 = vadd.f32 %v4951, %v5205
        %v5258 = vadd.f32 %v4952, %v5207
        %v5259 = vadd.f32 %v4953, %v5209
        %v5260 = vadd.f32 %v4954, %v5211
        %v5261 = vadd.f32 %v4955, %v5210
        %vm5287 = vcmask 1046528
        %v5288 = vrot.slane %v5084, 1
        %v5289 = vrot.slane %v5085, 1
        %v5290 = vsel %vm5287, %v5288, %v5289
        %v5291 = vrot.slane %v5086, 1
        %v5292 = vsel %vm5287, %v5289, %v5291
        %v5293 = vrot.slane %v5087, 1
        %v5294 = vsel %vm5287, %v5291, %v5293
        %v5295 = vrot.slane %v5088, 1
        %v5296 = vsel %vm5287, %v5293, %v5295
        %v5297 = vrot.slane %v5089, 1
        %v5298 = vsel %vm5287, %v5295, %v5297
        %v5299 = vrot.slane %v5090, 1
        %v5300 = vsel %vm5287, %v5297, %v5299
        %v5301 = vrot.slane %v5091, 1
        %v5302 = vsel %vm5287, %v5299, %v5301
        %v5303 = vrot.slane %v5092, 1
        %v5304 = vsel %vm5287, %v5301, %v5303
        %v5305 = vrot.slane %v5093, 1
        %v5306 = vsel %vm5287, %v5303, %v5305
        %v5307 = vrot.slane %v5094, 1
        %v5308 = vsel %vm5287, %v5305, %v5307
        %v5309 = vrot.slane %v5095, 1
        %v5310 = vsel %vm5287, %v5307, %v5309
        %v5311 = vrot.slane %v5096, 1
        %v5312 = vsel %vm5287, %v5309, %v5311
        %v5313 = vrot.slane %v5097, 1
        %v5314 = vsel %vm5287, %v5311, %v5313
        %v5315 = vrot.slane %v5098, 1
        %v5316 = vsel %vm5287, %v5313, %v5315
        %v5317 = vrot.slane %v5099, 1
        %v5318 = vsel %vm5287, %v5315, %v5317
        %v5319 = vrot.slane %v5100, 1
        %v5320 = vsel %vm5287, %v5317, %v5319
        %v5321 = vrot.slane %v5101, 1
        %v5322 = vsel %vm5287, %v5319, %v5321
        %v5323 = vrot.slane %v5102, 1
        %v5324 = vsel %vm5287, %v5321, %v5323
        %v5325 = vrot.slane %v5103, 1
        %v5326 = vsel %vm5287, %v5323, %v5325
        %v5327 = vrot.slane %v5104, 1
        %v5328 = vsel %vm5287, %v5325, %v5327
        %v5329 = vrot.slane %v5105, 1
        %v5330 = vsel %vm5287, %v5327, %v5329
        %v5331 = vrot.slane %v5106, 1
        %v5332 = vsel %vm5287, %v5329, %v5331
        %v5333 = vrot.slane %v5107, 1
        %v5334 = vsel %vm5287, %v5331, %v5333
        %v5335 = vrot.slane %v5108, 1
        %v5336 = vsel %vm5287, %v5333, %v5335
        %v5362 = vadd.f32 %v5237, %v5290
        %v5363 = vadd.f32 %v5238, %v5292
        %v5364 = vadd.f32 %v5239, %v5294
        %v5365 = vadd.f32 %v5240, %v5296
        %v5366 = vadd.f32 %v5241, %v5298
        %v5367 = vadd.f32 %v5242, %v5300
        %v5368 = vadd.f32 %v5243, %v5302
        %v5369 = vadd.f32 %v5244, %v5304
        %v5370 = vadd.f32 %v5245, %v5306
        %v5371 = vadd.f32 %v5246, %v5308
        %v5372 = vadd.f32 %v5247, %v5310
        %v5373 = vadd.f32 %v5248, %v5312
        %v5374 = vadd.f32 %v5249, %v5314
        %v5375 = vadd.f32 %v5250, %v5316
        %v5376 = vadd.f32 %v5251, %v5318
        %v5377 = vadd.f32 %v5252, %v5320
        %v5378 = vadd.f32 %v5253, %v5322
        %v5379 = vadd.f32 %v5254, %v5324
        %v5380 = vadd.f32 %v5255, %v5326
        %v5381 = vadd.f32 %v5256, %v5328
        %v5382 = vadd.f32 %v5257, %v5330
        %v5383 = vadd.f32 %v5258, %v5332
        %v5384 = vadd.f32 %v5259, %v5334
        %v5385 = vadd.f32 %v5260, %v5336
        %v5386 = vadd.f32 %v5261, %v5335
        %v5387 = vld [vmem:[%s6] sm:$0x1]
        %v5389 = vlaneseq
        %v5390 = vshrl.u32 %v5389, 7
        %v5391 = vsub.s32 0, %v5390
        %v5392 = vrot.slane %v5387, %v5391
        %v5394 = vadd.f32 %v5362, %v5392
        %v5395 = vadd.f32 %v5363, %v5392
        %v5396 = vadd.f32 %v5364, %v5392
        %v5397 = vadd.f32 %v5365, %v5392
        %v5398 = vadd.f32 %v5366, %v5392
        %v5399 = vadd.f32 %v5367, %v5392
        %v5400 = vadd.f32 %v5368, %v5392
        %v5401 = vadd.f32 %v5369, %v5392
        %v5402 = vadd.f32 %v5370, %v5392
        %v5403 = vadd.f32 %v5371, %v5392
        %v5404 = vadd.f32 %v5372, %v5392
        %v5405 = vadd.f32 %v5373, %v5392
        %v5406 = vadd.f32 %v5374, %v5392
        %v5407 = vadd.f32 %v5375, %v5392
        %v5408 = vadd.f32 %v5376, %v5392
        %v5409 = vadd.f32 %v5377, %v5392
        %v5410 = vadd.f32 %v5378, %v5392
        %v5411 = vadd.f32 %v5379, %v5392
        %v5412 = vadd.f32 %v5380, %v5392
        %v5413 = vadd.f32 %v5381, %v5392
        %v5414 = vadd.f32 %v5382, %v5392
        %v5415 = vadd.f32 %v5383, %v5392
        %v5416 = vadd.f32 %v5384, %v5392
        %v5417 = vadd.f32 %v5385, %v5392
        %v5418 = vadd.f32 %v5386, %v5392
        %v5419 = vxor.u32 %v5394, 2147483648
        %v5420 = vxor.u32 %v5395, 2147483648
        %v5421 = vxor.u32 %v5396, 2147483648
        %v5422 = vxor.u32 %v5397, 2147483648
        %v5423 = vxor.u32 %v5398, 2147483648
        %v5424 = vxor.u32 %v5399, 2147483648
        %v5425 = vxor.u32 %v5400, 2147483648
        %v5426 = vxor.u32 %v5401, 2147483648
        %v5427 = vxor.u32 %v5402, 2147483648
        %v5428 = vxor.u32 %v5403, 2147483648
        %v5429 = vxor.u32 %v5404, 2147483648
        %v5430 = vxor.u32 %v5405, 2147483648
        %v5431 = vxor.u32 %v5406, 2147483648
        %v5432 = vxor.u32 %v5407, 2147483648
        %v5433 = vxor.u32 %v5408, 2147483648
        %v5434 = vxor.u32 %v5409, 2147483648
        %v5435 = vxor.u32 %v5410, 2147483648
        %v5436 = vxor.u32 %v5411, 2147483648
        %v5437 = vxor.u32 %v5412, 2147483648
        %v5438 = vxor.u32 %v5413, 2147483648
        %v5439 = vxor.u32 %v5414, 2147483648
        %v5440 = vxor.u32 %v5415, 2147483648
        %v5441 = vxor.u32 %v5416, 2147483648
        %v5442 = vxor.u32 %v5417, 2147483648
        %v5443 = vxor.u32 %v5418, 2147483648
        %v5444 = vmul.f32 %v5419, 1.442695
        %v5445 = vpow.pop %v5444
        %v5446 = vmul.f32 %v5420, 1.442695
        %v5447 = vpow.pop %v5446
        %v5448 = vmul.f32 %v5421, 1.442695
        %v5449 = vpow.pop %v5448
        %v5450 = vmul.f32 %v5422, 1.442695
        %v5451 = vpow.pop %v5450
        %v5452 = vmul.f32 %v5423, 1.442695
        %v5453 = vpow.pop %v5452
        %v5454 = vmul.f32 %v5424, 1.442695
        %v5455 = vpow.pop %v5454
        %v5456 = vmul.f32 %v5425, 1.442695
        %v5457 = vpow.pop %v5456
        %v5458 = vmul.f32 %v5426, 1.442695
        %v5459 = vpow.pop %v5458
        %v5460 = vmul.f32 %v5427, 1.442695
        %v5461 = vpow.pop %v5460
        %v5462 = vmul.f32 %v5428, 1.442695
        %v5463 = vpow.pop %v5462
        %v5464 = vmul.f32 %v5429, 1.442695
        %v5465 = vpow.pop %v5464
        %v5466 = vmul.f32 %v5430, 1.442695
        %v5467 = vpow.pop %v5466
        %v5468 = vmul.f32 %v5431, 1.442695
        %v5469 = vpow.pop %v5468
        %v5470 = vmul.f32 %v5432, 1.442695
        %v5471 = vpow.pop %v5470
        %v5472 = vmul.f32 %v5433, 1.442695
        %v5473 = vpow.pop %v5472
        %v5474 = vmul.f32 %v5434, 1.442695
        %v5475 = vpow.pop %v5474
        %v5476 = vmul.f32 %v5435, 1.442695
        %v5477 = vpow.pop %v5476
        %v5478 = vmul.f32 %v5436, 1.442695
        %v5479 = vpow.pop %v5478
        %v5480 = vmul.f32 %v5437, 1.442695
        %v5481 = vpow.pop %v5480
        %v5482 = vmul.f32 %v5438, 1.442695
        %v5483 = vpow.pop %v5482
        %v5484 = vmul.f32 %v5439, 1.442695
        %v5485 = vpow.pop %v5484
        %v5486 = vmul.f32 %v5440, 1.442695
        %v5487 = vpow.pop %v5486
        %v5488 = vmul.f32 %v5441, 1.442695
        %v5489 = vpow.pop %v5488
        %v5490 = vmul.f32 %v5442, 1.442695
        %v5491 = vpow.pop %v5490
        %v5492 = vmul.f32 %v5443, 1.442695
        %v5493 = vpow.pop %v5492
        %v5494 = vadd.f32 %v5445, 1.0
        %v5495 = vadd.f32 %v5447, 1.0
        %v5496 = vadd.f32 %v5449, 1.0
        %v5497 = vadd.f32 %v5451, 1.0
        %v5498 = vadd.f32 %v5453, 1.0
        %v5499 = vadd.f32 %v5455, 1.0
        %v5500 = vadd.f32 %v5457, 1.0
        %v5501 = vadd.f32 %v5459, 1.0
        %v5502 = vadd.f32 %v5461, 1.0
        %v5503 = vadd.f32 %v5463, 1.0
        %v5504 = vadd.f32 %v5465, 1.0
        %v5505 = vadd.f32 %v5467, 1.0
        %v5506 = vadd.f32 %v5469, 1.0
        %v5507 = vadd.f32 %v5471, 1.0
        %v5508 = vadd.f32 %v5473, 1.0
        %v5509 = vadd.f32 %v5475, 1.0
        %v5510 = vadd.f32 %v5477, 1.0
        %v5511 = vadd.f32 %v5479, 1.0
        %v5512 = vadd.f32 %v5481, 1.0
        %v5513 = vadd.f32 %v5483, 1.0
        %v5514 = vadd.f32 %v5485, 1.0
        %v5515 = vadd.f32 %v5487, 1.0
        %v5516 = vadd.f32 %v5489, 1.0
        %v5517 = vadd.f32 %v5491, 1.0
        %v5518 = vadd.f32 %v5493, 1.0
        %v5519 = vrcp.pop %v5494
        %v5520 = vmul.f32 1.0, %v5519
        %v5521 = vrcp.pop %v5495
        %v5522 = vmul.f32 1.0, %v5521
        %v5523 = vrcp.pop %v5496
        %v5524 = vmul.f32 1.0, %v5523
        %v5525 = vrcp.pop %v5497
        %v5526 = vmul.f32 1.0, %v5525
        %v5527 = vrcp.pop %v5498
        %v5528 = vmul.f32 1.0, %v5527
        %v5529 = vrcp.pop %v5499
        %v5530 = vmul.f32 1.0, %v5529
        %v5531 = vrcp.pop %v5500
        %v5532 = vmul.f32 1.0, %v5531
        %v5533 = vrcp.pop %v5501
        %v5534 = vmul.f32 1.0, %v5533
        %v5535 = vrcp.pop %v5502
        %v5536 = vmul.f32 1.0, %v5535
        %v5537 = vrcp.pop %v5503
        %v5538 = vmul.f32 1.0, %v5537
        %v5539 = vrcp.pop %v5504
        %v5540 = vmul.f32 1.0, %v5539
        %v5541 = vrcp.pop %v5505
        %v5542 = vmul.f32 1.0, %v5541
        %v5543 = vrcp.pop %v5506
        %v5544 = vmul.f32 1.0, %v5543
        %v5545 = vrcp.pop %v5507
        %v5546 = vmul.f32 1.0, %v5545
        %v5547 = vrcp.pop %v5508
        %v5548 = vmul.f32 1.0, %v5547
        %v5549 = vrcp.pop %v5509
        %v5550 = vmul.f32 1.0, %v5549
        %v5551 = vrcp.pop %v5510
        %v5552 = vmul.f32 1.0, %v5551
        %v5553 = vrcp.pop %v5511
        %v5554 = vmul.f32 1.0, %v5553
        %v5555 = vrcp.pop %v5512
        %v5556 = vmul.f32 1.0, %v5555
        %v5557 = vrcp.pop %v5513
        %v5558 = vmul.f32 1.0, %v5557
        %v5559 = vrcp.pop %v5514
        %v5560 = vmul.f32 1.0, %v5559
        %v5561 = vrcp.pop %v5515
        %v5562 = vmul.f32 1.0, %v5561
        %v5563 = vrcp.pop %v5516
        %v5564 = vmul.f32 1.0, %v5563
        %v5565 = vrcp.pop %v5517
        %v5566 = vmul.f32 1.0, %v5565
        %v5567 = vrcp.pop %v5518
        %v5568 = vmul.f32 1.0, %v5567
        %v5569 = vmul.f32 %v5394, %v5520
        %v5570 = vmul.f32 %v5395, %v5522
        %v5571 = vmul.f32 %v5396, %v5524
        %v5572 = vmul.f32 %v5397, %v5526
        %v5573 = vmul.f32 %v5398, %v5528
        %v5574 = vmul.f32 %v5399, %v5530
        %v5575 = vmul.f32 %v5400, %v5532
        %v5576 = vmul.f32 %v5401, %v5534
        %v5577 = vmul.f32 %v5402, %v5536
        %v5578 = vmul.f32 %v5403, %v5538
        %v5579 = vmul.f32 %v5404, %v5540
        %v5580 = vmul.f32 %v5405, %v5542
        %v5581 = vmul.f32 %v5406, %v5544
        %v5582 = vmul.f32 %v5407, %v5546
        %v5583 = vmul.f32 %v5408, %v5548
        %v5584 = vmul.f32 %v5409, %v5550
        %v5585 = vmul.f32 %v5410, %v5552
        %v5586 = vmul.f32 %v5411, %v5554
        %v5587 = vmul.f32 %v5412, %v5556
        %v5588 = vmul.f32 %v5413, %v5558
        %v5589 = vmul.f32 %v5414, %v5560
        %v5590 = vmul.f32 %v5415, %v5562
        %v5591 = vmul.f32 %v5416, %v5564
        %v5592 = vmul.f32 %v5417, %v5566
        %v5593 = vmul.f32 %v5418, %v5568
        %v5594 = vpack.c.bf16 %v5570, %v5569
        %v5595 = vpack.c.bf16 %v5572, %v5571
        %v5596 = vpack.c.bf16 %v5574, %v5573
        %v5597 = vpack.c.bf16 %v5576, %v5575
        %v5598 = vpack.c.bf16 %v5578, %v5577
        %v5599 = vpack.c.bf16 %v5580, %v5579
        %v5600 = vpack.c.bf16 %v5582, %v5581
        %v5601 = vpack.c.bf16 %v5584, %v5583
        %v5602 = vpack.c.bf16 %v5586, %v5585
        %v5603 = vpack.c.bf16 %v5588, %v5587
        %v5604 = vpack.c.bf16 %v5590, %v5589
        %v5605 = vpack.c.bf16 %v5592, %v5591
        %v5606 = vpack.c.bf16 %v5593, %v5593
        %v5607 = vld [vmem:[#allocation11] sm:$0xf]
        %v5608 = vld [vmem:[#allocation11 + $0x4] sm:$0xf]
        %v5609 = vld [vmem:[#allocation11 + $0x8] sm:$0xf]
        %v5610 = vld [vmem:[#allocation11 + $0xc] sm:$0xf]
        %v5611 = vld [vmem:[#allocation11 + $0x10] sm:$0xf]
        %v5612 = vld [vmem:[#allocation11 + $0x14] sm:$0xf]
        %v5613 = vld [vmem:[#allocation11 + $0x18] sm:$0xf]
        %v5614 = vld [vmem:[#allocation11 + $0x1c] sm:$0xf]
        %v5615 = vld [vmem:[#allocation11 + $0x20] sm:$0xf]
        %v5616 = vld [vmem:[#allocation11 + $0x24] sm:$0xf]
        %v5617 = vld [vmem:[#allocation11 + $0x28] sm:$0xf]
        %v5618 = vld [vmem:[#allocation11 + $0x2c] sm:$0xf]
        %v5619 = vld [vmem:[#allocation11 + $0x30] sm:$0xf]
        %v5620 = vld [vmem:[#allocation11 + $0x34] sm:$0xf]
        %v5621 = vld [vmem:[#allocation11 + $0x38] sm:$0xf]
        %v5622 = vld [vmem:[#allocation11 + $0x3c] sm:$0xf]
        %v5623 = vld [vmem:[%s8] sm:$0x1]
        %v5625 = vlaneseq
        %v5626 = vshrl.u32 %v5625, 7
        %v5627 = vsub.s32 0, %v5626
        %v5628 = vrot.slane %v5623, %v5627
        %vm5630 = vsmask.f32 7424
        %v5632 = vshrl.u32 %v5594, 16
        %v5634 = vshll.u32 %v5594, 16
        %v5636 = vrot.slane %v5634, 1
        %v5637 = vor.u32 %v5632, %v5636
        %v5639 = vshll.u32 %v5595, 16
        %v5641 = vrot.slane %v5639, 1
        %v5642 = vsel %vm5630, %v5637, %v5641
        %v5643 = vshrl.u32 %v5595, 16
        %v5645 = vor.u32 %v5643, %v5641
        %v5647 = vshll.u32 %v5596, 16
        %v5649 = vrot.slane %v5647, 1
        %v5650 = vsel %vm5630, %v5645, %v5649
        %v5651 = vshrl.u32 %v5596, 16
        %v5653 = vor.u32 %v5651, %v5649
        %v5655 = vshll.u32 %v5597, 16
        %v5657 = vrot.slane %v5655, 1
        %v5658 = vsel %vm5630, %v5653, %v5657
        %v5659 = vshrl.u32 %v5597, 16
        %v5661 = vor.u32 %v5659, %v5657
        %v5663 = vshll.u32 %v5598, 16
        %v5665 = vrot.slane %v5663, 1
        %v5666 = vsel %vm5630, %v5661, %v5665
        %v5667 = vshrl.u32 %v5598, 16
        %v5669 = vor.u32 %v5667, %v5665
        %v5671 = vshll.u32 %v5599, 16
        %v5673 = vrot.slane %v5671, 1
        %v5674 = vsel %vm5630, %v5669, %v5673
        %v5675 = vshrl.u32 %v5599, 16
        %v5677 = vor.u32 %v5675, %v5673
        %v5679 = vshll.u32 %v5600, 16
        %v5681 = vrot.slane %v5679, 1
        %v5682 = vsel %vm5630, %v5677, %v5681
        %v5683 = vshrl.u32 %v5600, 16
        %v5685 = vor.u32 %v5683, %v5681
        %v5687 = vshll.u32 %v5601, 16
        %v5689 = vrot.slane %v5687, 1
        %v5690 = vsel %vm5630, %v5685, %v5689
        %v5691 = vshrl.u32 %v5601, 16
        %v5693 = vor.u32 %v5691, %v5689
        %v5695 = vshll.u32 %v5602, 16
        %v5697 = vrot.slane %v5695, 1
        %v5698 = vsel %vm5630, %v5693, %v5697
        %v5699 = vshrl.u32 %v5602, 16
        %v5701 = vor.u32 %v5699, %v5697
        %v5703 = vshll.u32 %v5603, 16
        %v5705 = vrot.slane %v5703, 1
        %v5706 = vsel %vm5630, %v5701, %v5705
        %v5707 = vshrl.u32 %v5603, 16
        %v5709 = vor.u32 %v5707, %v5705
        %v5711 = vshll.u32 %v5604, 16
        %v5713 = vrot.slane %v5711, 1
        %v5714 = vsel %vm5630, %v5709, %v5713
        %v5715 = vshrl.u32 %v5604, 16
        %v5717 = vor.u32 %v5715, %v5713
        %v5719 = vshll.u32 %v5605, 16
        %v5721 = vrot.slane %v5719, 1
        %v5722 = vsel %vm5630, %v5717, %v5721
        %v5723 = vshrl.u32 %v5605, 16
        %v5725 = vor.u32 %v5723, %v5721
        %v5727 = vshll.u32 %v5606, 16
        %v5729 = vrot.slane %v5727, 1
        %v5730 = vsel %vm5630, %v5725, %v5729
        %v5759 = vunpack.c.l.b16 %v5607
        %v5760 = vunpack.c.l.b16 %v5608
        %v5761 = vunpack.c.l.b16 %v5609
        %v5762 = vunpack.c.l.b16 %v5610
        %v5763 = vunpack.c.l.b16 %v5611
        %v5764 = vunpack.c.l.b16 %v5612
        %v5765 = vunpack.c.l.b16 %v5613
        %v5766 = vunpack.c.l.b16 %v5614
        %v5767 = vunpack.c.l.b16 %v5615
        %v5768 = vunpack.c.l.b16 %v5616
        %v5769 = vunpack.c.l.b16 %v5617
        %v5770 = vunpack.c.l.b16 %v5618
        %v5771 = vunpack.c.l.b16 %v5619
        %v5772 = vunpack.c.l.b16 %v5620
        %v5773 = vunpack.c.l.b16 %v5621
        %v5774 = vunpack.c.l.b16 %v5622
        %v5775 = vpack.c.b16 %v5760, %v5759
        %v5776 = vpack.c.b16 %v5762, %v5761
        %v5777 = vpack.c.b16 %v5764, %v5763
        %v5778 = vpack.c.b16 %v5766, %v5765
        %v5779 = vpack.c.b16 %v5768, %v5767
        %v5780 = vpack.c.b16 %v5770, %v5769
        %v5781 = vpack.c.b16 %v5772, %v5771
        %v5782 = vpack.c.b16 %v5774, %v5773
        %5791 = vmatprep.subr.bf16.mxu0 0
        %5792 = vmatpush1.bf16.msra.mxu0 %v5775
        %5793 = vmatprep.subr.bf16.mxu0 0
        %5794 = vmatpush1.bf16.msra.mxu0 %v5776
        %5795 = vmatprep.subr.bf16.mxu0 0
        %5796 = vmatpush1.bf16.msra.mxu0 %v5777
        %5797 = vmatprep.subr.bf16.mxu0 0
        %5798 = vmatpush1.bf16.msra.mxu0 %v5778
        %5799 = vmatprep.subr.bf16.mxu0 0
        %5800 = vmatpush1.bf16.msra.mxu0 %v5779
        %5801 = vmatprep.subr.bf16.mxu0 0
        %5802 = vmatpush1.bf16.msra.mxu0 %v5780
        %5803 = vmatprep.subr.bf16.mxu0 0
        %5804 = vmatpush1.bf16.msra.mxu0 %v5781
        %5805 = vmatprep.subr.bf16.mxu0 0
        %5806 = vmatpush1.bf16.msra.mxu0 %v5782
        %5807 = vmatprep.subr.bf16.mxu0 0
        %5808 = vmatpush1.bf16.msra.mxu0 0
        %5809 = vmatprep.subr.bf16.mxu0 0
        %5810 = vmatpush1.bf16.msra.mxu0 0
        %5811 = vmatprep.subr.bf16.mxu0 0
        %5812 = vmatpush1.bf16.msra.mxu0 0
        %5813 = vmatprep.subr.bf16.mxu0 0
        %5814 = vmatpush1.bf16.msra.mxu0 0
        %5815 = vmatprep.subr.bf16.mxu0 0
        %5816 = vmatpush1.bf16.msra.mxu0 0
        %5817 = vmatprep.subr.bf16.mxu0 0
        %5818 = vmatpush1.bf16.msra.mxu0 0
        %5819 = vmatprep.subr.bf16.mxu0 0
        %5820 = vmatpush1.bf16.msra.mxu0 0
        %5821 = vmatprep.subr.bf16.mxu0 0
        %5822 = vmatpush1.bf16.msra.mxu0 0
        %5823 = vmatprep.mubr.bf16.mxu0 0
        %5824 = vmatmul.mubr.bf16.gmra.mrb[0].mxu0 %v5642
        %v5825 = vpop.f32.mrb[0].mxu0
        %v5826 = vadd.f32 %v5628, %v5825
        %v5827 = vpop.f32.mrb[0].mxu0
        %v5828 = vpop.f32.mrb[0].mxu0
        %v5829 = vadd.f32 %v5628, %v5828
        %v5830 = vpop.f32.mrb[0].mxu0
        %5831 = vmatprep.mubr.bf16.mxu0 0
        %5832 = vmatmul.mubr.bf16.gmra.mrb[0].mxu0 %v5650
        %v5833 = vpop.f32.mrb[0].mxu0
        %v5834 = vadd.f32 %v5628, %v5833
        %v5835 = vpop.f32.mrb[0].mxu0
        %v5836 = vpop.f32.mrb[0].mxu0
        %v5837 = vadd.f32 %v5628, %v5836
        %v5838 = vpop.f32.mrb[0].mxu0
        %5839 = vmatprep.mubr.bf16.mxu0 0
        %5840 = vmatmul.mubr.bf16.gmra.mrb[0].mxu0 %v5658
        %v5841 = vpop.f32.mrb[0].mxu0
        %v5842 = vadd.f32 %v5628, %v5841
        %v5843 = vpop.f32.mrb[0].mxu0
        %v5844 = vpop.f32.mrb[0].mxu0
        %v5845 = vadd.f32 %v5628, %v5844
        %v5846 = vpop.f32.mrb[0].mxu0
        %5847 = vmatprep.mubr.bf16.mxu0 0
        %5848 = vmatmul.mubr.bf16.gmra.mrb[0].mxu0 %v5666
        %v5849 = vpop.f32.mrb[0].mxu0
        %v5850 = vadd.f32 %v5628, %v5849
        %v5851 = vpop.f32.mrb[0].mxu0
        %v5852 = vpop.f32.mrb[0].mxu0
        %v5853 = vadd.f32 %v5628, %v5852
        %v5854 = vpop.f32.mrb[0].mxu0
        %5855 = vmatprep.mubr.bf16.mxu0 0
        %5856 = vmatmul.mubr.bf16.gmra.mrb[0].mxu0 %v5674
        %v5857 = vpop.f32.mrb[0].mxu0
        %v5858 = vadd.f32 %v5628, %v5857
        %v5859 = vpop.f32.mrb[0].mxu0
        %v5860 = vpop.f32.mrb[0].mxu0
        %v5861 = vadd.f32 %v5628, %v5860
        %v5862 = vpop.f32.mrb[0].mxu0
        %5863 = vmatprep.mubr.bf16.mxu0 0
        %5864 = vmatmul.mubr.bf16.gmra.mrb[0].mxu0 %v5682
        %v5865 = vpop.f32.mrb[0].mxu0
        %v5866 = vadd.f32 %v5628, %v5865
        %v5867 = vpop.f32.mrb[0].mxu0
        %v5868 = vpop.f32.mrb[0].mxu0
        %v5869 = vadd.f32 %v5628, %v5868
        %v5870 = vpop.f32.mrb[0].mxu0
        %5871 = vmatprep.mubr.bf16.mxu0 0
        %5872 = vmatmul.mubr.bf16.gmra.mrb[0].mxu0 %v5690
        %v5873 = vpop.f32.mrb[0].mxu0
        %v5874 = vadd.f32 %v5628, %v5873
        %v5875 = vpop.f32.mrb[0].mxu0
        %v5876 = vpop.f32.mrb[0].mxu0
        %v5877 = vadd.f32 %v5628, %v5876
        %v5878 = vpop.f32.mrb[0].mxu0
        %5879 = vmatprep.mubr.bf16.mxu0 0
        %5880 = vmatmul.mubr.bf16.gmra.mrb[0].mxu0 %v5698
        %v5881 = vpop.f32.mrb[0].mxu0
        %v5882 = vadd.f32 %v5628, %v5881
        %v5883 = vpop.f32.mrb[0].mxu0
        %v5884 = vpop.f32.mrb[0].mxu0
        %v5885 = vadd.f32 %v5628, %v5884
        %v5886 = vpop.f32.mrb[0].mxu0
        %5887 = vmatprep.mubr.bf16.mxu0 0
        %5888 = vmatmul.mubr.bf16.gmra.mrb[0].mxu0 %v5706
        %v5889 = vpop.f32.mrb[0].mxu0
        %v5890 = vadd.f32 %v5628, %v5889
        %v5891 = vpop.f32.mrb[0].mxu0
        %v5892 = vpop.f32.mrb[0].mxu0
        %v5893 = vadd.f32 %v5628, %v5892
        %v5894 = vpop.f32.mrb[0].mxu0
        %5895 = vmatprep.mubr.bf16.mxu0 0
        %5896 = vmatmul.mubr.bf16.gmra.mrb[0].mxu0 %v5714
        %v5897 = vpop.f32.mrb[0].mxu0
        %v5898 = vadd.f32 %v5628, %v5897
        %v5899 = vpop.f32.mrb[0].mxu0
        %v5900 = vpop.f32.mrb[0].mxu0
        %v5901 = vadd.f32 %v5628, %v5900
        %v5902 = vpop.f32.mrb[0].mxu0
        %5903 = vmatprep.mubr.bf16.mxu0 0
        %5904 = vmatmul.mubr.bf16.gmra.mrb[0].mxu0 %v5722
        %v5905 = vpop.f32.mrb[0].mxu0
        %v5906 = vadd.f32 %v5628, %v5905
        %v5907 = vpop.f32.mrb[0].mxu0
        %v5908 = vpop.f32.mrb[0].mxu0
        %v5909 = vadd.f32 %v5628, %v5908
        %v5910 = vpop.f32.mrb[0].mxu0
        %5911 = vmatprep.mubr.bf16.mxu0 0
        %5912 = vmatmul.mubr.bf16.gmra.mrb[0].mxu0 %v5730
        %v5913 = vpop.f32.mrb[0].mxu0
        %v5914 = vadd.f32 %v5628, %v5913
        %v5915 = vpop.f32.mrb[0].mxu0
        %v5916 = vpop.f32.mrb[0].mxu0
        %v5917 = vadd.f32 %v5628, %v5916
        %v5918 = vpop.f32.mrb[0].mxu0
        %5919 = vdwg.mxu0
        %5920 = vst [vmem:[%s539] sm:$0xff] %v5826
        %5921 = vst [vmem:[%s539 + $0x8] sm:$0xff] %v5829
        %5922 = vst [vmem:[%s539 + $0x10] sm:$0xff] %v5834
        %5923 = vst [vmem:[%s539 + $0x18] sm:$0xff] %v5837
        %5924 = vst [vmem:[%s539 + $0x20] sm:$0xff] %v5842
        %5925 = vst [vmem:[%s539 + $0x28] sm:$0xff] %v5845
        %5926 = vst [vmem:[%s539 + $0x30] sm:$0xff] %v5850
        %5927 = vst [vmem:[%s539 + $0x38] sm:$0xff] %v5853
        %5928 = vst [vmem:[%s539 + $0x40] sm:$0xff] %v5858
        %5929 = vst [vmem:[%s539 + $0x48] sm:$0xff] %v5861
        %5930 = vst [vmem:[%s539 + $0x50] sm:$0xff] %v5866
        %5931 = vst [vmem:[%s539 + $0x58] sm:$0xff] %v5869
        %5932 = vst [vmem:[%s539 + $0x60] sm:$0xff] %v5874
        %5933 = vst [vmem:[%s539 + $0x68] sm:$0xff] %v5877
        %5934 = vst [vmem:[%s539 + $0x70] sm:$0xff] %v5882
        %5935 = vst [vmem:[%s539 + $0x78] sm:$0xff] %v5885
        %5936 = vst [vmem:[%s539 + $0x80] sm:$0xff] %v5890
        %5937 = vst [vmem:[%s539 + $0x88] sm:$0xff] %v5893
        %5938 = vst [vmem:[%s539 + $0x90] sm:$0xff] %v5898
        %5939 = vst [vmem:[%s539 + $0x98] sm:$0xff] %v5901
        %5940 = vst [vmem:[%s539 + $0xa0] sm:$0xff] %v5906
        %5941 = vst [vmem:[%s539 + $0xa8] sm:$0xff] %v5909
        %5942 = vst [vmem:[%s539 + $0xb0] sm:$0xff] %v5914
        %5943 = vst [vmem:[%s539 + $0xb8] sm:$0xff] %v5917
        %s5944 = sand.u32 %s279, 1
        %s5945 = scalar_lea.sflag [#allocation4], %s5944
        %s5946 = sand.u32 %s279, 1
        %s5947 = smul.addr %s5946, 192
        %s5948 = scalar_lea.vmem [#allocation13], %s5947
        // Predicated region
        $region81: #{tpu_custom_call.1} parent=55 // pred_check
          %p5949 = pneg %p289
        $region82: #{tpu_custom_call.1} parent=55 // pred_check_branch
          %5951 = sbr.rel (%p5949) target = $region84
        $region83: #{tpu_custom_call.1} parent=55 // pred_region
          %s5952 = smul.u32 24, %s36
          %s5953 = ssub.s32 25, %s5952
          %p5954 = scmp.lt.s32.totalorder %s5953, 24
          %s5955 = scalar_select %p5954, %s5953, 24
          %s5956 = smul.u32 128, %s5955
          %s5958 = ssub.s32 3072, %s5956
          %5959 = vsyncadd %s5945, %s5958
          %p5960 = scmp.ne.s32.totalorder 0, %s5956
          %s5961 = smul.addr %s35, 25
          %s5962 = sadd.s32 %s5952, %s5961
          %s5963 = smul.addr %s5962, 128
          %s5964 = scalar_lea.hbm %s9, %s5963
          %s5965 = smul.u32 8, %s5955
          %s5966 = sshll.u32 %s5948, 4
          %s5967 = int_to_ptr.vmem [resolvable:$true] %s5966
          %s5968 = sshll.u32 %s5965, 4
          %5972 = dma.vmem_to_hbm [thread:$0]  (%p5960), %s5967, %s5968, %s5964, %s5945, 128, 128, 8
        $region84: #{tpu_custom_call.1} parent=55 // pred_fallthru
          _
      $region56: #{tpu_custom_call.1} parent=5 // pred_fallthru
        _
      %p5973 = scmp.le.s32.totalorder 2, %s26
      // Predicated region
      $region85: #{tpu_custom_call.1} parent=5 // pred_check
        %p5974 = pneg %p5973
      $region86: #{tpu_custom_call.1} parent=5 // pred_check_branch
        %5976 = sbr.rel (%p5974) target = $region88
      $region87: #{tpu_custom_call.1} parent=5 // pred_region
        %s5977 = ssub.s32 %s26, 2
        // Predicated region
        $region89: #{tpu_custom_call.1} parent=87 // pred_check
          %p5978 = pneg %p295
        $region90: #{tpu_custom_call.1} parent=87 // pred_check_branch
          %5980 = sbr.rel (%p5978) target = $region92
        $region91: #{tpu_custom_call.1} parent=87 // pred_region
          %s5981 = sand.u32 %s280, 1
          %s5982 = scalar_lea.sflag [#allocation4], %s5981
          %s5983 = sand.u32 %s280, 1
          %s5984 = smul.addr %s5983, 192
          %s5985 = scalar_lea.vmem [#allocation13], %s5984
          %5986 = dma.done %s5982, 3072
        $region92: #{tpu_custom_call.1} parent=87 // pred_fallthru
          _
      $region88: #{tpu_custom_call.1} parent=5 // pred_fallthru
        _
    $region6: #{tpu_custom_call.1} parent=1 // loop_footer
      %s30 = sadd.s32 1, %s26
    $region7: #{tpu_custom_call.1} parent=1 // loop_footer_branch
      %25 = sbr.rel target = $region3
    $region8: #{tpu_custom_call.1} parent=1 // loop_exit
      _
    %5987 = vsyncpa [#allocation3], 1
    %s5988 = scalar_lea.sflag [#allocation3], 1
    %5989 = vsyncpa %s5988, 1
    %5990 = vsyncpa [#allocation6], 1
    %s5991 = scalar_lea.sflag [#allocation6], 1
    %5992 = vsyncpa %s5991, 1
    %5993 = vsyncpa [#allocation9], 1
    %5994 = vsyncpa [#allocation12], 1
    %5995 = vsyncpa [#allocation4], 1
    %s5996 = scalar_lea.sflag [#allocation4], 1
    %5997 = vsyncpa %s5996, 1

</llo_original>
